<compile_context>
chip_gen: v7x
topology: tpu7x:2x2x1
jax: 0.10.0
libtpu: 0.0.40
codegen_flags: <defaults>
</compile_context>

<pallas_src>
import functools
import math

import jax
import jax.numpy as jnp
from jax.experimental import pallas as pl
from jax.experimental.pallas import tpu as pltpu


# --------------------------------------------------------------------------
# Kernel: fused (mu + std) positional-encoded causal MHA + 2-layer MLP heads
# --------------------------------------------------------------------------
def _fused_kernel(x_ref, pe_ref, wqkv_ref, bqkv_ref, wo_ref, w1_ref, w2_ref,
                  btail_ref, out_ref, *, eps, mm_dtype):
    """One grid step = `bt` batch elements, both branches.

    x_ref    : (bt, L, E)
    pe_ref   : (1, L, E)
    wqkv_ref : (2, E, 3E)          branch 0 = mu, branch 1 = log_std
    bqkv_ref : (2, 1, 3E)
    wo_ref   : (2, E, E)
    w1_ref   : (2, E, H)
    w2_ref   : (2, H, A)
    btail_ref: (2, 1, E + H + A)   packed [out_proj.bias | lin1.bias | lin2.bias]
    out_ref  : (bt, L, 2A)         [..., :A] = mu, [..., A:] = std
    """
    bt, L, E = x_ref.shape
    H = w1_ref.shape[-1]
    A = w2_ref.shape[-1]
    dh = E // H
    scale = 1.0 / math.sqrt(dh)
    rows = bt * L

    def mm(a, b):
        # MXU dot, always accumulating in f32; operands optionally bf16.
        return jnp.dot(a.astype(mm_dtype), b.astype(mm_dtype),
                       preferred_element_type=jnp.float32)

    # Positional encoding added once, shared by both branches.
    x = (x_ref[...] + pe_ref[...]).reshape(rows, E)

    # Causal bias shared by both branches / all heads (scores are always f32,
    # so a large finite negative is safe even with bf16 matmul operands).
    row = jax.lax.broadcasted_iota(jnp.int32, (L, L), 0)
    col = jax.lax.broadcasted_iota(jnp.int32, (L, L), 1)
    causal_bias = jnp.where(col > row, jnp.float32(-1e30), jnp.float32(0.0))

    for branch in range(2):                      # 0 = mu, 1 = log_std -> std
        # Fused QKV projection: one (rows, E) @ (E, 3E) push.
        qkv = mm(x, wqkv_ref[branch]) + bqkv_ref[branch]
        q = qkv[:, :E] * scale                   # fold 1/sqrt(dh) into q
        k = qkv[:, E:2 * E]
        v = qkv[:, 2 * E:3 * E]

        wo_b = wo_ref[branch]                    # (E, E)
        biases = btail_ref[branch]               # (1, E + H + A)
        bo = biases[:, :E]
        b1 = biases[:, E:E + H]
        b2 = biases[:, E + H:E + H + A]

        # Multi-head causal attention, batched over the bt batch elements.
        # Heads are unrolled statically (H is small); each head's output is
        # folded straight into the output projection so no concatenate /
        # lane-relayout is needed.
        attn = jnp.zeros((rows, E), dtype=jnp.float32)
        for h in range(H):
            sl = slice(h * dh, (h + 1) * dh)
            qh = q[:, sl].reshape(bt, L, dh).astype(mm_dtype)
            kh = k[:, sl].reshape(bt, L, dh).astype(mm_dtype)
            vh = v[:, sl].reshape(bt, L, dh).astype(mm_dtype)
            s = jnp.einsum('bqd,bkd->bqk', qh, kh,
                           preferred_element_type=jnp.float32)
            s = s + causal_bias
            s = s - jnp.max(s, axis=-1, keepdims=True)
            p = jnp.exp(s)
            p = p * pl.reciprocal(jnp.sum(p, axis=-1, keepdims=True),
                                  approx=True)
            o = jnp.einsum('bqk,bkd->bqd', p.astype(mm_dtype), vh,
                           preferred_element_type=jnp.float32)
            attn = attn + mm(o.reshape(rows, dh), wo_b[sl, :])
        attn = attn + bo

        # Linear(E, H) -> ReLU -> Linear(H, A)
        h1 = jnp.maximum(mm(attn, w1_ref[branch]) + b1, 0.0)
        y = mm(h1, w2_ref[branch]) + b2          # (rows, A)

        if branch == 1:
            y = jnp.clip(jnp.exp(y), eps, 100.0)  # std = clamp(exp(log_std))

        y = y.reshape(bt, L, A)
        if branch == 0:
            out_ref[:, :, :A] = y
        else:
            out_ref[:, :, A:] = y


# --------------------------------------------------------------------------
# Wrapper
# --------------------------------------------------------------------------
def _pick_batch_block(B, L, target_rows=256):
    """Largest divisor of B that keeps bt*L rows reasonable and, when B >= 2,
    keeps at least 2 grid steps so v7x's two TensorCores both get work."""
    divisors = [d for d in range(1, B + 1) if B % d == 0]
    fitting = [d for d in divisors if d * L <= target_rows] or [1]
    multi = [d for d in fitting if B // d >= 2]
    return max(multi) if multi else max(fitting)


def _pick_matmul_dtype(rows, E):
    # bf16 MXU operands only pay off once operands are non-trivial (v6e/v7x);
    # element-wise math stays f32 everywhere (v5e has no bf16 VPU/EUP path).
    return jnp.bfloat16 if (rows >= 256 and E >= 128) else jnp.float32


def sinusoidal_positional_encoding(length, d_model):
    pos = jnp.arange(length, dtype=jnp.float32)[:, None]
    i = jnp.arange(0, d_model, 2, dtype=jnp.float32)[None, :]
    div = jnp.exp(-(math.log(10000.0)) * i / d_model)
    pe = jnp.zeros((length, d_model), dtype=jnp.float32)
    pe = pe.at[:, 0::2].set(jnp.sin(pos * div))
    pe = pe.at[:, 1::2].set(jnp.cos(pos * div))
    return pe


def actor_critic_forward(state, packed_params, *, eps=1e-5):
    """Equivalent of ActorCriticCausalAttention.forward: returns (mu, std)."""
    # shape canonicalization (mirror of the torch unsqueeze logic)
    if state.ndim == 1:
        state = state[None, None, :]
    if state.ndim == 2:
        state = state[None, :, :]
    B, L, E = state.shape
    wqkv, bqkv, wo, w1, w2, btail = packed_params
    A = w2.shape[-1]

    pe = sinusoidal_positional_encoding(L, E)[None]      # (1, L, E)
    bt = _pick_batch_block(B, L)
    mm_dtype = _pick_matmul_dtype(bt * L, E)

    kernel = functools.partial(_fused_kernel, eps=eps, mm_dtype=mm_dtype)

    def full_spec(shape):
        nd = len(shape)
        return pl.BlockSpec(shape, lambda b, _nd=nd: (0,) * _nd)

    out = pl.pallas_call(
        kernel,
        out_shape=jax.ShapeDtypeStruct((B, L, 2 * A), jnp.float32),
        grid=(B // bt,),
        in_specs=[
            pl.BlockSpec((bt, L, E), lambda b: (b, 0, 0)),   # state block
            full_spec(pe.shape),
            full_spec(wqkv.shape), full_spec(bqkv.shape), full_spec(wo.shape),
            full_spec(w1.shape), full_spec(w2.shape), full_spec(btail.shape),
        ],
        out_specs=pl.BlockSpec((bt, L, 2 * A), lambda b: (b, 0, 0)),
        compiler_params=pltpu.CompilerParams(
            dimension_semantics=("parallel",)),
    )(state.astype(jnp.float32), pe, wqkv, bqkv, wo, w1, w2, btail)

    mu = out[..., :A]
    std = out[..., A:]
    return mu, std
    # TODO(synk): value_layer head exists in __init__ but is not used in
    # forward(); it maps to the same kernel structure (out_dim=1) if needed.


# --------------------------------------------------------------------------
# Parameter construction (torch-layout) and packing for the kernel
# --------------------------------------------------------------------------
def make_torch_style_params(key, E, H, A, scale=0.1):
    ks = jax.random.split(key, 8)
    n = lambda k, s: (scale * jax.random.normal(k, s)).astype(jnp.float32)
    return dict(
        in_proj_weight=n(ks[0], (3 * E, E)),   # MultiheadAttention.in_proj_weight
        in_proj_bias=n(ks[1], (3 * E,)),
        out_proj_weight=n(ks[2], (E, E)),
        out_proj_bias=n(ks[3], (E,)),
        lin1_weight=n(ks[4], (H, E)),          # nn.Linear(E, H)
        lin1_bias=n(ks[5], (H,)),
        lin2_weight=n(ks[6], (A, H)),          # nn.Linear(H, A)
        lin2_bias=n(ks[7], (A,)),
    )


def pack_branch_params(branches):
    """branches = [mu_params, std_params] (torch layout) -> kernel operands."""
    wqkv = jnp.stack([p["in_proj_weight"].T for p in branches])        # (2, E, 3E)
    bqkv = jnp.stack([p["in_proj_bias"][None, :] for p in branches])   # (2, 1, 3E)
    wo = jnp.stack([p["out_proj_weight"].T for p in branches])         # (2, E, E)
    w1 = jnp.stack([p["lin1_weight"].T for p in branches])             # (2, E, H)
    w2 = jnp.stack([p["lin2_weight"].T for p in branches])             # (2, H, A)
    btail = jnp.stack([jnp.concatenate(
        [p["out_proj_bias"], p["lin1_bias"], p["lin2_bias"]])[None, :]
        for p in branches])                                            # (2, 1, E+H+A)
    return wqkv, bqkv, wo, w1, w2, btail


# --------------------------------------------------------------------------
# Pure-JAX reference (for correctness check only)
# --------------------------------------------------------------------------
def reference_forward(state, torch_params, eps=1e-5):
    B, L, E = state.shape
    x = state + sinusoidal_positional_encoding(L, E)[None]
    mask = jnp.triu(jnp.ones((L, L), dtype=bool), k=1)
    outs = []
    for p in torch_params:
        H = p["lin1_weight"].shape[0]
        dh = E // H
        qkv = jnp.einsum('ble,fe->blf', x, p["in_proj_weight"]) + p["in_proj_bias"]
        q, k, v = qkv[..., :E], qkv[..., E:2 * E], qkv[..., 2 * E:]
        q = q.reshape(B, L, H, dh).transpose(0, 2, 1, 3) / math.sqrt(dh)
        k = k.reshape(B, L, H, dh).transpose(0, 2, 1, 3)
        v = v.reshape(B, L, H, dh).transpose(0, 2, 1, 3)
        s = jnp.einsum('bhqd,bhkd->bhqk', q, k)
        s = jnp.where(mask[None, None], -jnp.inf, s)
        w = jax.nn.softmax(s, axis=-1)
        o = jnp.einsum('bhqk,bhkd->bhqd', w, v).transpose(0, 2, 1, 3).reshape(B, L, E)
        attn = o @ p["out_proj_weight"].T + p["out_proj_bias"]
        h1 = jax.nn.relu(attn @ p["lin1_weight"].T + p["lin1_bias"])
        outs.append(h1 @ p["lin2_weight"].T + p["lin2_bias"])
    return outs[0], jnp.clip(jnp.exp(outs[1]), eps, 100.0)


# --------------------------------------------------------------------------
# Main
# --------------------------------------------------------------------------
if __name__ == "__main__":
    B, L, state_dim, nhead, action_dim = 2, 8, 32, 4, 4

    key = jax.random.PRNGKey(0)
    k_state, k_mu, k_std = jax.random.split(key, 3)

    state = jax.random.normal(k_state, (B, L, state_dim), dtype=jnp.float32)
    mu_tp = make_torch_style_params(k_mu, state_dim, nhead, action_dim)
    std_tp = make_torch_style_params(k_std, state_dim, nhead, action_dim)
    packed = pack_branch_params([mu_tp, std_tp])

    mu, std = actor_critic_forward(state, packed)
    jax.block_until_ready((mu, std))

    assert mu.shape == (B, L, action_dim)
    assert std.shape == (B, L, action_dim)
    assert bool(jnp.all(std >= 1e-5)) and bool(jnp.all(std <= 100.0))

    mu_ref, std_ref = reference_forward(state, [mu_tp, std_tp])
    assert float(jnp.max(jnp.abs(mu - mu_ref))) < 1e-2
    assert float(jnp.max(jnp.abs(std - std_ref))) < 1e-2

    print("KERNEL_OK")
</pallas_src>

<mosaic_0001>
module attributes {stable_mosaic.version = 11 : i64} {
  func.func @_fused_kernel(%arg0: i32, %arg1: memref<1x8x32xf32, #tpu.memory_space<vmem>>, %arg2: memref<1x8x32xf32, #tpu.memory_space<vmem>>, %arg3: memref<2x32x96xf32, #tpu.memory_space<vmem>>, %arg4: memref<2x1x96xf32, #tpu.memory_space<vmem>>, %arg5: memref<2x32x32xf32, #tpu.memory_space<vmem>>, %arg6: memref<2x32x4xf32, #tpu.memory_space<vmem>>, %arg7: memref<2x4x4xf32, #tpu.memory_space<vmem>>, %arg8: memref<2x1x40xf32, #tpu.memory_space<vmem>>, %arg9: memref<1x8x8xf32, #tpu.memory_space<vmem>>) attributes {dimension_semantics = [#tpu.dimension_semantics<parallel>], iteration_bounds = array<i64: 2>, scalar_prefetch = 0 : i64, scratch_operands = 0 : i64, tpu.core_type = #tpu.core_type<tc>, window_params = [{transform_indices = @transform_0, window_bounds = array<i64: 1, 8, 32>}, {pipeline_mode = #tpu.pipeline_mode<synchronous>, transform_indices = @transform_1, window_bounds = array<i64: 1, 8, 32>}, {pipeline_mode = #tpu.pipeline_mode<synchronous>, transform_indices = @transform_2, window_bounds = array<i64: 2, 32, 96>}, {pipeline_mode = #tpu.pipeline_mode<synchronous>, transform_indices = @transform_3, window_bounds = array<i64: 2, 1, 96>}, {pipeline_mode = #tpu.pipeline_mode<synchronous>, transform_indices = @transform_4, window_bounds = array<i64: 2, 32, 32>}, {pipeline_mode = #tpu.pipeline_mode<synchronous>, transform_indices = @transform_5, window_bounds = array<i64: 2, 32, 4>}, {pipeline_mode = #tpu.pipeline_mode<synchronous>, transform_indices = @transform_6, window_bounds = array<i64: 2, 4, 4>}, {pipeline_mode = #tpu.pipeline_mode<synchronous>, transform_indices = @transform_7, window_bounds = array<i64: 2, 1, 40>}, {transform_indices = @transform_8, window_bounds = array<i64: 1, 8, 8>}]} {
    %c0 = arith.constant 0 : index
    %c0_0 = arith.constant 0 : index
    %c0_1 = arith.constant 0 : index
    %0 = vector.load %arg1[%c0, %c0_0, %c0_1] : memref<1x8x32xf32, #tpu.memory_space<vmem>>, vector<1x8x32xf32>
    %c0_2 = arith.constant 0 : index
    %c0_3 = arith.constant 0 : index
    %c0_4 = arith.constant 0 : index
    %1 = vector.load %arg2[%c0_2, %c0_3, %c0_4] : memref<1x8x32xf32, #tpu.memory_space<vmem>>, vector<1x8x32xf32>
    %2 = arith.addf %0, %1 : vector<1x8x32xf32>
    %3 = vector.shape_cast %2 : vector<1x8x32xf32> to vector<8x32xf32>
    %4 = tpu.iota {dimensions = array<i32: 0>} : vector<8x8xi32>
    %5 = tpu.iota {dimensions = array<i32: 1>} : vector<8x8xi32>
    %6 = arith.cmpi sgt, %5, %4 : vector<8x8xi32>
    %cst = arith.constant -1.000000e+30 : f32
    %cst_5 = arith.constant 0.000000e+00 : f32
    %7 = vector.broadcast %cst : f32 to vector<8x8xf32>
    %8 = vector.broadcast %cst_5 : f32 to vector<8x8xf32>
    %9 = arith.select %6, %7, %8 : vector<8x8xi1>, vector<8x8xf32>
    %c0_6 = arith.constant 0 : index
    %c0_7 = arith.constant 0 : index
    %c0_8 = arith.constant 0 : index
    %10 = vector.load %arg3[%c0_6, %c0_7, %c0_8] : memref<2x32x96xf32, #tpu.memory_space<vmem>>, vector<1x32x96xf32>
    %11 = vector.shape_cast %10 : vector<1x32x96xf32> to vector<32x96xf32>
    %cst_9 = arith.constant dense<0.000000e+00> : vector<8x96xf32>
    %12 = tpu.matmul %3, %11, %cst_9 {dimension_numbers = #tpu.dot_dimension_numbers<[1], [0], [0], [1], [0, 0, 1, 1], [], []>} : vector<8x32xf32>, vector<32x96xf32>, vector<8x96xf32> -> vector<8x96xf32>
    %c0_10 = arith.constant 0 : index
    %c0_11 = arith.constant 0 : index
    %c0_12 = arith.constant 0 : index
    %13 = vector.load %arg4[%c0_10, %c0_11, %c0_12] : memref<2x1x96xf32, #tpu.memory_space<vmem>>, vector<1x1x96xf32>
    %14 = vector.shape_cast %13 : vector<1x1x96xf32> to vector<1x96xf32>
    %15 = vector.broadcast %14 : vector<1x96xf32> to vector<8x96xf32>
    %16 = arith.addf %12, %15 : vector<8x96xf32>
    %17 = vector.extract_strided_slice %16 {offsets = [0, 0], sizes = [8, 32], strides = [1, 1]} : vector<8x96xf32> to vector<8x32xf32>
    %cst_13 = arith.constant 0.353553385 : f32
    %18 = vector.broadcast %cst_13 : f32 to vector<8x32xf32>
    %19 = arith.mulf %17, %18 : vector<8x32xf32>
    %20 = vector.extract_strided_slice %16 {offsets = [0, 32], sizes = [8, 32], strides = [1, 1]} : vector<8x96xf32> to vector<8x32xf32>
    %21 = vector.extract_strided_slice %16 {offsets = [0, 64], sizes = [8, 32], strides = [1, 1]} : vector<8x96xf32> to vector<8x32xf32>
    %c0_14 = arith.constant 0 : index
    %c0_15 = arith.constant 0 : index
    %c0_16 = arith.constant 0 : index
    %22 = vector.load %arg5[%c0_14, %c0_15, %c0_16] : memref<2x32x32xf32, #tpu.memory_space<vmem>>, vector<1x32x32xf32>
    %23 = vector.shape_cast %22 : vector<1x32x32xf32> to vector<32x32xf32>
    %c0_17 = arith.constant 0 : index
    %c0_18 = arith.constant 0 : index
    %c0_19 = arith.constant 0 : index
    %24 = vector.load %arg8[%c0_17, %c0_18, %c0_19] : memref<2x1x40xf32, #tpu.memory_space<vmem>>, vector<1x1x40xf32>
    %25 = vector.shape_cast %24 : vector<1x1x40xf32> to vector<1x40xf32>
    %26 = vector.extract_strided_slice %25 {offsets = [0, 0], sizes = [1, 32], strides = [1, 1]} : vector<1x40xf32> to vector<1x32xf32>
    %27 = vector.extract_strided_slice %25 {offsets = [0, 32], sizes = [1, 4], strides = [1, 1]} : vector<1x40xf32> to vector<1x4xf32>
    %28 = vector.extract_strided_slice %25 {offsets = [0, 36], sizes = [1, 4], strides = [1, 1]} : vector<1x40xf32> to vector<1x4xf32>
    %cst_20 = arith.constant 0.000000e+00 : f32
    %29 = vector.broadcast %cst_20 : f32 to vector<8x32xf32>
    %30 = vector.extract_strided_slice %19 {offsets = [0, 0], sizes = [8, 8], strides = [1, 1]} : vector<8x32xf32> to vector<8x8xf32>
    %31 = vector.shape_cast %30 : vector<8x8xf32> to vector<1x8x8xf32>
    %32 = vector.extract_strided_slice %20 {offsets = [0, 0], sizes = [8, 8], strides = [1, 1]} : vector<8x32xf32> to vector<8x8xf32>
    %33 = vector.shape_cast %32 : vector<8x8xf32> to vector<1x8x8xf32>
    %34 = vector.extract_strided_slice %21 {offsets = [0, 0], sizes = [8, 8], strides = [1, 1]} : vector<8x32xf32> to vector<8x8xf32>
    %35 = vector.shape_cast %34 : vector<8x8xf32> to vector<1x8x8xf32>
    "tpu.trace_start"() <{level = 10 : i32, message = "bqd,bkd->bqk"}> : () -> ()
    %cst_21 = arith.constant dense<0.000000e+00> : vector<1x8x8xf32>
    %36 = tpu.matmul %31, %33, %cst_21 {dimension_numbers = #tpu.dot_dimension_numbers<[2], [2], [1], [1], [0, 0, 0, 1, 1, 1], [0], [0]>} : vector<1x8x8xf32>, vector<1x8x8xf32>, vector<1x8x8xf32> -> vector<1x8x8xf32>
    "tpu.trace_stop"() : () -> ()
    %37 = vector.shape_cast %9 : vector<8x8xf32> to vector<1x8x8xf32>
    %38 = arith.addf %36, %37 : vector<1x8x8xf32>
    %cst_22 = arith.constant dense<0xFF800000> : vector<1x8xf32>
    %39 = vector.multi_reduction <maximumf>, %38, %cst_22 [2] : vector<1x8x8xf32> to vector<1x8xf32>
    %40 = vector.shape_cast %39 : vector<1x8xf32> to vector<1x8x1xf32>
    %41 = vector.broadcast %40 : vector<1x8x1xf32> to vector<1x8x8xf32>
    %42 = arith.subf %38, %41 : vector<1x8x8xf32>
    %43 = math.exp %42 : vector<1x8x8xf32>
    %cst_23 = arith.constant dense<0.000000e+00> : vector<1x8xf32>
    %44 = vector.multi_reduction <add>, %43, %cst_23 [2] : vector<1x8x8xf32> to vector<1x8xf32>
    %45 = vector.shape_cast %44 : vector<1x8xf32> to vector<1x8x1xf32>
    %46 = tpu.reciprocal %45 {approx = true} : vector<1x8x1xf32> -> vector<1x8x1xf32>
    %47 = vector.broadcast %46 : vector<1x8x1xf32> to vector<1x8x8xf32>
    %48 = arith.mulf %43, %47 : vector<1x8x8xf32>
    "tpu.trace_start"() <{level = 10 : i32, message = "bqk,bkd->bqd"}> : () -> ()
    %cst_24 = arith.constant dense<0.000000e+00> : vector<1x8x8xf32>
    %49 = tpu.matmul %48, %35, %cst_24 {dimension_numbers = #tpu.dot_dimension_numbers<[2], [1], [1], [2], [0, 0, 0, 1, 1, 2], [0], [0]>} : vector<1x8x8xf32>, vector<1x8x8xf32>, vector<1x8x8xf32> -> vector<1x8x8xf32>
    "tpu.trace_stop"() : () -> ()
    %50 = vector.shape_cast %49 : vector<1x8x8xf32> to vector<8x8xf32>
    %51 = vector.extract_strided_slice %23 {offsets = [0, 0], sizes = [8, 32], strides = [1, 1]} : vector<32x32xf32> to vector<8x32xf32>
    %cst_25 = arith.constant dense<0.000000e+00> : vector<8x32xf32>
    %52 = tpu.matmul %50, %51, %cst_25 {dimension_numbers = #tpu.dot_dimension_numbers<[1], [0], [0], [1], [0, 0, 1, 1], [], []>} : vector<8x8xf32>, vector<8x32xf32>, vector<8x32xf32> -> vector<8x32xf32>
    %53 = arith.addf %29, %52 : vector<8x32xf32>
    %54 = vector.extract_strided_slice %19 {offsets = [0, 8], sizes = [8, 8], strides = [1, 1]} : vector<8x32xf32> to vector<8x8xf32>
    %55 = vector.shape_cast %54 : vector<8x8xf32> to vector<1x8x8xf32>
    %56 = vector.extract_strided_slice %20 {offsets = [0, 8], sizes = [8, 8], strides = [1, 1]} : vector<8x32xf32> to vector<8x8xf32>
    %57 = vector.shape_cast %56 : vector<8x8xf32> to vector<1x8x8xf32>
    %58 = vector.extract_strided_slice %21 {offsets = [0, 8], sizes = [8, 8], strides = [1, 1]} : vector<8x32xf32> to vector<8x8xf32>
    %59 = vector.shape_cast %58 : vector<8x8xf32> to vector<1x8x8xf32>
    "tpu.trace_start"() <{level = 10 : i32, message = "bqd,bkd->bqk"}> : () -> ()
    %cst_26 = arith.constant dense<0.000000e+00> : vector<1x8x8xf32>
    %60 = tpu.matmul %55, %57, %cst_26 {dimension_numbers = #tpu.dot_dimension_numbers<[2], [2], [1], [1], [0, 0, 0, 1, 1, 1], [0], [0]>} : vector<1x8x8xf32>, vector<1x8x8xf32>, vector<1x8x8xf32> -> vector<1x8x8xf32>
    "tpu.trace_stop"() : () -> ()
    %61 = vector.shape_cast %9 : vector<8x8xf32> to vector<1x8x8xf32>
    %62 = arith.addf %60, %61 : vector<1x8x8xf32>
    %cst_27 = arith.constant dense<0xFF800000> : vector<1x8xf32>
    %63 = vector.multi_reduction <maximumf>, %62, %cst_27 [2] : vector<1x8x8xf32> to vector<1x8xf32>
    %64 = vector.shape_cast %63 : vector<1x8xf32> to vector<1x8x1xf32>
    %65 = vector.broadcast %64 : vector<1x8x1xf32> to vector<1x8x8xf32>
    %66 = arith.subf %62, %65 : vector<1x8x8xf32>
    %67 = math.exp %66 : vector<1x8x8xf32>
    %cst_28 = arith.constant dense<0.000000e+00> : vector<1x8xf32>
    %68 = vector.multi_reduction <add>, %67, %cst_28 [2] : vector<1x8x8xf32> to vector<1x8xf32>
    %69 = vector.shape_cast %68 : vector<1x8xf32> to vector<1x8x1xf32>
    %70 = tpu.reciprocal %69 {approx = true} : vector<1x8x1xf32> -> vector<1x8x1xf32>
    %71 = vector.broadcast %70 : vector<1x8x1xf32> to vector<1x8x8xf32>
    %72 = arith.mulf %67, %71 : vector<1x8x8xf32>
    "tpu.trace_start"() <{level = 10 : i32, message = "bqk,bkd->bqd"}> : () -> ()
    %cst_29 = arith.constant dense<0.000000e+00> : vector<1x8x8xf32>
    %73 = tpu.matmul %72, %59, %cst_29 {dimension_numbers = #tpu.dot_dimension_numbers<[2], [1], [1], [2], [0, 0, 0, 1, 1, 2], [0], [0]>} : vector<1x8x8xf32>, vector<1x8x8xf32>, vector<1x8x8xf32> -> vector<1x8x8xf32>
    "tpu.trace_stop"() : () -> ()
    %74 = vector.shape_cast %73 : vector<1x8x8xf32> to vector<8x8xf32>
    %75 = vector.extract_strided_slice %23 {offsets = [8, 0], sizes = [8, 32], strides = [1, 1]} : vector<32x32xf32> to vector<8x32xf32>
    %cst_30 = arith.constant dense<0.000000e+00> : vector<8x32xf32>
    %76 = tpu.matmul %74, %75, %cst_30 {dimension_numbers = #tpu.dot_dimension_numbers<[1], [0], [0], [1], [0, 0, 1, 1], [], []>} : vector<8x8xf32>, vector<8x32xf32>, vector<8x32xf32> -> vector<8x32xf32>
    %77 = arith.addf %53, %76 : vector<8x32xf32>
    %78 = vector.extract_strided_slice %19 {offsets = [0, 16], sizes = [8, 8], strides = [1, 1]} : vector<8x32xf32> to vector<8x8xf32>
    %79 = vector.shape_cast %78 : vector<8x8xf32> to vector<1x8x8xf32>
    %80 = vector.extract_strided_slice %20 {offsets = [0, 16], sizes = [8, 8], strides = [1, 1]} : vector<8x32xf32> to vector<8x8xf32>
    %81 = vector.shape_cast %80 : vector<8x8xf32> to vector<1x8x8xf32>
    %82 = vector.extract_strided_slice %21 {offsets = [0, 16], sizes = [8, 8], strides = [1, 1]} : vector<8x32xf32> to vector<8x8xf32>
    %83 = vector.shape_cast %82 : vector<8x8xf32> to vector<1x8x8xf32>
    "tpu.trace_start"() <{level = 10 : i32, message = "bqd,bkd->bqk"}> : () -> ()
    %cst_31 = arith.constant dense<0.000000e+00> : vector<1x8x8xf32>
    %84 = tpu.matmul %79, %81, %cst_31 {dimension_numbers = #tpu.dot_dimension_numbers<[2], [2], [1], [1], [0, 0, 0, 1, 1, 1], [0], [0]>} : vector<1x8x8xf32>, vector<1x8x8xf32>, vector<1x8x8xf32> -> vector<1x8x8xf32>
    "tpu.trace_stop"() : () -> ()
    %85 = vector.shape_cast %9 : vector<8x8xf32> to vector<1x8x8xf32>
    %86 = arith.addf %84, %85 : vector<1x8x8xf32>
    %cst_32 = arith.constant dense<0xFF800000> : vector<1x8xf32>
    %87 = vector.multi_reduction <maximumf>, %86, %cst_32 [2] : vector<1x8x8xf32> to vector<1x8xf32>
    %88 = vector.shape_cast %87 : vector<1x8xf32> to vector<1x8x1xf32>
    %89 = vector.broadcast %88 : vector<1x8x1xf32> to vector<1x8x8xf32>
    %90 = arith.subf %86, %89 : vector<1x8x8xf32>
    %91 = math.exp %90 : vector<1x8x8xf32>
    %cst_33 = arith.constant dense<0.000000e+00> : vector<1x8xf32>
    %92 = vector.multi_reduction <add>, %91, %cst_33 [2] : vector<1x8x8xf32> to vector<1x8xf32>
    %93 = vector.shape_cast %92 : vector<1x8xf32> to vector<1x8x1xf32>
    %94 = tpu.reciprocal %93 {approx = true} : vector<1x8x1xf32> -> vector<1x8x1xf32>
    %95 = vector.broadcast %94 : vector<1x8x1xf32> to vector<1x8x8xf32>
    %96 = arith.mulf %91, %95 : vector<1x8x8xf32>
    "tpu.trace_start"() <{level = 10 : i32, message = "bqk,bkd->bqd"}> : () -> ()
    %cst_34 = arith.constant dense<0.000000e+00> : vector<1x8x8xf32>
    %97 = tpu.matmul %96, %83, %cst_34 {dimension_numbers = #tpu.dot_dimension_numbers<[2], [1], [1], [2], [0, 0, 0, 1, 1, 2], [0], [0]>} : vector<1x8x8xf32>, vector<1x8x8xf32>, vector<1x8x8xf32> -> vector<1x8x8xf32>
    "tpu.trace_stop"() : () -> ()
    %98 = vector.shape_cast %97 : vector<1x8x8xf32> to vector<8x8xf32>
    %99 = vector.extract_strided_slice %23 {offsets = [16, 0], sizes = [8, 32], strides = [1, 1]} : vector<32x32xf32> to vector<8x32xf32>
    %cst_35 = arith.constant dense<0.000000e+00> : vector<8x32xf32>
    %100 = tpu.matmul %98, %99, %cst_35 {dimension_numbers = #tpu.dot_dimension_numbers<[1], [0], [0], [1], [0, 0, 1, 1], [], []>} : vector<8x8xf32>, vector<8x32xf32>, vector<8x32xf32> -> vector<8x32xf32>
    %101 = arith.addf %77, %100 : vector<8x32xf32>
    %102 = vector.extract_strided_slice %19 {offsets = [0, 24], sizes = [8, 8], strides = [1, 1]} : vector<8x32xf32> to vector<8x8xf32>
    %103 = vector.shape_cast %102 : vector<8x8xf32> to vector<1x8x8xf32>
    %104 = vector.extract_strided_slice %20 {offsets = [0, 24], sizes = [8, 8], strides = [1, 1]} : vector<8x32xf32> to vector<8x8xf32>
    %105 = vector.shape_cast %104 : vector<8x8xf32> to vector<1x8x8xf32>
    %106 = vector.extract_strided_slice %21 {offsets = [0, 24], sizes = [8, 8], strides = [1, 1]} : vector<8x32xf32> to vector<8x8xf32>
    %107 = vector.shape_cast %106 : vector<8x8xf32> to vector<1x8x8xf32>
    "tpu.trace_start"() <{level = 10 : i32, message = "bqd,bkd->bqk"}> : () -> ()
    %cst_36 = arith.constant dense<0.000000e+00> : vector<1x8x8xf32>
    %108 = tpu.matmul %103, %105, %cst_36 {dimension_numbers = #tpu.dot_dimension_numbers<[2], [2], [1], [1], [0, 0, 0, 1, 1, 1], [0], [0]>} : vector<1x8x8xf32>, vector<1x8x8xf32>, vector<1x8x8xf32> -> vector<1x8x8xf32>
    "tpu.trace_stop"() : () -> ()
    %109 = vector.shape_cast %9 : vector<8x8xf32> to vector<1x8x8xf32>
    %110 = arith.addf %108, %109 : vector<1x8x8xf32>
    %cst_37 = arith.constant dense<0xFF800000> : vector<1x8xf32>
    %111 = vector.multi_reduction <maximumf>, %110, %cst_37 [2] : vector<1x8x8xf32> to vector<1x8xf32>
    %112 = vector.shape_cast %111 : vector<1x8xf32> to vector<1x8x1xf32>
    %113 = vector.broadcast %112 : vector<1x8x1xf32> to vector<1x8x8xf32>
    %114 = arith.subf %110, %113 : vector<1x8x8xf32>
    %115 = math.exp %114 : vector<1x8x8xf32>
    %cst_38 = arith.constant dense<0.000000e+00> : vector<1x8xf32>
    %116 = vector.multi_reduction <add>, %115, %cst_38 [2] : vector<1x8x8xf32> to vector<1x8xf32>
    %117 = vector.shape_cast %116 : vector<1x8xf32> to vector<1x8x1xf32>
    %118 = tpu.reciprocal %117 {approx = true} : vector<1x8x1xf32> -> vector<1x8x1xf32>
    %119 = vector.broadcast %118 : vector<1x8x1xf32> to vector<1x8x8xf32>
    %120 = arith.mulf %115, %119 : vector<1x8x8xf32>
    "tpu.trace_start"() <{level = 10 : i32, message = "bqk,bkd->bqd"}> : () -> ()
    %cst_39 = arith.constant dense<0.000000e+00> : vector<1x8x8xf32>
    %121 = tpu.matmul %120, %107, %cst_39 {dimension_numbers = #tpu.dot_dimension_numbers<[2], [1], [1], [2], [0, 0, 0, 1, 1, 2], [0], [0]>} : vector<1x8x8xf32>, vector<1x8x8xf32>, vector<1x8x8xf32> -> vector<1x8x8xf32>
    "tpu.trace_stop"() : () -> ()
    %122 = vector.shape_cast %121 : vector<1x8x8xf32> to vector<8x8xf32>
    %123 = vector.extract_strided_slice %23 {offsets = [24, 0], sizes = [8, 32], strides = [1, 1]} : vector<32x32xf32> to vector<8x32xf32>
    %cst_40 = arith.constant dense<0.000000e+00> : vector<8x32xf32>
    %124 = tpu.matmul %122, %123, %cst_40 {dimension_numbers = #tpu.dot_dimension_numbers<[1], [0], [0], [1], [0, 0, 1, 1], [], []>} : vector<8x8xf32>, vector<8x32xf32>, vector<8x32xf32> -> vector<8x32xf32>
    %125 = arith.addf %101, %124 : vector<8x32xf32>
    %126 = vector.broadcast %26 : vector<1x32xf32> to vector<8x32xf32>
    %127 = arith.addf %125, %126 : vector<8x32xf32>
    %c0_41 = arith.constant 0 : index
    %c0_42 = arith.constant 0 : index
    %c0_43 = arith.constant 0 : index
    %128 = vector.load %arg6[%c0_41, %c0_42, %c0_43] : memref<2x32x4xf32, #tpu.memory_space<vmem>>, vector<1x32x4xf32>
    %129 = vector.shape_cast %128 : vector<1x32x4xf32> to vector<32x4xf32>
    %cst_44 = arith.constant dense<0.000000e+00> : vector<8x4xf32>
    %130 = tpu.matmul %127, %129, %cst_44 {dimension_numbers = #tpu.dot_dimension_numbers<[1], [0], [0], [1], [0, 0, 1, 1], [], []>} : vector<8x32xf32>, vector<32x4xf32>, vector<8x4xf32> -> vector<8x4xf32>
    %131 = vector.broadcast %27 : vector<1x4xf32> to vector<8x4xf32>
    %132 = arith.addf %130, %131 : vector<8x4xf32>
    %cst_45 = arith.constant 0.000000e+00 : f32
    %133 = vector.broadcast %cst_45 : f32 to vector<8x4xf32>
    %134 = arith.maximumf %132, %133 : vector<8x4xf32>
    %c0_46 = arith.constant 0 : index
    %c0_47 = arith.constant 0 : index
    %c0_48 = arith.constant 0 : index
    %135 = vector.load %arg7[%c0_46, %c0_47, %c0_48] : memref<2x4x4xf32, #tpu.memory_space<vmem>>, vector<1x4x4xf32>
    %136 = vector.shape_cast %135 : vector<1x4x4xf32> to vector<4x4xf32>
    %cst_49 = arith.constant dense<0.000000e+00> : vector<8x4xf32>
    %137 = tpu.matmul %134, %136, %cst_49 {dimension_numbers = #tpu.dot_dimension_numbers<[1], [0], [0], [1], [0, 0, 1, 1], [], []>} : vector<8x4xf32>, vector<4x4xf32>, vector<8x4xf32> -> vector<8x4xf32>
    %138 = vector.broadcast %28 : vector<1x4xf32> to vector<8x4xf32>
    %139 = arith.addf %137, %138 : vector<8x4xf32>
    %140 = vector.shape_cast %139 : vector<8x4xf32> to vector<1x8x4xf32>
    %c0_50 = arith.constant 0 : index
    %c0_51 = arith.constant 0 : index
    %c0_52 = arith.constant 0 : index
    %141 = vector.load %arg9[%c0_50, %c0_51, %c0_52] : memref<1x8x8xf32, #tpu.memory_space<vmem>>, vector<1x8x4xf32>
    tpu.vector_store %arg9[%c0_50, %c0_51, %c0_52], %140 {strides = array<i32>} : memref<1x8x8xf32, #tpu.memory_space<vmem>>, vector<1x8x4xf32>,
    %c1 = arith.constant 1 : index
    %c0_53 = arith.constant 0 : index
    %c0_54 = arith.constant 0 : index
    %142 = vector.load %arg3[%c1, %c0_53, %c0_54] : memref<2x32x96xf32, #tpu.memory_space<vmem>>, vector<1x32x96xf32>
    %143 = vector.shape_cast %142 : vector<1x32x96xf32> to vector<32x96xf32>
    %cst_55 = arith.constant dense<0.000000e+00> : vector<8x96xf32>
    %144 = tpu.matmul %3, %143, %cst_55 {dimension_numbers = #tpu.dot_dimension_numbers<[1], [0], [0], [1], [0, 0, 1, 1], [], []>} : vector<8x32xf32>, vector<32x96xf32>, vector<8x96xf32> -> vector<8x96xf32>
    %c1_56 = arith.constant 1 : index
    %c0_57 = arith.constant 0 : index
    %c0_58 = arith.constant 0 : index
    %145 = vector.load %arg4[%c1_56, %c0_57, %c0_58] : memref<2x1x96xf32, #tpu.memory_space<vmem>>, vector<1x1x96xf32>
    %146 = vector.shape_cast %145 : vector<1x1x96xf32> to vector<1x96xf32>
    %147 = vector.broadcast %146 : vector<1x96xf32> to vector<8x96xf32>
    %148 = arith.addf %144, %147 : vector<8x96xf32>
    %149 = vector.extract_strided_slice %148 {offsets = [0, 0], sizes = [8, 32], strides = [1, 1]} : vector<8x96xf32> to vector<8x32xf32>
    %cst_59 = arith.constant 0.353553385 : f32
    %150 = vector.broadcast %cst_59 : f32 to vector<8x32xf32>
    %151 = arith.mulf %149, %150 : vector<8x32xf32>
    %152 = vector.extract_strided_slice %148 {offsets = [0, 32], sizes = [8, 32], strides = [1, 1]} : vector<8x96xf32> to vector<8x32xf32>
    %153 = vector.extract_strided_slice %148 {offsets = [0, 64], sizes = [8, 32], strides = [1, 1]} : vector<8x96xf32> to vector<8x32xf32>
    %c1_60 = arith.constant 1 : index
    %c0_61 = arith.constant 0 : index
    %c0_62 = arith.constant 0 : index
    %154 = vector.load %arg5[%c1_60, %c0_61, %c0_62] : memref<2x32x32xf32, #tpu.memory_space<vmem>>, vector<1x32x32xf32>
    %155 = vector.shape_cast %154 : vector<1x32x32xf32> to vector<32x32xf32>
    %c1_63 = arith.constant 1 : index
    %c0_64 = arith.constant 0 : index
    %c0_65 = arith.constant 0 : index
    %156 = vector.load %arg8[%c1_63, %c0_64, %c0_65] : memref<2x1x40xf32, #tpu.memory_space<vmem>>, vector<1x1x40xf32>
    %157 = vector.shape_cast %156 : vector<1x1x40xf32> to vector<1x40xf32>
    %158 = vector.extract_strided_slice %157 {offsets = [0, 0], sizes = [1, 32], strides = [1, 1]} : vector<1x40xf32> to vector<1x32xf32>
    %159 = vector.extract_strided_slice %157 {offsets = [0, 32], sizes = [1, 4], strides = [1, 1]} : vector<1x40xf32> to vector<1x4xf32>
    %160 = vector.extract_strided_slice %157 {offsets = [0, 36], sizes = [1, 4], strides = [1, 1]} : vector<1x40xf32> to vector<1x4xf32>
    %cst_66 = arith.constant 0.000000e+00 : f32
    %161 = vector.broadcast %cst_66 : f32 to vector<8x32xf32>
    %162 = vector.extract_strided_slice %151 {offsets = [0, 0], sizes = [8, 8], strides = [1, 1]} : vector<8x32xf32> to vector<8x8xf32>
    %163 = vector.shape_cast %162 : vector<8x8xf32> to vector<1x8x8xf32>
    %164 = vector.extract_strided_slice %152 {offsets = [0, 0], sizes = [8, 8], strides = [1, 1]} : vector<8x32xf32> to vector<8x8xf32>
    %165 = vector.shape_cast %164 : vector<8x8xf32> to vector<1x8x8xf32>
    %166 = vector.extract_strided_slice %153 {offsets = [0, 0], sizes = [8, 8], strides = [1, 1]} : vector<8x32xf32> to vector<8x8xf32>
    %167 = vector.shape_cast %166 : vector<8x8xf32> to vector<1x8x8xf32>
    "tpu.trace_start"() <{level = 10 : i32, message = "bqd,bkd->bqk"}> : () -> ()
    %cst_67 = arith.constant dense<0.000000e+00> : vector<1x8x8xf32>
    %168 = tpu.matmul %163, %165, %cst_67 {dimension_numbers = #tpu.dot_dimension_numbers<[2], [2], [1], [1], [0, 0, 0, 1, 1, 1], [0], [0]>} : vector<1x8x8xf32>, vector<1x8x8xf32>, vector<1x8x8xf32> -> vector<1x8x8xf32>
    "tpu.trace_stop"() : () -> ()
    %169 = vector.shape_cast %9 : vector<8x8xf32> to vector<1x8x8xf32>
    %170 = arith.addf %168, %169 : vector<1x8x8xf32>
    %cst_68 = arith.constant dense<0xFF800000> : vector<1x8xf32>
    %171 = vector.multi_reduction <maximumf>, %170, %cst_68 [2] : vector<1x8x8xf32> to vector<1x8xf32>
    %172 = vector.shape_cast %171 : vector<1x8xf32> to vector<1x8x1xf32>
    %173 = vector.broadcast %172 : vector<1x8x1xf32> to vector<1x8x8xf32>
    %174 = arith.subf %170, %173 : vector<1x8x8xf32>
    %175 = math.exp %174 : vector<1x8x8xf32>
    %cst_69 = arith.constant dense<0.000000e+00> : vector<1x8xf32>
    %176 = vector.multi_reduction <add>, %175, %cst_69 [2] : vector<1x8x8xf32> to vector<1x8xf32>
    %177 = vector.shape_cast %176 : vector<1x8xf32> to vector<1x8x1xf32>
    %178 = tpu.reciprocal %177 {approx = true} : vector<1x8x1xf32> -> vector<1x8x1xf32>
    %179 = vector.broadcast %178 : vector<1x8x1xf32> to vector<1x8x8xf32>
    %180 = arith.mulf %175, %179 : vector<1x8x8xf32>
    "tpu.trace_start"() <{level = 10 : i32, message = "bqk,bkd->bqd"}> : () -> ()
    %cst_70 = arith.constant dense<0.000000e+00> : vector<1x8x8xf32>
    %181 = tpu.matmul %180, %167, %cst_70 {dimension_numbers = #tpu.dot_dimension_numbers<[2], [1], [1], [2], [0, 0, 0, 1, 1, 2], [0], [0]>} : vector<1x8x8xf32>, vector<1x8x8xf32>, vector<1x8x8xf32> -> vector<1x8x8xf32>
    "tpu.trace_stop"() : () -> ()
    %182 = vector.shape_cast %181 : vector<1x8x8xf32> to vector<8x8xf32>
    %183 = vector.extract_strided_slice %155 {offsets = [0, 0], sizes = [8, 32], strides = [1, 1]} : vector<32x32xf32> to vector<8x32xf32>
    %cst_71 = arith.constant dense<0.000000e+00> : vector<8x32xf32>
    %184 = tpu.matmul %182, %183, %cst_71 {dimension_numbers = #tpu.dot_dimension_numbers<[1], [0], [0], [1], [0, 0, 1, 1], [], []>} : vector<8x8xf32>, vector<8x32xf32>, vector<8x32xf32> -> vector<8x32xf32>
    %185 = arith.addf %161, %184 : vector<8x32xf32>
    %186 = vector.extract_strided_slice %151 {offsets = [0, 8], sizes = [8, 8], strides = [1, 1]} : vector<8x32xf32> to vector<8x8xf32>
    %187 = vector.shape_cast %186 : vector<8x8xf32> to vector<1x8x8xf32>
    %188 = vector.extract_strided_slice %152 {offsets = [0, 8], sizes = [8, 8], strides = [1, 1]} : vector<8x32xf32> to vector<8x8xf32>
    %189 = vector.shape_cast %188 : vector<8x8xf32> to vector<1x8x8xf32>
    %190 = vector.extract_strided_slice %153 {offsets = [0, 8], sizes = [8, 8], strides = [1, 1]} : vector<8x32xf32> to vector<8x8xf32>
    %191 = vector.shape_cast %190 : vector<8x8xf32> to vector<1x8x8xf32>
    "tpu.trace_start"() <{level = 10 : i32, message = "bqd,bkd->bqk"}> : () -> ()
    %cst_72 = arith.constant dense<0.000000e+00> : vector<1x8x8xf32>
    %192 = tpu.matmul %187, %189, %cst_72 {dimension_numbers = #tpu.dot_dimension_numbers<[2], [2], [1], [1], [0, 0, 0, 1, 1, 1], [0], [0]>} : vector<1x8x8xf32>, vector<1x8x8xf32>, vector<1x8x8xf32> -> vector<1x8x8xf32>
    "tpu.trace_stop"() : () -> ()
    %193 = vector.shape_cast %9 : vector<8x8xf32> to vector<1x8x8xf32>
    %194 = arith.addf %192, %193 : vector<1x8x8xf32>
    %cst_73 = arith.constant dense<0xFF800000> : vector<1x8xf32>
    %195 = vector.multi_reduction <maximumf>, %194, %cst_73 [2] : vector<1x8x8xf32> to vector<1x8xf32>
    %196 = vector.shape_cast %195 : vector<1x8xf32> to vector<1x8x1xf32>
    %197 = vector.broadcast %196 : vector<1x8x1xf32> to vector<1x8x8xf32>
    %198 = arith.subf %194, %197 : vector<1x8x8xf32>
    %199 = math.exp %198 : vector<1x8x8xf32>
    %cst_74 = arith.constant dense<0.000000e+00> : vector<1x8xf32>
    %200 = vector.multi_reduction <add>, %199, %cst_74 [2] : vector<1x8x8xf32> to vector<1x8xf32>
    %201 = vector.shape_cast %200 : vector<1x8xf32> to vector<1x8x1xf32>
    %202 = tpu.reciprocal %201 {approx = true} : vector<1x8x1xf32> -> vector<1x8x1xf32>
    %203 = vector.broadcast %202 : vector<1x8x1xf32> to vector<1x8x8xf32>
    %204 = arith.mulf %199, %203 : vector<1x8x8xf32>
    "tpu.trace_start"() <{level = 10 : i32, message = "bqk,bkd->bqd"}> : () -> ()
    %cst_75 = arith.constant dense<0.000000e+00> : vector<1x8x8xf32>
    %205 = tpu.matmul %204, %191, %cst_75 {dimension_numbers = #tpu.dot_dimension_numbers<[2], [1], [1], [2], [0, 0, 0, 1, 1, 2], [0], [0]>} : vector<1x8x8xf32>, vector<1x8x8xf32>, vector<1x8x8xf32> -> vector<1x8x8xf32>
    "tpu.trace_stop"() : () -> ()
    %206 = vector.shape_cast %205 : vector<1x8x8xf32> to vector<8x8xf32>
    %207 = vector.extract_strided_slice %155 {offsets = [8, 0], sizes = [8, 32], strides = [1, 1]} : vector<32x32xf32> to vector<8x32xf32>
    %cst_76 = arith.constant dense<0.000000e+00> : vector<8x32xf32>
    %208 = tpu.matmul %206, %207, %cst_76 {dimension_numbers = #tpu.dot_dimension_numbers<[1], [0], [0], [1], [0, 0, 1, 1], [], []>} : vector<8x8xf32>, vector<8x32xf32>, vector<8x32xf32> -> vector<8x32xf32>
    %209 = arith.addf %185, %208 : vector<8x32xf32>
    %210 = vector.extract_strided_slice %151 {offsets = [0, 16], sizes = [8, 8], strides = [1, 1]} : vector<8x32xf32> to vector<8x8xf32>
    %211 = vector.shape_cast %210 : vector<8x8xf32> to vector<1x8x8xf32>
    %212 = vector.extract_strided_slice %152 {offsets = [0, 16], sizes = [8, 8], strides = [1, 1]} : vector<8x32xf32> to vector<8x8xf32>
    %213 = vector.shape_cast %212 : vector<8x8xf32> to vector<1x8x8xf32>
    %214 = vector.extract_strided_slice %153 {offsets = [0, 16], sizes = [8, 8], strides = [1, 1]} : vector<8x32xf32> to vector<8x8xf32>
    %215 = vector.shape_cast %214 : vector<8x8xf32> to vector<1x8x8xf32>
    "tpu.trace_start"() <{level = 10 : i32, message = "bqd,bkd->bqk"}> : () -> ()
    %cst_77 = arith.constant dense<0.000000e+00> : vector<1x8x8xf32>
    %216 = tpu.matmul %211, %213, %cst_77 {dimension_numbers = #tpu.dot_dimension_numbers<[2], [2], [1], [1], [0, 0, 0, 1, 1, 1], [0], [0]>} : vector<1x8x8xf32>, vector<1x8x8xf32>, vector<1x8x8xf32> -> vector<1x8x8xf32>
    "tpu.trace_stop"() : () -> ()
    %217 = vector.shape_cast %9 : vector<8x8xf32> to vector<1x8x8xf32>
    %218 = arith.addf %216, %217 : vector<1x8x8xf32>
    %cst_78 = arith.constant dense<0xFF800000> : vector<1x8xf32>
    %219 = vector.multi_reduction <maximumf>, %218, %cst_78 [2] : vector<1x8x8xf32> to vector<1x8xf32>
    %220 = vector.shape_cast %219 : vector<1x8xf32> to vector<1x8x1xf32>
    %221 = vector.broadcast %220 : vector<1x8x1xf32> to vector<1x8x8xf32>
    %222 = arith.subf %218, %221 : vector<1x8x8xf32>
    %223 = math.exp %222 : vector<1x8x8xf32>
    %cst_79 = arith.constant dense<0.000000e+00> : vector<1x8xf32>
    %224 = vector.multi_reduction <add>, %223, %cst_79 [2] : vector<1x8x8xf32> to vector<1x8xf32>
    %225 = vector.shape_cast %224 : vector<1x8xf32> to vector<1x8x1xf32>
    %226 = tpu.reciprocal %225 {approx = true} : vector<1x8x1xf32> -> vector<1x8x1xf32>
    %227 = vector.broadcast %226 : vector<1x8x1xf32> to vector<1x8x8xf32>
    %228 = arith.mulf %223, %227 : vector<1x8x8xf32>
    "tpu.trace_start"() <{level = 10 : i32, message = "bqk,bkd->bqd"}> : () -> ()
    %cst_80 = arith.constant dense<0.000000e+00> : vector<1x8x8xf32>
    %229 = tpu.matmul %228, %215, %cst_80 {dimension_numbers = #tpu.dot_dimension_numbers<[2], [1], [1], [2], [0, 0, 0, 1, 1, 2], [0], [0]>} : vector<1x8x8xf32>, vector<1x8x8xf32>, vector<1x8x8xf32> -> vector<1x8x8xf32>
    "tpu.trace_stop"() : () -> ()
    %230 = vector.shape_cast %229 : vector<1x8x8xf32> to vector<8x8xf32>
    %231 = vector.extract_strided_slice %155 {offsets = [16, 0], sizes = [8, 32], strides = [1, 1]} : vector<32x32xf32> to vector<8x32xf32>
    %cst_81 = arith.constant dense<0.000000e+00> : vector<8x32xf32>
    %232 = tpu.matmul %230, %231, %cst_81 {dimension_numbers = #tpu.dot_dimension_numbers<[1], [0], [0], [1], [0, 0, 1, 1], [], []>} : vector<8x8xf32>, vector<8x32xf32>, vector<8x32xf32> -> vector<8x32xf32>
    %233 = arith.addf %209, %232 : vector<8x32xf32>
    %234 = vector.extract_strided_slice %151 {offsets = [0, 24], sizes = [8, 8], strides = [1, 1]} : vector<8x32xf32> to vector<8x8xf32>
    %235 = vector.shape_cast %234 : vector<8x8xf32> to vector<1x8x8xf32>
    %236 = vector.extract_strided_slice %152 {offsets = [0, 24], sizes = [8, 8], strides = [1, 1]} : vector<8x32xf32> to vector<8x8xf32>
    %237 = vector.shape_cast %236 : vector<8x8xf32> to vector<1x8x8xf32>
    %238 = vector.extract_strided_slice %153 {offsets = [0, 24], sizes = [8, 8], strides = [1, 1]} : vector<8x32xf32> to vector<8x8xf32>
    %239 = vector.shape_cast %238 : vector<8x8xf32> to vector<1x8x8xf32>
    "tpu.trace_start"() <{level = 10 : i32, message = "bqd,bkd->bqk"}> : () -> ()
    %cst_82 = arith.constant dense<0.000000e+00> : vector<1x8x8xf32>
    %240 = tpu.matmul %235, %237, %cst_82 {dimension_numbers = #tpu.dot_dimension_numbers<[2], [2], [1], [1], [0, 0, 0, 1, 1, 1], [0], [0]>} : vector<1x8x8xf32>, vector<1x8x8xf32>, vector<1x8x8xf32> -> vector<1x8x8xf32>
    "tpu.trace_stop"() : () -> ()
    %241 = vector.shape_cast %9 : vector<8x8xf32> to vector<1x8x8xf32>
    %242 = arith.addf %240, %241 : vector<1x8x8xf32>
    %cst_83 = arith.constant dense<0xFF800000> : vector<1x8xf32>
    %243 = vector.multi_reduction <maximumf>, %242, %cst_83 [2] : vector<1x8x8xf32> to vector<1x8xf32>
    %244 = vector.shape_cast %243 : vector<1x8xf32> to vector<1x8x1xf32>
    %245 = vector.broadcast %244 : vector<1x8x1xf32> to vector<1x8x8xf32>
    %246 = arith.subf %242, %245 : vector<1x8x8xf32>
    %247 = math.exp %246 : vector<1x8x8xf32>
    %cst_84 = arith.constant dense<0.000000e+00> : vector<1x8xf32>
    %248 = vector.multi_reduction <add>, %247, %cst_84 [2] : vector<1x8x8xf32> to vector<1x8xf32>
    %249 = vector.shape_cast %248 : vector<1x8xf32> to vector<1x8x1xf32>
    %250 = tpu.reciprocal %249 {approx = true} : vector<1x8x1xf32> -> vector<1x8x1xf32>
    %251 = vector.broadcast %250 : vector<1x8x1xf32> to vector<1x8x8xf32>
    %252 = arith.mulf %247, %251 : vector<1x8x8xf32>
    "tpu.trace_start"() <{level = 10 : i32, message = "bqk,bkd->bqd"}> : () -> ()
    %cst_85 = arith.constant dense<0.000000e+00> : vector<1x8x8xf32>
    %253 = tpu.matmul %252, %239, %cst_85 {dimension_numbers = #tpu.dot_dimension_numbers<[2], [1], [1], [2], [0, 0, 0, 1, 1, 2], [0], [0]>} : vector<1x8x8xf32>, vector<1x8x8xf32>, vector<1x8x8xf32> -> vector<1x8x8xf32>
    "tpu.trace_stop"() : () -> ()
    %254 = vector.shape_cast %253 : vector<1x8x8xf32> to vector<8x8xf32>
    %255 = vector.extract_strided_slice %155 {offsets = [24, 0], sizes = [8, 32], strides = [1, 1]} : vector<32x32xf32> to vector<8x32xf32>
    %cst_86 = arith.constant dense<0.000000e+00> : vector<8x32xf32>
    %256 = tpu.matmul %254, %255, %cst_86 {dimension_numbers = #tpu.dot_dimension_numbers<[1], [0], [0], [1], [0, 0, 1, 1], [], []>} : vector<8x8xf32>, vector<8x32xf32>, vector<8x32xf32> -> vector<8x32xf32>
    %257 = arith.addf %233, %256 : vector<8x32xf32>
    %258 = vector.broadcast %158 : vector<1x32xf32> to vector<8x32xf32>
    %259 = arith.addf %257, %258 : vector<8x32xf32>
    %c1_87 = arith.constant 1 : index
    %c0_88 = arith.constant 0 : index
    %c0_89 = arith.constant 0 : index
    %260 = vector.load %arg6[%c1_87, %c0_88, %c0_89] : memref<2x32x4xf32, #tpu.memory_space<vmem>>, vector<1x32x4xf32>
    %261 = vector.shape_cast %260 : vector<1x32x4xf32> to vector<32x4xf32>
    %cst_90 = arith.constant dense<0.000000e+00> : vector<8x4xf32>
    %262 = tpu.matmul %259, %261, %cst_90 {dimension_numbers = #tpu.dot_dimension_numbers<[1], [0], [0], [1], [0, 0, 1, 1], [], []>} : vector<8x32xf32>, vector<32x4xf32>, vector<8x4xf32> -> vector<8x4xf32>
    %263 = vector.broadcast %159 : vector<1x4xf32> to vector<8x4xf32>
    %264 = arith.addf %262, %263 : vector<8x4xf32>
    %cst_91 = arith.constant 0.000000e+00 : f32
    %265 = vector.broadcast %cst_91 : f32 to vector<8x4xf32>
    %266 = arith.maximumf %264, %265 : vector<8x4xf32>
    %c1_92 = arith.constant 1 : index
    %c0_93 = arith.constant 0 : index
    %c0_94 = arith.constant 0 : index
    %267 = vector.load %arg7[%c1_92, %c0_93, %c0_94] : memref<2x4x4xf32, #tpu.memory_space<vmem>>, vector<1x4x4xf32>
    %268 = vector.shape_cast %267 : vector<1x4x4xf32> to vector<4x4xf32>
    %cst_95 = arith.constant dense<0.000000e+00> : vector<8x4xf32>
    %269 = tpu.matmul %266, %268, %cst_95 {dimension_numbers = #tpu.dot_dimension_numbers<[1], [0], [0], [1], [0, 0, 1, 1], [], []>} : vector<8x4xf32>, vector<4x4xf32>, vector<8x4xf32> -> vector<8x4xf32>
    %270 = vector.broadcast %160 : vector<1x4xf32> to vector<8x4xf32>
    %271 = arith.addf %269, %270 : vector<8x4xf32>
    %272 = math.exp %271 : vector<8x4xf32>
    %cst_96 = arith.constant 9.99999974E-6 : f32
    %cst_97 = arith.constant 1.000000e+02 : f32
    %273 = vector.broadcast %cst_96 : f32 to vector<8x4xf32>
    %274 = arith.maximumf %273, %272 : vector<8x4xf32>
    %275 = vector.broadcast %cst_97 : f32 to vector<8x4xf32>
    %276 = arith.minimumf %275, %274 : vector<8x4xf32>
    %277 = vector.shape_cast %276 : vector<8x4xf32> to vector<1x8x4xf32>
    %c0_98 = arith.constant 0 : index
    %c0_99 = arith.constant 0 : index
    %c4 = arith.constant 4 : index
    %278 = vector.load %arg9[%c0_98, %c0_99, %c4] : memref<1x8x8xf32, #tpu.memory_space<vmem>>, vector<1x8x4xf32>
    tpu.vector_store %arg9[%c0_98, %c0_99, %c4], %277 {strides = array<i32>} : memref<1x8x8xf32, #tpu.memory_space<vmem>>, vector<1x8x4xf32>,
    return
  }
  func.func @transform_0(%arg0: i32) -> (i32, i32, i32) {
    %c0_i32 = arith.constant 0 : i32
    %c0_i32_0 = arith.constant 0 : i32
    %c0_i32_1 = arith.constant 0 : i32
    return %arg0, %c0_i32, %c0_i32_0 : i32, i32, i32
  }
  func.func @transform_1(%arg0: i32) -> (i32, i32, i32) {
    %c0_i32 = arith.constant 0 : i32
    %c0_i32_0 = arith.constant 0 : i32
    %c0_i32_1 = arith.constant 0 : i32
    %c0_i32_2 = arith.constant 0 : i32
    return %c0_i32, %c0_i32_0, %c0_i32_1 : i32, i32, i32
  }
  func.func @transform_2(%arg0: i32) -> (i32, i32, i32) {
    %c0_i32 = arith.constant 0 : i32
    %c0_i32_0 = arith.constant 0 : i32
    %c0_i32_1 = arith.constant 0 : i32
    %c0_i32_2 = arith.constant 0 : i32
    return %c0_i32, %c0_i32_0, %c0_i32_1 : i32, i32, i32
  }
  func.func @transform_3(%arg0: i32) -> (i32, i32, i32) {
    %c0_i32 = arith.constant 0 : i32
    %c0_i32_0 = arith.constant 0 : i32
    %c0_i32_1 = arith.constant 0 : i32
    %c0_i32_2 = arith.constant 0 : i32
    return %c0_i32, %c0_i32_0, %c0_i32_1 : i32, i32, i32
  }
  func.func @transform_4(%arg0: i32) -> (i32, i32, i32) {
    %c0_i32 = arith.constant 0 : i32
    %c0_i32_0 = arith.constant 0 : i32
    %c0_i32_1 = arith.constant 0 : i32
    %c0_i32_2 = arith.constant 0 : i32
    return %c0_i32, %c0_i32_0, %c0_i32_1 : i32, i32, i32
  }
  func.func @transform_5(%arg0: i32) -> (i32, i32, i32) {
    %c0_i32 = arith.constant 0 : i32
    %c0_i32_0 = arith.constant 0 : i32
    %c0_i32_1 = arith.constant 0 : i32
    %c0_i32_2 = arith.constant 0 : i32
    return %c0_i32, %c0_i32_0, %c0_i32_1 : i32, i32, i32
  }
  func.func @transform_6(%arg0: i32) -> (i32, i32, i32) {
    %c0_i32 = arith.constant 0 : i32
    %c0_i32_0 = arith.constant 0 : i32
    %c0_i32_1 = arith.constant 0 : i32
    %c0_i32_2 = arith.constant 0 : i32
    return %c0_i32, %c0_i32_0, %c0_i32_1 : i32, i32, i32
  }
  func.func @transform_7(%arg0: i32) -> (i32, i32, i32) {
    %c0_i32 = arith.constant 0 : i32
    %c0_i32_0 = arith.constant 0 : i32
    %c0_i32_1 = arith.constant 0 : i32
    %c0_i32_2 = arith.constant 0 : i32
    return %c0_i32, %c0_i32_0, %c0_i32_1 : i32, i32, i32
  }
  func.func @transform_8(%arg0: i32) -> (i32, i32, i32) {
    %c0_i32 = arith.constant 0 : i32
    %c0_i32_0 = arith.constant 0 : i32
    %c0_i32_1 = arith.constant 0 : i32
    return %arg0, %c0_i32, %c0_i32_0 : i32, i32, i32
  }
}

</mosaic_0001>

<llo_original>
// kernel: tpu_custom_call.1
$region0: #{tpu_custom_call.1}
  #allocation0 [shape = 'u32[]', space=smem, size = 0x4, offset = 0x4, fixed_abs, tag = 'smem constant byte address 0x4 - core index']
  #allocation1 [shape = 'u32[144,128]{1,0:T(1,128)}', space=vmem, size = 0x12000, scoped, tag = 'internal scratch']
  %s0 = inlined_call_operand.hbm [shape: f32[2,8,32], index: 0, kind: input, shape index: {}]
  %s1 = inlined_call_operand.vmem [shape: f32[1,8,32], index: 1, kind: input, shape index: {}]
  %s2 = inlined_call_operand.vmem [shape: f32[2,32,96], index: 2, kind: input, shape index: {}]
  %s3 = inlined_call_operand.vmem [shape: f32[2,1,96], index: 3, kind: input, shape index: {}]
  %s4 = inlined_call_operand.hbm [shape: f32[2,32,32], index: 4, kind: input, shape index: {}]
  %s5 = inlined_call_operand.vmem [shape: f32[2,32,4], index: 5, kind: input, shape index: {}]
  %s6 = inlined_call_operand.vmem [shape: f32[2,4,4], index: 6, kind: input, shape index: {}]
  %s7 = inlined_call_operand.vmem [shape: f32[2,1,40], index: 7, kind: input, shape index: {}]
  %s8 = inlined_call_operand.hbm [shape: f32[2,8,8], index: 8, kind: output, shape index: {}]
  %s9 = sld [smem:[#allocation0]]
  $region73: #{tpu_custom_call.1} parent=0
    _
  %s11 = ssub.s32 1, %s9
  %s12 = scalar_select 0, %s11, %s9
  $region1: #{tpu_custom_call.1} parent=0
    #allocation2 [shape = 'u8[8192]{0}', space=vmem, size = 0x2000, scoped, tag = 'input window, operand 0']
    #allocation3 [shape = 's32[2]{0}', space=sflag, size = 0x8, scoped, tag = 'scoped memory for tpu_custom_call.1']
    #allocation4 [shape = 's32[2]{0}', space=sflag, size = 0x8, scoped, tag = 'scoped memory for tpu_custom_call.1']
    #allocation5 [shape = 'u8[32768]{0}', space=vmem, size = 0x8000, scoped, tag = 'input window, operand 4, single buffered']
    #allocation6 [shape = 's32[1]{0}', space=sflag, size = 0x4, scoped, tag = 'scoped memory for tpu_custom_call.1']
    #allocation7 [shape = 'u8[8192]{0}', space=vmem, size = 0x2000, scoped, tag = 'output window, operand 0']
    %13 = vsyncpa [#allocation3], 0
    %s14 = scalar_lea.sflag [#allocation3], 1
    %15 = vsyncpa %s14, 0
    %16 = vsyncpa [#allocation6], 0
    %17 = vsyncpa [#allocation4], 0
    %s18 = scalar_lea.sflag [#allocation4], 1
    %19 = vsyncpa %s18, 0
    loop: start=0, step=1, limit=4
    $region2: #{tpu_custom_call.1} parent=1 // loop_pre_header
      _
    $region3: #{tpu_custom_call.1} parent=1 // loop_header
      %s21 = sphi 0, %s25
      %p22 = scmp.ge.s32.totalorder %s21, 4
      %s31 = sphi 0, %s33
      %s34 = sphi 0, %s31
      %s35 = sphi 0, %s34
      %s51 = sphi 0, %s35
      %s55 = sphi 0, %s55
      %s57 = sphi 0, %s55
      %s58 = sphi 0, %s57
      %s72 = sphi 0, %s58
      %s76 = sphi 0, %s76
      %s78 = sphi 0, %s76
      %s79 = sphi 0, %s78
      %s93 = sphi 0, %s79
      %s97 = sphi 0, %s97
      %s99 = sphi 0, %s97
      %s100 = sphi 0, %s99
      %s114 = sphi 0, %s100
      %s118 = sphi 0, %s118
      %s120 = sphi 0, %s118
      %s121 = sphi 0, %s120
      %s135 = sphi 0, %s121
      %s139 = sphi 0, %s139
      %s141 = sphi 0, %s139
      %s142 = sphi 0, %s141
      %s156 = sphi 0, %s142
      %s160 = sphi 0, %s160
      %s162 = sphi 0, %s160
      %s163 = sphi 0, %s162
      %s177 = sphi 0, %s163
      %s181 = sphi 0, %s181
      %s183 = sphi 0, %s181
      %s184 = sphi 0, %s183
      %s198 = sphi 0, %s184
      %s204 = sphi 0, %s206
      %s207 = sphi 0, %s204
      %s208 = sphi 0, %s207
      %s224 = sphi 0, %s208
    $region4: #{tpu_custom_call.1} parent=1 // loop_header_branch
      %24 = sbr.rel (%p22) target = $region8
    $region5: #{tpu_custom_call.1} parent=1 // loop_body
      %s26 = ssub.s32 %s21, 1
      %s27 = ssub.s32 %s21, 2
      %s28 = sadd.s32 %s21, 1
      %s29 = ssub.s32 %s21, %s28
      %p30 = scmp.eq.s32.totalorder %s29, 0
      %s32 = sadd.s32 %s31, 1
      %s33 = scalar_select %p30, %s31, %s32
      %p36 = pneg %p30
      %p37 = scmp.eq.s32.totalorder %s21, 1
      %p38 = por %p36, %p37
      %p39 = scmp.ne.s32.totalorder %s31, %s34
      %p40 = scmp.eq.s32.totalorder %s21, 0
      %p41 = por %p39, %p40
      %p42 = scmp.ne.s32.totalorder %s31, %s34
      %p43 = scmp.eq.s32.totalorder %s26, 1
      %p44 = por %p42, %p43
      %p45 = scmp.ne.s32.totalorder %s34, %s35
      %p46 = scmp.eq.s32.totalorder %s26, 0
      %p47 = por %p45, %p46
      %p48 = scmp.ne.s32.totalorder %s34, %s35
      %p49 = scmp.eq.s32.totalorder %s27, 1
      %p50 = por %p48, %p49
      %p52 = scmp.ne.s32.totalorder %s35, %s51
      %p53 = scmp.eq.s32.totalorder %s27, 0
      %p54 = por %p52, %p53
      %s56 = sadd.s32 %s55, 1
      %p59 = scmp.eq.s32.totalorder %s21, 1
      %p60 = scmp.ne.s32.totalorder %s55, %s57
      %p61 = scmp.eq.s32.totalorder %s21, 0
      %p62 = por %p60, %p61
      %p63 = scmp.ne.s32.totalorder %s55, %s57
      %p64 = scmp.eq.s32.totalorder %s26, 1
      %p65 = por %p63, %p64
      %p66 = scmp.ne.s32.totalorder %s57, %s58
      %p67 = scmp.eq.s32.totalorder %s26, 0
      %p68 = por %p66, %p67
      %p69 = scmp.ne.s32.totalorder %s57, %s58
      %p70 = scmp.eq.s32.totalorder %s27, 1
      %p71 = por %p69, %p70
      %p73 = scmp.ne.s32.totalorder %s58, %s72
      %p74 = scmp.eq.s32.totalorder %s27, 0
      %p75 = por %p73, %p74
      %s77 = sadd.s32 %s76, 1
      %p80 = scmp.eq.s32.totalorder %s21, 1
      %p81 = scmp.ne.s32.totalorder %s76, %s78
      %p82 = scmp.eq.s32.totalorder %s21, 0
      %p83 = por %p81, %p82
      %p84 = scmp.ne.s32.totalorder %s76, %s78
      %p85 = scmp.eq.s32.totalorder %s26, 1
      %p86 = por %p84, %p85
      %p87 = scmp.ne.s32.totalorder %s78, %s79
      %p88 = scmp.eq.s32.totalorder %s26, 0
      %p89 = por %p87, %p88
      %p90 = scmp.ne.s32.totalorder %s78, %s79
      %p91 = scmp.eq.s32.totalorder %s27, 1
      %p92 = por %p90, %p91
      %p94 = scmp.ne.s32.totalorder %s79, %s93
      %p95 = scmp.eq.s32.totalorder %s27, 0
      %p96 = por %p94, %p95
      %s98 = sadd.s32 %s97, 1
      %p101 = scmp.eq.s32.totalorder %s21, 1
      %p102 = scmp.ne.s32.totalorder %s97, %s99
      %p103 = scmp.eq.s32.totalorder %s21, 0
      %p104 = por %p102, %p103
      %p105 = scmp.ne.s32.totalorder %s97, %s99
      %p106 = scmp.eq.s32.totalorder %s26, 1
      %p107 = por %p105, %p106
      %p108 = scmp.ne.s32.totalorder %s99, %s100
      %p109 = scmp.eq.s32.totalorder %s26, 0
      %p110 = por %p108, %p109
      %p111 = scmp.ne.s32.totalorder %s99, %s100
      %p112 = scmp.eq.s32.totalorder %s27, 1
      %p113 = por %p111, %p112
      %p115 = scmp.ne.s32.totalorder %s100, %s114
      %p116 = scmp.eq.s32.totalorder %s27, 0
      %p117 = por %p115, %p116
      %s119 = sadd.s32 %s118, 1
      %p122 = scmp.eq.s32.totalorder %s21, 1
      %p123 = scmp.ne.s32.totalorder %s118, %s120
      %p124 = scmp.eq.s32.totalorder %s21, 0
      %p125 = por %p123, %p124
      %p126 = scmp.ne.s32.totalorder %s118, %s120
      %p127 = scmp.eq.s32.totalorder %s26, 1
      %p128 = por %p126, %p127
      %p129 = scmp.ne.s32.totalorder %s120, %s121
      %p130 = scmp.eq.s32.totalorder %s26, 0
      %p131 = por %p129, %p130
      %p132 = scmp.ne.s32.totalorder %s120, %s121
      %p133 = scmp.eq.s32.totalorder %s27, 1
      %p134 = por %p132, %p133
      %p136 = scmp.ne.s32.totalorder %s121, %s135
      %p137 = scmp.eq.s32.totalorder %s27, 0
      %p138 = por %p136, %p137
      %s140 = sadd.s32 %s139, 1
      %p143 = scmp.eq.s32.totalorder %s21, 1
      %p144 = scmp.ne.s32.totalorder %s139, %s141
      %p145 = scmp.eq.s32.totalorder %s21, 0
      %p146 = por %p144, %p145
      %p147 = scmp.ne.s32.totalorder %s139, %s141
      %p148 = scmp.eq.s32.totalorder %s26, 1
      %p149 = por %p147, %p148
      %p150 = scmp.ne.s32.totalorder %s141, %s142
      %p151 = scmp.eq.s32.totalorder %s26, 0
      %p152 = por %p150, %p151
      %p153 = scmp.ne.s32.totalorder %s141, %s142
      %p154 = scmp.eq.s32.totalorder %s27, 1
      %p155 = por %p153, %p154
      %p157 = scmp.ne.s32.totalorder %s142, %s156
      %p158 = scmp.eq.s32.totalorder %s27, 0
      %p159 = por %p157, %p158
      %s161 = sadd.s32 %s160, 1
      %p164 = scmp.eq.s32.totalorder %s21, 1
      %p165 = scmp.ne.s32.totalorder %s160, %s162
      %p166 = scmp.eq.s32.totalorder %s21, 0
      %p167 = por %p165, %p166
      %p168 = scmp.ne.s32.totalorder %s160, %s162
      %p169 = scmp.eq.s32.totalorder %s26, 1
      %p170 = por %p168, %p169
      %p171 = scmp.ne.s32.totalorder %s162, %s163
      %p172 = scmp.eq.s32.totalorder %s26, 0
      %p173 = por %p171, %p172
      %p174 = scmp.ne.s32.totalorder %s162, %s163
      %p175 = scmp.eq.s32.totalorder %s27, 1
      %p176 = por %p174, %p175
      %p178 = scmp.ne.s32.totalorder %s163, %s177
      %p179 = scmp.eq.s32.totalorder %s27, 0
      %p180 = por %p178, %p179
      %s182 = sadd.s32 %s181, 1
      %p185 = scmp.eq.s32.totalorder %s21, 1
      %p186 = scmp.ne.s32.totalorder %s181, %s183
      %p187 = scmp.eq.s32.totalorder %s21, 0
      %p188 = por %p186, %p187
      %p189 = scmp.ne.s32.totalorder %s181, %s183
      %p190 = scmp.eq.s32.totalorder %s26, 1
      %p191 = por %p189, %p190
      %p192 = scmp.ne.s32.totalorder %s183, %s184
      %p193 = scmp.eq.s32.totalorder %s26, 0
      %p194 = por %p192, %p193
      %p195 = scmp.ne.s32.totalorder %s183, %s184
      %p196 = scmp.eq.s32.totalorder %s27, 1
      %p197 = por %p195, %p196
      %p199 = scmp.ne.s32.totalorder %s184, %s198
      %p200 = scmp.eq.s32.totalorder %s27, 0
      %p201 = por %p199, %p200
      %s202 = ssub.s32 %s21, %s28
      %p203 = scmp.eq.s32.totalorder %s202, 0
      %s205 = sadd.s32 %s204, 1
      %s206 = scalar_select %p203, %s204, %s205
      %p209 = pneg %p203
      %p210 = scmp.eq.s32.totalorder %s21, 1
      %p211 = por %p209, %p210
      %p212 = scmp.ne.s32.totalorder %s204, %s207
      %p213 = scmp.eq.s32.totalorder %s21, 0
      %p214 = por %p212, %p213
      %p215 = scmp.ne.s32.totalorder %s204, %s207
      %p216 = scmp.eq.s32.totalorder %s26, 1
      %p217 = por %p215, %p216
      %p218 = scmp.ne.s32.totalorder %s207, %s208
      %p219 = scmp.eq.s32.totalorder %s26, 0
      %p220 = por %p218, %p219
      %p221 = scmp.ne.s32.totalorder %s207, %s208
      %p222 = scmp.eq.s32.totalorder %s27, 1
      %p223 = por %p221, %p222
      %p225 = scmp.ne.s32.totalorder %s208, %s224
      %p226 = scmp.eq.s32.totalorder %s27, 0
      %p227 = por %p225, %p226
      %p228 = scmp.le.s32.totalorder 1, %s21
      %p229 = scmp.lt.s32.totalorder %s21, 3
      %p230 = pnand %p228, %p229
      %p231 = pneg %p230
      // Predicated region
      $region9: #{tpu_custom_call.1} parent=5 // pred_check
        _
      $region10: #{tpu_custom_call.1} parent=5 // pred_check_branch
        %233 = sbr.rel (%p230) target = $region12
      $region11: #{tpu_custom_call.1} parent=5 // pred_region
        %s234 = ssub.s32 %s21, 1
        // Predicated region
        $region13: #{tpu_custom_call.1} parent=11 // pred_check
          %p235 = pneg %p68
        $region14: #{tpu_custom_call.1} parent=11 // pred_check_branch
          %237 = sbr.rel (%p235) target = $region16
        $region15: #{tpu_custom_call.1} parent=11 // pred_region
          _
        $region16: #{tpu_custom_call.1} parent=11 // pred_fallthru
          _
        // Predicated region
        $region17: #{tpu_custom_call.1} parent=11 // pred_check
          %p238 = pneg %p89
        $region18: #{tpu_custom_call.1} parent=11 // pred_check_branch
          %240 = sbr.rel (%p238) target = $region20
        $region19: #{tpu_custom_call.1} parent=11 // pred_region
          _
        $region20: #{tpu_custom_call.1} parent=11 // pred_fallthru
          _
        // Predicated region
        $region21: #{tpu_custom_call.1} parent=11 // pred_check
          %p241 = pneg %p110
        $region22: #{tpu_custom_call.1} parent=11 // pred_check_branch
          %243 = sbr.rel (%p241) target = $region24
        $region23: #{tpu_custom_call.1} parent=11 // pred_region
          _
        $region24: #{tpu_custom_call.1} parent=11 // pred_fallthru
          _
        // Predicated region
        $region25: #{tpu_custom_call.1} parent=11 // pred_check
          %p244 = pneg %p131
        $region26: #{tpu_custom_call.1} parent=11 // pred_check_branch
          %246 = sbr.rel (%p244) target = $region28
        $region27: #{tpu_custom_call.1} parent=11 // pred_region
          %s248 = ssub.s32 1024, 1024
          %249 = vsyncadd [#allocation6], %s248
          %s250 = sshll.u32 [#allocation5], 4
          %s251 = int_to_ptr.vmem [resolvable:$true] %s250
          %256 = dma.hbm_to_vmem [thread:$0]  %s4, 1024, %s251, [#allocation6], 128, 128, 8
        $region28: #{tpu_custom_call.1} parent=11 // pred_fallthru
          _
        // Predicated region
        $region29: #{tpu_custom_call.1} parent=11 // pred_check
          %p257 = pneg %p152
        $region30: #{tpu_custom_call.1} parent=11 // pred_check_branch
          %259 = sbr.rel (%p257) target = $region32
        $region31: #{tpu_custom_call.1} parent=11 // pred_region
          _
        $region32: #{tpu_custom_call.1} parent=11 // pred_fallthru
          _
        // Predicated region
        $region33: #{tpu_custom_call.1} parent=11 // pred_check
          %p260 = pneg %p173
        $region34: #{tpu_custom_call.1} parent=11 // pred_check_branch
          %262 = sbr.rel (%p260) target = $region36
        $region35: #{tpu_custom_call.1} parent=11 // pred_region
          _
        $region36: #{tpu_custom_call.1} parent=11 // pred_fallthru
          _
        // Predicated region
        $region37: #{tpu_custom_call.1} parent=11 // pred_check
          %p263 = pneg %p194
        $region38: #{tpu_custom_call.1} parent=11 // pred_check_branch
          %265 = sbr.rel (%p263) target = $region40
        $region39: #{tpu_custom_call.1} parent=11 // pred_region
          _
        $region40: #{tpu_custom_call.1} parent=11 // pred_fallthru
          _
      $region12: #{tpu_custom_call.1} parent=5 // pred_fallthru
        _
      %p266 = scmp.lt.s32.totalorder %s21, 2
      // Predicated region
      $region41: #{tpu_custom_call.1} parent=5 // pred_check
        %p267 = pneg %p266
      $region42: #{tpu_custom_call.1} parent=5 // pred_check_branch
        %269 = sbr.rel (%p267) target = $region44
      $region43: #{tpu_custom_call.1} parent=5 // pred_region
        // Predicated region
        $region45: #{tpu_custom_call.1} parent=43 // pred_check
          %p270 = pneg %p41
        $region46: #{tpu_custom_call.1} parent=43 // pred_check_branch
          %272 = sbr.rel (%p270) target = $region48
        $region47: #{tpu_custom_call.1} parent=43 // pred_region
          %s273 = sand.u32 %s31, 1
          %s274 = scalar_lea.sflag [#allocation3], %s273
          %s275 = sand.u32 %s31, 1
          %s276 = smul.addr %s275, 8
          %s277 = scalar_lea.vmem [#allocation2], %s276
          %s279 = ssub.s32 128, 128
          %280 = vsyncadd %s274, %s279
          %s281 = smul.addr %s21, 128
          %s282 = scalar_lea.hbm %s0, %s281
          %s284 = sshll.u32 %s277, 4
          %s285 = int_to_ptr.vmem [resolvable:$true] %s284
          %287 = dma.hbm_to_vmem [thread:$0]  %s282, 128, %s285, %s274
        $region48: #{tpu_custom_call.1} parent=43 // pred_fallthru
          _
      $region44: #{tpu_custom_call.1} parent=5 // pred_fallthru
        _
      %p288 = scmp.le.s32.totalorder 1, %s21
      %p289 = scmp.lt.s32.totalorder %s21, 3
      %p290 = pnand %p288, %p289
      %p291 = pneg %p290
      // Predicated region
      $region49: #{tpu_custom_call.1} parent=5 // pred_check
        _
      $region50: #{tpu_custom_call.1} parent=5 // pred_check_branch
        %293 = sbr.rel (%p290) target = $region52
      $region51: #{tpu_custom_call.1} parent=5 // pred_region
        %s294 = ssub.s32 %s21, 1
        %s295 = sand.u32 %s34, 1
        %s296 = scalar_lea.sflag [#allocation3], %s295
        %s297 = sand.u32 %s34, 1
        %s298 = smul.addr %s297, 8
        %s299 = scalar_lea.vmem [#allocation2], %s298
        // Predicated region
        $region53: #{tpu_custom_call.1} parent=51 // pred_check
          %p300 = pneg %p47
        $region54: #{tpu_custom_call.1} parent=51 // pred_check_branch
          %302 = sbr.rel (%p300) target = $region56
        $region55: #{tpu_custom_call.1} parent=51 // pred_region
          %303 = dma.done %s296, 128
        $region56: #{tpu_custom_call.1} parent=51 // pred_fallthru
          _
        // Predicated region
        $region57: #{tpu_custom_call.1} parent=51 // pred_check
          %p304 = pneg %p131
        $region58: #{tpu_custom_call.1} parent=51 // pred_check_branch
          %306 = sbr.rel (%p304) target = $region60
        $region59: #{tpu_custom_call.1} parent=51 // pred_region
          %307 = dma.done [#allocation6], 1024
        $region60: #{tpu_custom_call.1} parent=51 // pred_fallthru
          _
        %s308 = sand.u32 %s34, 1
        %s309 = scalar_lea.sflag [#allocation3], %s308
        %s310 = sand.u32 %s34, 1
        %s311 = smul.addr %s310, 8
        %s312 = scalar_lea.vmem [#allocation2], %s311
        %p313 = pneg %p47
        %p314 = pneg %p44
        %p315 = pneg %p68
        %p316 = pneg %p65
        %p317 = pneg %p89
        %p318 = pneg %p86
        %p319 = pneg %p110
        %p320 = pneg %p107
        %p321 = pneg %p131
        %p322 = pneg %p128
        %p323 = pneg %p152
        %p324 = pneg %p149
        %p325 = pneg %p173
        %p326 = pneg %p170
        %p327 = pneg %p194
        %p328 = pneg %p191
        %p329 = pneg %p220
        %p330 = pneg %p217
        %s331 = sand.u32 %s207, 1
        %s332 = scalar_lea.sflag [#allocation4], %s331
        %s333 = sand.u32 %s207, 1
        %s334 = smul.addr %s333, 8
        %s335 = scalar_lea.vmem [#allocation7], %s334
        %v336 = vld [vmem:[%s299] sm:$0xff]
        %v337 = vld [vmem:[%s1] sm:$0xff]
        %v338 = vadd.f32 %v336, %v337
        %v339 = vlaneseq
        %v340 = vshrl.u32 %v339, 7
        %v341 = vlaneseq
        %v342 = vand.u32 %v341, 127
        %vm343 = vcmp.gt.s32.totalorder %v342, %v340
        %v344 = vsel %vm343, -1e+30, 0.0
        %v345 = vld [vmem:[%s2] sm:$0xff]
        %v346 = vld [vmem:[%s2 + $0x8] sm:$0xff]
        %v347 = vld [vmem:[%s2 + $0x10] sm:$0xff]
        %v348 = vld [vmem:[%s2 + $0x18] sm:$0xff]
        %v349 = vld [vmem:[%s3] sm:$0x1]
        %v351 = vlaneseq
        %v352 = vshrl.u32 %v351, 7
        %v353 = vsub.s32 0, %v352
        %v354 = vrot.slane %v349, %v353
        %vm356 = vcmask 261120
        %v358 = vsel %vm356, %v338, 0
        %360 = vmatprep.subr.mxu0 0.0
        %361 = vmatpush1.msra.mxu0 %v345
        %362 = vmatprep.subr.mxu0 0.0
        %363 = vmatpush1.msra.mxu0 %v346
        %364 = vmatprep.subr.mxu0 0.0
        %365 = vmatpush1.msra.mxu0 %v347
        %366 = vmatprep.subr.mxu0 0.0
        %367 = vmatpush1.msra.mxu0 %v348
        %368 = vmatprep.subr.mxu0 0.0
        %369 = vmatpush1.msra.mxu0 0.0
        %370 = vmatprep.subr.mxu0 0.0
        %371 = vmatpush1.msra.mxu0 0.0
        %372 = vmatprep.subr.mxu0 0.0
        %373 = vmatpush1.msra.mxu0 0.0
        %374 = vmatprep.subr.mxu0 0.0
        %375 = vmatpush1.msra.mxu0 0.0
        %376 = vmatprep.subr.mxu0 0.0
        %377 = vmatpush1.msra.mxu0 0.0
        %378 = vmatprep.subr.mxu0 0.0
        %379 = vmatpush1.msra.mxu0 0.0
        %380 = vmatprep.subr.mxu0 0.0
        %381 = vmatpush1.msra.mxu0 0.0
        %382 = vmatprep.subr.mxu0 0.0
        %383 = vmatpush1.msra.mxu0 0.0
        %384 = vmatprep.subr.mxu0 0.0
        %385 = vmatpush1.msra.mxu0 0.0
        %386 = vmatprep.subr.mxu0 0.0
        %387 = vmatpush1.msra.mxu0 0.0
        %388 = vmatprep.subr.mxu0 0.0
        %389 = vmatpush1.msra.mxu0 0.0
        %390 = vmatprep.subr.mxu0 0.0
        %391 = vmatpush1.msra.mxu0 0.0
        %392 = vmatprep.subr.mxu0 0.0
        %393 = vmatpush1.msra.mxu0 0.0
        %394 = vmatprep.subr.mxu0 0.0
        %395 = vmatpush1.msra.mxu0 0.0
        %396 = vmatprep.subr.mxu0 0.0
        %397 = vmatpush1.msra.mxu0 0.0
        %398 = vmatprep.subr.mxu0 0.0
        %399 = vmatpush1.msra.mxu0 0.0
        %400 = vmatprep.subr.mxu0 0.0
        %401 = vmatpush1.msra.mxu0 0.0
        %402 = vmatprep.subr.mxu0 0.0
        %403 = vmatpush1.msra.mxu0 0.0
        %404 = vmatprep.subr.mxu0 0.0
        %405 = vmatpush1.msra.mxu0 0.0
        %406 = vmatprep.subr.mxu0 0.0
        %407 = vmatpush1.msra.mxu0 0.0
        %408 = vmatprep.subr.mxu0 0.0
        %409 = vmatpush1.msra.mxu0 0.0
        %410 = vmatprep.subr.mxu0 0.0
        %411 = vmatpush1.msra.mxu0 0.0
        %412 = vmatprep.subr.mxu0 0.0
        %413 = vmatpush1.msra.mxu0 0.0
        %414 = vmatprep.subr.mxu0 0.0
        %415 = vmatpush1.msra.mxu0 0.0
        %416 = vmatprep.subr.mxu0 0.0
        %417 = vmatpush1.msra.mxu0 0.0
        %418 = vmatprep.subr.mxu0 0.0
        %419 = vmatpush1.msra.mxu0 0.0
        %420 = vmatprep.subr.mxu0 0.0
        %421 = vmatpush1.msra.mxu0 0.0
        %422 = vmatprep.subr.mxu0 0.0
        %423 = vmatpush1.msra.mxu0 0.0
        %424 = vmatprep.mubr.f32.mxu0 0.0
        %425 = vmatmul.mubr.f32.gmra.mrb[0].mxu0 %v358
        %v426 = vpop.f32.mrb[0].mxu0
        %v427 = vadd.f32 %v354, %v426
        %v428 = vpop.f32.mrb[0].mxu0
        %429 = vdwg.mxu0
        %v430 = vmul.f32 %v427, 0.35355338
        %v431 = vld [vmem:[#allocation5] sm:$0xff]
        %v432 = vld [vmem:[#allocation5 + $0x8] sm:$0xff]
        %v433 = vld [vmem:[#allocation5 + $0x10] sm:$0xff]
        %v434 = vld [vmem:[#allocation5 + $0x18] sm:$0xff]
        %v435 = vld [vmem:[%s7] sm:$0x1]
        %437 = vrot.lane.b32.xlu0 %v427, 96
        %v438 = vpop.permute.xlu0 %437
        %vm439 = vcmask 64512
        %v441 = vsel %vm439, %v430, 0
        %v443 = vsel %vm439, %v438, 0
        %445 = vmatprep.subr.mxu0 0.0
        %446 = vmatpush1.xpose.msra.mxu0 %v443
        %447 = vmatprep.subr.mxu0 0.0
        %448 = vmatpush1.xpose.msra.mxu0 0.0
        %449 = vmatprep.subr.mxu0 0.0
        %450 = vmatpush1.xpose.msra.mxu0 0.0
        %451 = vmatprep.subr.mxu0 0.0
        %452 = vmatpush1.xpose.msra.mxu0 0.0
        %453 = vmatprep.subr.mxu0 0.0
        %454 = vmatpush1.xpose.msra.mxu0 0.0
        %455 = vmatprep.subr.mxu0 0.0
        %456 = vmatpush1.xpose.msra.mxu0 0.0
        %457 = vmatprep.subr.mxu0 0.0
        %458 = vmatpush1.xpose.msra.mxu0 0.0
        %459 = vmatprep.subr.mxu0 0.0
        %460 = vmatpush1.xpose.msra.mxu0 0.0
        %461 = vmatprep.subr.mxu0 0.0
        %462 = vmatpush1.xpose.msra.mxu0 0.0
        %463 = vmatprep.subr.mxu0 0.0
        %464 = vmatpush1.xpose.msra.mxu0 0.0
        %465 = vmatprep.subr.mxu0 0.0
        %466 = vmatpush1.xpose.msra.mxu0 0.0
        %467 = vmatprep.subr.mxu0 0.0
        %468 = vmatpush1.xpose.msra.mxu0 0.0
        %469 = vmatprep.subr.mxu0 0.0
        %470 = vmatpush1.xpose.msra.mxu0 0.0
        %471 = vmatprep.subr.mxu0 0.0
        %472 = vmatpush1.xpose.msra.mxu0 0.0
        %473 = vmatprep.subr.mxu0 0.0
        %474 = vmatpush1.xpose.msra.mxu0 0.0
        %475 = vmatprep.subr.mxu0 0.0
        %476 = vmatpush1.xpose.msra.mxu0 0.0
        %477 = vmatprep.subr.mxu0 0.0
        %478 = vmatpush1.xpose.msra.mxu0 0.0
        %479 = vmatprep.subr.mxu0 0.0
        %480 = vmatpush1.xpose.msra.mxu0 0.0
        %481 = vmatprep.subr.mxu0 0.0
        %482 = vmatpush1.xpose.msra.mxu0 0.0
        %483 = vmatprep.subr.mxu0 0.0
        %484 = vmatpush1.xpose.msra.mxu0 0.0
        %485 = vmatprep.subr.mxu0 0.0
        %486 = vmatpush1.xpose.msra.mxu0 0.0
        %487 = vmatprep.subr.mxu0 0.0
        %488 = vmatpush1.xpose.msra.mxu0 0.0
        %489 = vmatprep.subr.mxu0 0.0
        %490 = vmatpush1.xpose.msra.mxu0 0.0
        %491 = vmatprep.subr.mxu0 0.0
        %492 = vmatpush1.xpose.msra.mxu0 0.0
        %493 = vmatprep.subr.mxu0 0.0
        %494 = vmatpush1.xpose.msra.mxu0 0.0
        %495 = vmatprep.subr.mxu0 0.0
        %496 = vmatpush1.xpose.msra.mxu0 0.0
        %497 = vmatprep.subr.mxu0 0.0
        %498 = vmatpush1.xpose.msra.mxu0 0.0
        %499 = vmatprep.subr.mxu0 0.0
        %500 = vmatpush1.xpose.msra.mxu0 0.0
        %501 = vmatprep.subr.mxu0 0.0
        %502 = vmatpush1.xpose.msra.mxu0 0.0
        %503 = vmatprep.subr.mxu0 0.0
        %504 = vmatpush1.xpose.msra.mxu0 0.0
        %505 = vmatprep.subr.mxu0 0.0
        %506 = vmatpush1.xpose.msra.mxu0 0.0
        %507 = vmatprep.subr.mxu0 0.0
        %508 = vmatpush1.xpose.msra.mxu0 0.0
        %509 = vmatprep.mubr.f32.mxu0 0.0
        %510 = vmatmul.mubr.f32.gmra.mrb[0].mxu0 %v441
        %v511 = vpop.f32.mrb[0].mxu0
        %v512 = vadd.f32 %v344, %v511
        %v513 = vpop.f32.mrb[0].mxu0
        %514 = vdwg.mxu0
        %v515 = vsel %vm439, %v512, -inf
        %516 = vmax.xlane.f32.xlu0 %v515
        %v517 = vpop.xlane.xlu0 %516
        %v518 = vsub.f32 %v512, %v517
        %v519 = vmul.f32 %v518, 1.442695
        %v520 = vpow.pop %v519
        %v521 = vsel %vm439, %v520, 0.0
        %522 = vadd.xlane.f32.xlu0 %v521
        %v523 = vpop.xlane.xlu0 %522
        %v524 = vrcp.pop %v523
        %v525 = vmul.f32 %v520, %v524
        %526 = vrot.lane.b32.xlu0 %v427, 64
        %v527 = vpop.permute.xlu0 %526
        %v530 = vsel %vm439, %v525, 0
        %532 = vmatprep.subr.mxu0 0.0
        %533 = vmatpush1.msra.mxu0 %v527
        %534 = vmatprep.subr.mxu0 0.0
        %535 = vmatpush1.msra.mxu0 0.0
        %536 = vmatprep.subr.mxu0 0.0
        %537 = vmatpush1.msra.mxu0 0.0
        %538 = vmatprep.subr.mxu0 0.0
        %539 = vmatpush1.msra.mxu0 0.0
        %540 = vmatprep.subr.mxu0 0.0
        %541 = vmatpush1.msra.mxu0 0.0
        %542 = vmatprep.subr.mxu0 0.0
        %543 = vmatpush1.msra.mxu0 0.0
        %544 = vmatprep.subr.mxu0 0.0
        %545 = vmatpush1.msra.mxu0 0.0
        %546 = vmatprep.subr.mxu0 0.0
        %547 = vmatpush1.msra.mxu0 0.0
        %548 = vmatprep.subr.mxu0 0.0
        %549 = vmatpush1.msra.mxu0 0.0
        %550 = vmatprep.subr.mxu0 0.0
        %551 = vmatpush1.msra.mxu0 0.0
        %552 = vmatprep.subr.mxu0 0.0
        %553 = vmatpush1.msra.mxu0 0.0
        %554 = vmatprep.subr.mxu0 0.0
        %555 = vmatpush1.msra.mxu0 0.0
        %556 = vmatprep.subr.mxu0 0.0
        %557 = vmatpush1.msra.mxu0 0.0
        %558 = vmatprep.subr.mxu0 0.0
        %559 = vmatpush1.msra.mxu0 0.0
        %560 = vmatprep.subr.mxu0 0.0
        %561 = vmatpush1.msra.mxu0 0.0
        %562 = vmatprep.subr.mxu0 0.0
        %563 = vmatpush1.msra.mxu0 0.0
        %564 = vmatprep.subr.mxu0 0.0
        %565 = vmatpush1.msra.mxu0 0.0
        %566 = vmatprep.subr.mxu0 0.0
        %567 = vmatpush1.msra.mxu0 0.0
        %568 = vmatprep.subr.mxu0 0.0
        %569 = vmatpush1.msra.mxu0 0.0
        %570 = vmatprep.subr.mxu0 0.0
        %571 = vmatpush1.msra.mxu0 0.0
        %572 = vmatprep.subr.mxu0 0.0
        %573 = vmatpush1.msra.mxu0 0.0
        %574 = vmatprep.subr.mxu0 0.0
        %575 = vmatpush1.msra.mxu0 0.0
        %576 = vmatprep.subr.mxu0 0.0
        %577 = vmatpush1.msra.mxu0 0.0
        %578 = vmatprep.subr.mxu0 0.0
        %579 = vmatpush1.msra.mxu0 0.0
        %580 = vmatprep.subr.mxu0 0.0
        %581 = vmatpush1.msra.mxu0 0.0
        %582 = vmatprep.subr.mxu0 0.0
        %583 = vmatpush1.msra.mxu0 0.0
        %584 = vmatprep.subr.mxu0 0.0
        %585 = vmatpush1.msra.mxu0 0.0
        %586 = vmatprep.subr.mxu0 0.0
        %587 = vmatpush1.msra.mxu0 0.0
        %588 = vmatprep.subr.mxu0 0.0
        %589 = vmatpush1.msra.mxu0 0.0
        %590 = vmatprep.subr.mxu0 0.0
        %591 = vmatpush1.msra.mxu0 0.0
        %592 = vmatprep.subr.mxu0 0.0
        %593 = vmatpush1.msra.mxu0 0.0
        %594 = vmatprep.subr.mxu0 0.0
        %595 = vmatpush1.msra.mxu0 0.0
        %596 = vmatprep.mubr.f32.mxu0 0.0
        %597 = vmatmul.mubr.f32.gmra.mrb[0].mxu0 %v530
        %v598 = vpop.f32.mrb[0].mxu0
        %v599 = vadd.f32 0.0, %v598
        %v600 = vpop.f32.mrb[0].mxu0
        %601 = vdwg.mxu0
        %602 = vrot.lane.b32.xlu0 %v430, 120
        %v603 = vpop.permute.xlu0 %602
        %604 = vrot.lane.b32.xlu0 %v427, 88
        %v605 = vpop.permute.xlu0 %604
        %v606 = vsel %vm439, %v603, 0
        %v608 = vsel %vm439, %v605, 0
        %610 = vmatprep.subr.mxu0 0.0
        %611 = vmatpush1.xpose.msra.mxu0 %v608
        %612 = vmatprep.subr.mxu0 0.0
        %613 = vmatpush1.xpose.msra.mxu0 0.0
        %614 = vmatprep.subr.mxu0 0.0
        %615 = vmatpush1.xpose.msra.mxu0 0.0
        %616 = vmatprep.subr.mxu0 0.0
        %617 = vmatpush1.xpose.msra.mxu0 0.0
        %618 = vmatprep.subr.mxu0 0.0
        %619 = vmatpush1.xpose.msra.mxu0 0.0
        %620 = vmatprep.subr.mxu0 0.0
        %621 = vmatpush1.xpose.msra.mxu0 0.0
        %622 = vmatprep.subr.mxu0 0.0
        %623 = vmatpush1.xpose.msra.mxu0 0.0
        %624 = vmatprep.subr.mxu0 0.0
        %625 = vmatpush1.xpose.msra.mxu0 0.0
        %626 = vmatprep.subr.mxu0 0.0
        %627 = vmatpush1.xpose.msra.mxu0 0.0
        %628 = vmatprep.subr.mxu0 0.0
        %629 = vmatpush1.xpose.msra.mxu0 0.0
        %630 = vmatprep.subr.mxu0 0.0
        %631 = vmatpush1.xpose.msra.mxu0 0.0
        %632 = vmatprep.subr.mxu0 0.0
        %633 = vmatpush1.xpose.msra.mxu0 0.0
        %634 = vmatprep.subr.mxu0 0.0
        %635 = vmatpush1.xpose.msra.mxu0 0.0
        %636 = vmatprep.subr.mxu0 0.0
        %637 = vmatpush1.xpose.msra.mxu0 0.0
        %638 = vmatprep.subr.mxu0 0.0
        %639 = vmatpush1.xpose.msra.mxu0 0.0
        %640 = vmatprep.subr.mxu0 0.0
        %641 = vmatpush1.xpose.msra.mxu0 0.0
        %642 = vmatprep.subr.mxu0 0.0
        %643 = vmatpush1.xpose.msra.mxu0 0.0
        %644 = vmatprep.subr.mxu0 0.0
        %645 = vmatpush1.xpose.msra.mxu0 0.0
        %646 = vmatprep.subr.mxu0 0.0
        %647 = vmatpush1.xpose.msra.mxu0 0.0
        %648 = vmatprep.subr.mxu0 0.0
        %649 = vmatpush1.xpose.msra.mxu0 0.0
        %650 = vmatprep.subr.mxu0 0.0
        %651 = vmatpush1.xpose.msra.mxu0 0.0
        %652 = vmatprep.subr.mxu0 0.0
        %653 = vmatpush1.xpose.msra.mxu0 0.0
        %654 = vmatprep.subr.mxu0 0.0
        %655 = vmatpush1.xpose.msra.mxu0 0.0
        %656 = vmatprep.subr.mxu0 0.0
        %657 = vmatpush1.xpose.msra.mxu0 0.0
        %658 = vmatprep.subr.mxu0 0.0
        %659 = vmatpush1.xpose.msra.mxu0 0.0
        %660 = vmatprep.subr.mxu0 0.0
        %661 = vmatpush1.xpose.msra.mxu0 0.0
        %662 = vmatprep.subr.mxu0 0.0
        %663 = vmatpush1.xpose.msra.mxu0 0.0
        %664 = vmatprep.subr.mxu0 0.0
        %665 = vmatpush1.xpose.msra.mxu0 0.0
        %666 = vmatprep.subr.mxu0 0.0
        %667 = vmatpush1.xpose.msra.mxu0 0.0
        %668 = vmatprep.subr.mxu0 0.0
        %669 = vmatpush1.xpose.msra.mxu0 0.0
        %670 = vmatprep.subr.mxu0 0.0
        %671 = vmatpush1.xpose.msra.mxu0 0.0
        %672 = vmatprep.subr.mxu0 0.0
        %673 = vmatpush1.xpose.msra.mxu0 0.0
        %674 = vmatprep.mubr.f32.mxu0 0.0
        %675 = vmatmul.mubr.f32.gmra.mrb[0].mxu0 %v606
        %v676 = vpop.f32.mrb[0].mxu0
        %v677 = vadd.f32 %v344, %v676
        %v678 = vpop.f32.mrb[0].mxu0
        %679 = vdwg.mxu0
        %v680 = vsel %vm439, %v677, -inf
        %681 = vmax.xlane.f32.xlu0 %v680
        %v682 = vpop.xlane.xlu0 %681
        %v683 = vsub.f32 %v677, %v682
        %v684 = vmul.f32 %v683, 1.442695
        %v685 = vpow.pop %v684
        %v686 = vsel %vm439, %v685, 0.0
        %687 = vadd.xlane.f32.xlu0 %v686
        %v688 = vpop.xlane.xlu0 %687
        %v689 = vrcp.pop %v688
        %v690 = vmul.f32 %v685, %v689
        %691 = vrot.lane.b32.xlu0 %v427, 56
        %v692 = vpop.permute.xlu0 %691
        %v695 = vsel %vm439, %v690, 0
        %697 = vmatprep.subr.mxu0 0.0
        %698 = vmatpush1.msra.mxu0 %v692
        %699 = vmatprep.subr.mxu0 0.0
        %700 = vmatpush1.msra.mxu0 0.0
        %701 = vmatprep.subr.mxu0 0.0
        %702 = vmatpush1.msra.mxu0 0.0
        %703 = vmatprep.subr.mxu0 0.0
        %704 = vmatpush1.msra.mxu0 0.0
        %705 = vmatprep.subr.mxu0 0.0
        %706 = vmatpush1.msra.mxu0 0.0
        %707 = vmatprep.subr.mxu0 0.0
        %708 = vmatpush1.msra.mxu0 0.0
        %709 = vmatprep.subr.mxu0 0.0
        %710 = vmatpush1.msra.mxu0 0.0
        %711 = vmatprep.subr.mxu0 0.0
        %712 = vmatpush1.msra.mxu0 0.0
        %713 = vmatprep.subr.mxu0 0.0
        %714 = vmatpush1.msra.mxu0 0.0
        %715 = vmatprep.subr.mxu0 0.0
        %716 = vmatpush1.msra.mxu0 0.0
        %717 = vmatprep.subr.mxu0 0.0
        %718 = vmatpush1.msra.mxu0 0.0
        %719 = vmatprep.subr.mxu0 0.0
        %720 = vmatpush1.msra.mxu0 0.0
        %721 = vmatprep.subr.mxu0 0.0
        %722 = vmatpush1.msra.mxu0 0.0
        %723 = vmatprep.subr.mxu0 0.0
        %724 = vmatpush1.msra.mxu0 0.0
        %725 = vmatprep.subr.mxu0 0.0
        %726 = vmatpush1.msra.mxu0 0.0
        %727 = vmatprep.subr.mxu0 0.0
        %728 = vmatpush1.msra.mxu0 0.0
        %729 = vmatprep.subr.mxu0 0.0
        %730 = vmatpush1.msra.mxu0 0.0
        %731 = vmatprep.subr.mxu0 0.0
        %732 = vmatpush1.msra.mxu0 0.0
        %733 = vmatprep.subr.mxu0 0.0
        %734 = vmatpush1.msra.mxu0 0.0
        %735 = vmatprep.subr.mxu0 0.0
        %736 = vmatpush1.msra.mxu0 0.0
        %737 = vmatprep.subr.mxu0 0.0
        %738 = vmatpush1.msra.mxu0 0.0
        %739 = vmatprep.subr.mxu0 0.0
        %740 = vmatpush1.msra.mxu0 0.0
        %741 = vmatprep.subr.mxu0 0.0
        %742 = vmatpush1.msra.mxu0 0.0
        %743 = vmatprep.subr.mxu0 0.0
        %744 = vmatpush1.msra.mxu0 0.0
        %745 = vmatprep.subr.mxu0 0.0
        %746 = vmatpush1.msra.mxu0 0.0
        %747 = vmatprep.subr.mxu0 0.0
        %748 = vmatpush1.msra.mxu0 0.0
        %749 = vmatprep.subr.mxu0 0.0
        %750 = vmatpush1.msra.mxu0 0.0
        %751 = vmatprep.subr.mxu0 0.0
        %752 = vmatpush1.msra.mxu0 0.0
        %753 = vmatprep.subr.mxu0 0.0
        %754 = vmatpush1.msra.mxu0 0.0
        %755 = vmatprep.subr.mxu0 0.0
        %756 = vmatpush1.msra.mxu0 0.0
        %757 = vmatprep.subr.mxu0 0.0
        %758 = vmatpush1.msra.mxu0 0.0
        %759 = vmatprep.subr.mxu0 0.0
        %760 = vmatpush1.msra.mxu0 0.0
        %761 = vmatprep.mubr.f32.mxu0 0.0
        %762 = vmatmul.mubr.f32.gmra.mrb[0].mxu0 %v695
        %v763 = vpop.f32.mrb[0].mxu0
        %v764 = vadd.f32 0.0, %v763
        %v765 = vpop.f32.mrb[0].mxu0
        %766 = vdwg.mxu0
        %v768 = vsel %vm439, %v764, 0
        %770 = vmatprep.subr.mxu0 0.0
        %771 = vmatpush1.msra.mxu0 %v432
        %772 = vmatprep.subr.mxu0 0.0
        %773 = vmatpush1.msra.mxu0 0.0
        %774 = vmatprep.subr.mxu0 0.0
        %775 = vmatpush1.msra.mxu0 0.0
        %776 = vmatprep.subr.mxu0 0.0
        %777 = vmatpush1.msra.mxu0 0.0
        %778 = vmatprep.subr.mxu0 0.0
        %779 = vmatpush1.msra.mxu0 0.0
        %780 = vmatprep.subr.mxu0 0.0
        %781 = vmatpush1.msra.mxu0 0.0
        %782 = vmatprep.subr.mxu0 0.0
        %783 = vmatpush1.msra.mxu0 0.0
        %784 = vmatprep.subr.mxu0 0.0
        %785 = vmatpush1.msra.mxu0 0.0
        %786 = vmatprep.subr.mxu0 0.0
        %787 = vmatpush1.msra.mxu0 0.0
        %788 = vmatprep.subr.mxu0 0.0
        %789 = vmatpush1.msra.mxu0 0.0
        %790 = vmatprep.subr.mxu0 0.0
        %791 = vmatpush1.msra.mxu0 0.0
        %792 = vmatprep.subr.mxu0 0.0
        %793 = vmatpush1.msra.mxu0 0.0
        %794 = vmatprep.subr.mxu0 0.0
        %795 = vmatpush1.msra.mxu0 0.0
        %796 = vmatprep.subr.mxu0 0.0
        %797 = vmatpush1.msra.mxu0 0.0
        %798 = vmatprep.subr.mxu0 0.0
        %799 = vmatpush1.msra.mxu0 0.0
        %800 = vmatprep.subr.mxu0 0.0
        %801 = vmatpush1.msra.mxu0 0.0
        %802 = vmatprep.subr.mxu0 0.0
        %803 = vmatpush1.msra.mxu0 0.0
        %804 = vmatprep.subr.mxu0 0.0
        %805 = vmatpush1.msra.mxu0 0.0
        %806 = vmatprep.subr.mxu0 0.0
        %807 = vmatpush1.msra.mxu0 0.0
        %808 = vmatprep.subr.mxu0 0.0
        %809 = vmatpush1.msra.mxu0 0.0
        %810 = vmatprep.subr.mxu0 0.0
        %811 = vmatpush1.msra.mxu0 0.0
        %812 = vmatprep.subr.mxu0 0.0
        %813 = vmatpush1.msra.mxu0 0.0
        %814 = vmatprep.subr.mxu0 0.0
        %815 = vmatpush1.msra.mxu0 0.0
        %816 = vmatprep.subr.mxu0 0.0
        %817 = vmatpush1.msra.mxu0 0.0
        %818 = vmatprep.subr.mxu0 0.0
        %819 = vmatpush1.msra.mxu0 0.0
        %820 = vmatprep.subr.mxu0 0.0
        %821 = vmatpush1.msra.mxu0 0.0
        %822 = vmatprep.subr.mxu0 0.0
        %823 = vmatpush1.msra.mxu0 0.0
        %824 = vmatprep.subr.mxu0 0.0
        %825 = vmatpush1.msra.mxu0 0.0
        %826 = vmatprep.subr.mxu0 0.0
        %827 = vmatpush1.msra.mxu0 0.0
        %828 = vmatprep.subr.mxu0 0.0
        %829 = vmatpush1.msra.mxu0 0.0
        %830 = vmatprep.subr.mxu0 0.0
        %831 = vmatpush1.msra.mxu0 0.0
        %832 = vmatprep.subr.mxu0 0.0
        %833 = vmatpush1.msra.mxu0 0.0
        %834 = vmatprep.mubr.f32.mxu0 0.0
        %835 = vmatmul.mubr.f32.gmra.mrb[0].mxu0 %v768
        %v836 = vpop.f32.mrb[0].mxu0
        %v837 = vadd.f32 0.0, %v836
        %v838 = vpop.f32.mrb[0].mxu0
        %839 = vdwg.mxu0
        %v841 = vsel %vm439, %v599, 0
        %843 = vmatprep.subr.mxu0 0.0
        %844 = vmatpush1.msra.mxu0 %v431
        %845 = vmatprep.subr.mxu0 0.0
        %846 = vmatpush1.msra.mxu0 0.0
        %847 = vmatprep.subr.mxu0 0.0
        %848 = vmatpush1.msra.mxu0 0.0
        %849 = vmatprep.subr.mxu0 0.0
        %850 = vmatpush1.msra.mxu0 0.0
        %851 = vmatprep.subr.mxu0 0.0
        %852 = vmatpush1.msra.mxu0 0.0
        %853 = vmatprep.subr.mxu0 0.0
        %854 = vmatpush1.msra.mxu0 0.0
        %855 = vmatprep.subr.mxu0 0.0
        %856 = vmatpush1.msra.mxu0 0.0
        %857 = vmatprep.subr.mxu0 0.0
        %858 = vmatpush1.msra.mxu0 0.0
        %859 = vmatprep.subr.mxu0 0.0
        %860 = vmatpush1.msra.mxu0 0.0
        %861 = vmatprep.subr.mxu0 0.0
        %862 = vmatpush1.msra.mxu0 0.0
        %863 = vmatprep.subr.mxu0 0.0
        %864 = vmatpush1.msra.mxu0 0.0
        %865 = vmatprep.subr.mxu0 0.0
        %866 = vmatpush1.msra.mxu0 0.0
        %867 = vmatprep.subr.mxu0 0.0
        %868 = vmatpush1.msra.mxu0 0.0
        %869 = vmatprep.subr.mxu0 0.0
        %870 = vmatpush1.msra.mxu0 0.0
        %871 = vmatprep.subr.mxu0 0.0
        %872 = vmatpush1.msra.mxu0 0.0
        %873 = vmatprep.subr.mxu0 0.0
        %874 = vmatpush1.msra.mxu0 0.0
        %875 = vmatprep.subr.mxu0 0.0
        %876 = vmatpush1.msra.mxu0 0.0
        %877 = vmatprep.subr.mxu0 0.0
        %878 = vmatpush1.msra.mxu0 0.0
        %879 = vmatprep.subr.mxu0 0.0
        %880 = vmatpush1.msra.mxu0 0.0
        %881 = vmatprep.subr.mxu0 0.0
        %882 = vmatpush1.msra.mxu0 0.0
        %883 = vmatprep.subr.mxu0 0.0
        %884 = vmatpush1.msra.mxu0 0.0
        %885 = vmatprep.subr.mxu0 0.0
        %886 = vmatpush1.msra.mxu0 0.0
        %887 = vmatprep.subr.mxu0 0.0
        %888 = vmatpush1.msra.mxu0 0.0
        %889 = vmatprep.subr.mxu0 0.0
        %890 = vmatpush1.msra.mxu0 0.0
        %891 = vmatprep.subr.mxu0 0.0
        %892 = vmatpush1.msra.mxu0 0.0
        %893 = vmatprep.subr.mxu0 0.0
        %894 = vmatpush1.msra.mxu0 0.0
        %895 = vmatprep.subr.mxu0 0.0
        %896 = vmatpush1.msra.mxu0 0.0
        %897 = vmatprep.subr.mxu0 0.0
        %898 = vmatpush1.msra.mxu0 0.0
        %899 = vmatprep.subr.mxu0 0.0
        %900 = vmatpush1.msra.mxu0 0.0
        %901 = vmatprep.subr.mxu0 0.0
        %902 = vmatpush1.msra.mxu0 0.0
        %903 = vmatprep.subr.mxu0 0.0
        %904 = vmatpush1.msra.mxu0 0.0
        %905 = vmatprep.subr.mxu0 0.0
        %906 = vmatpush1.msra.mxu0 0.0
        %907 = vmatprep.mubr.f32.mxu0 0.0
        %908 = vmatmul.mubr.f32.gmra.mrb[0].mxu0 %v841
        %v909 = vpop.f32.mrb[0].mxu0
        %v910 = vadd.f32 %v837, %v909
        %v911 = vpop.f32.mrb[0].mxu0
        %912 = vdwg.mxu0
        %913 = vrot.lane.b32.xlu0 %v430, 112
        %v914 = vpop.permute.xlu0 %913
        %915 = vrot.lane.b32.xlu0 %v427, 80
        %v916 = vpop.permute.xlu0 %915
        %v917 = vsel %vm439, %v914, 0
        %v919 = vsel %vm439, %v916, 0
        %921 = vmatprep.subr.mxu0 0.0
        %922 = vmatpush1.xpose.msra.mxu0 %v919
        %923 = vmatprep.subr.mxu0 0.0
        %924 = vmatpush1.xpose.msra.mxu0 0.0
        %925 = vmatprep.subr.mxu0 0.0
        %926 = vmatpush1.xpose.msra.mxu0 0.0
        %927 = vmatprep.subr.mxu0 0.0
        %928 = vmatpush1.xpose.msra.mxu0 0.0
        %929 = vmatprep.subr.mxu0 0.0
        %930 = vmatpush1.xpose.msra.mxu0 0.0
        %931 = vmatprep.subr.mxu0 0.0
        %932 = vmatpush1.xpose.msra.mxu0 0.0
        %933 = vmatprep.subr.mxu0 0.0
        %934 = vmatpush1.xpose.msra.mxu0 0.0
        %935 = vmatprep.subr.mxu0 0.0
        %936 = vmatpush1.xpose.msra.mxu0 0.0
        %937 = vmatprep.subr.mxu0 0.0
        %938 = vmatpush1.xpose.msra.mxu0 0.0
        %939 = vmatprep.subr.mxu0 0.0
        %940 = vmatpush1.xpose.msra.mxu0 0.0
        %941 = vmatprep.subr.mxu0 0.0
        %942 = vmatpush1.xpose.msra.mxu0 0.0
        %943 = vmatprep.subr.mxu0 0.0
        %944 = vmatpush1.xpose.msra.mxu0 0.0
        %945 = vmatprep.subr.mxu0 0.0
        %946 = vmatpush1.xpose.msra.mxu0 0.0
        %947 = vmatprep.subr.mxu0 0.0
        %948 = vmatpush1.xpose.msra.mxu0 0.0
        %949 = vmatprep.subr.mxu0 0.0
        %950 = vmatpush1.xpose.msra.mxu0 0.0
        %951 = vmatprep.subr.mxu0 0.0
        %952 = vmatpush1.xpose.msra.mxu0 0.0
        %953 = vmatprep.subr.mxu0 0.0
        %954 = vmatpush1.xpose.msra.mxu0 0.0
        %955 = vmatprep.subr.mxu0 0.0
        %956 = vmatpush1.xpose.msra.mxu0 0.0
        %957 = vmatprep.subr.mxu0 0.0
        %958 = vmatpush1.xpose.msra.mxu0 0.0
        %959 = vmatprep.subr.mxu0 0.0
        %960 = vmatpush1.xpose.msra.mxu0 0.0
        %961 = vmatprep.subr.mxu0 0.0
        %962 = vmatpush1.xpose.msra.mxu0 0.0
        %963 = vmatprep.subr.mxu0 0.0
        %964 = vmatpush1.xpose.msra.mxu0 0.0
        %965 = vmatprep.subr.mxu0 0.0
        %966 = vmatpush1.xpose.msra.mxu0 0.0
        %967 = vmatprep.subr.mxu0 0.0
        %968 = vmatpush1.xpose.msra.mxu0 0.0
        %969 = vmatprep.subr.mxu0 0.0
        %970 = vmatpush1.xpose.msra.mxu0 0.0
        %971 = vmatprep.subr.mxu0 0.0
        %972 = vmatpush1.xpose.msra.mxu0 0.0
        %973 = vmatprep.subr.mxu0 0.0
        %974 = vmatpush1.xpose.msra.mxu0 0.0
        %975 = vmatprep.subr.mxu0 0.0
        %976 = vmatpush1.xpose.msra.mxu0 0.0
        %977 = vmatprep.subr.mxu0 0.0
        %978 = vmatpush1.xpose.msra.mxu0 0.0
        %979 = vmatprep.subr.mxu0 0.0
        %980 = vmatpush1.xpose.msra.mxu0 0.0
        %981 = vmatprep.subr.mxu0 0.0
        %982 = vmatpush1.xpose.msra.mxu0 0.0
        %983 = vmatprep.subr.mxu0 0.0
        %984 = vmatpush1.xpose.msra.mxu0 0.0
        %985 = vmatprep.mubr.f32.mxu0 0.0
        %986 = vmatmul.mubr.f32.gmra.mrb[0].mxu0 %v917
        %v987 = vpop.f32.mrb[0].mxu0
        %v988 = vadd.f32 %v344, %v987
        %v989 = vpop.f32.mrb[0].mxu0
        %990 = vdwg.mxu0
        %v991 = vsel %vm439, %v988, -inf
        %992 = vmax.xlane.f32.xlu0 %v991
        %v993 = vpop.xlane.xlu0 %992
        %v994 = vsub.f32 %v988, %v993
        %v995 = vmul.f32 %v994, 1.442695
        %v996 = vpow.pop %v995
        %v997 = vsel %vm439, %v996, 0.0
        %998 = vadd.xlane.f32.xlu0 %v997
        %v999 = vpop.xlane.xlu0 %998
        %v1000 = vrcp.pop %v999
        %v1001 = vmul.f32 %v996, %v1000
        %1002 = vrot.lane.b32.xlu0 %v427, 48
        %v1003 = vpop.permute.xlu0 %1002
        %v1006 = vsel %vm439, %v1001, 0
        %1008 = vmatprep.subr.mxu0 0.0
        %1009 = vmatpush1.msra.mxu0 %v1003
        %1010 = vmatprep.subr.mxu0 0.0
        %1011 = vmatpush1.msra.mxu0 0.0
        %1012 = vmatprep.subr.mxu0 0.0
        %1013 = vmatpush1.msra.mxu0 0.0
        %1014 = vmatprep.subr.mxu0 0.0
        %1015 = vmatpush1.msra.mxu0 0.0
        %1016 = vmatprep.subr.mxu0 0.0
        %1017 = vmatpush1.msra.mxu0 0.0
        %1018 = vmatprep.subr.mxu0 0.0
        %1019 = vmatpush1.msra.mxu0 0.0
        %1020 = vmatprep.subr.mxu0 0.0
        %1021 = vmatpush1.msra.mxu0 0.0
        %1022 = vmatprep.subr.mxu0 0.0
        %1023 = vmatpush1.msra.mxu0 0.0
        %1024 = vmatprep.subr.mxu0 0.0
        %1025 = vmatpush1.msra.mxu0 0.0
        %1026 = vmatprep.subr.mxu0 0.0
        %1027 = vmatpush1.msra.mxu0 0.0
        %1028 = vmatprep.subr.mxu0 0.0
        %1029 = vmatpush1.msra.mxu0 0.0
        %1030 = vmatprep.subr.mxu0 0.0
        %1031 = vmatpush1.msra.mxu0 0.0
        %1032 = vmatprep.subr.mxu0 0.0
        %1033 = vmatpush1.msra.mxu0 0.0
        %1034 = vmatprep.subr.mxu0 0.0
        %1035 = vmatpush1.msra.mxu0 0.0
        %1036 = vmatprep.subr.mxu0 0.0
        %1037 = vmatpush1.msra.mxu0 0.0
        %1038 = vmatprep.subr.mxu0 0.0
        %1039 = vmatpush1.msra.mxu0 0.0
        %1040 = vmatprep.subr.mxu0 0.0
        %1041 = vmatpush1.msra.mxu0 0.0
        %1042 = vmatprep.subr.mxu0 0.0
        %1043 = vmatpush1.msra.mxu0 0.0
        %1044 = vmatprep.subr.mxu0 0.0
        %1045 = vmatpush1.msra.mxu0 0.0
        %1046 = vmatprep.subr.mxu0 0.0
        %1047 = vmatpush1.msra.mxu0 0.0
        %1048 = vmatprep.subr.mxu0 0.0
        %1049 = vmatpush1.msra.mxu0 0.0
        %1050 = vmatprep.subr.mxu0 0.0
        %1051 = vmatpush1.msra.mxu0 0.0
        %1052 = vmatprep.subr.mxu0 0.0
        %1053 = vmatpush1.msra.mxu0 0.0
        %1054 = vmatprep.subr.mxu0 0.0
        %1055 = vmatpush1.msra.mxu0 0.0
        %1056 = vmatprep.subr.mxu0 0.0
        %1057 = vmatpush1.msra.mxu0 0.0
        %1058 = vmatprep.subr.mxu0 0.0
        %1059 = vmatpush1.msra.mxu0 0.0
        %1060 = vmatprep.subr.mxu0 0.0
        %1061 = vmatpush1.msra.mxu0 0.0
        %1062 = vmatprep.subr.mxu0 0.0
        %1063 = vmatpush1.msra.mxu0 0.0
        %1064 = vmatprep.subr.mxu0 0.0
        %1065 = vmatpush1.msra.mxu0 0.0
        %1066 = vmatprep.subr.mxu0 0.0
        %1067 = vmatpush1.msra.mxu0 0.0
        %1068 = vmatprep.subr.mxu0 0.0
        %1069 = vmatpush1.msra.mxu0 0.0
        %1070 = vmatprep.subr.mxu0 0.0
        %1071 = vmatpush1.msra.mxu0 0.0
        %1072 = vmatprep.mubr.f32.mxu0 0.0
        %1073 = vmatmul.mubr.f32.gmra.mrb[0].mxu0 %v1006
        %v1074 = vpop.f32.mrb[0].mxu0
        %v1075 = vadd.f32 0.0, %v1074
        %v1076 = vpop.f32.mrb[0].mxu0
        %1077 = vdwg.mxu0
        %v1079 = vsel %vm439, %v1075, 0
        %1081 = vmatprep.subr.mxu0 0.0
        %1082 = vmatpush1.msra.mxu0 %v433
        %1083 = vmatprep.subr.mxu0 0.0
        %1084 = vmatpush1.msra.mxu0 0.0
        %1085 = vmatprep.subr.mxu0 0.0
        %1086 = vmatpush1.msra.mxu0 0.0
        %1087 = vmatprep.subr.mxu0 0.0
        %1088 = vmatpush1.msra.mxu0 0.0
        %1089 = vmatprep.subr.mxu0 0.0
        %1090 = vmatpush1.msra.mxu0 0.0
        %1091 = vmatprep.subr.mxu0 0.0
        %1092 = vmatpush1.msra.mxu0 0.0
        %1093 = vmatprep.subr.mxu0 0.0
        %1094 = vmatpush1.msra.mxu0 0.0
        %1095 = vmatprep.subr.mxu0 0.0
        %1096 = vmatpush1.msra.mxu0 0.0
        %1097 = vmatprep.subr.mxu0 0.0
        %1098 = vmatpush1.msra.mxu0 0.0
        %1099 = vmatprep.subr.mxu0 0.0
        %1100 = vmatpush1.msra.mxu0 0.0
        %1101 = vmatprep.subr.mxu0 0.0
        %1102 = vmatpush1.msra.mxu0 0.0
        %1103 = vmatprep.subr.mxu0 0.0
        %1104 = vmatpush1.msra.mxu0 0.0
        %1105 = vmatprep.subr.mxu0 0.0
        %1106 = vmatpush1.msra.mxu0 0.0
        %1107 = vmatprep.subr.mxu0 0.0
        %1108 = vmatpush1.msra.mxu0 0.0
        %1109 = vmatprep.subr.mxu0 0.0
        %1110 = vmatpush1.msra.mxu0 0.0
        %1111 = vmatprep.subr.mxu0 0.0
        %1112 = vmatpush1.msra.mxu0 0.0
        %1113 = vmatprep.subr.mxu0 0.0
        %1114 = vmatpush1.msra.mxu0 0.0
        %1115 = vmatprep.subr.mxu0 0.0
        %1116 = vmatpush1.msra.mxu0 0.0
        %1117 = vmatprep.subr.mxu0 0.0
        %1118 = vmatpush1.msra.mxu0 0.0
        %1119 = vmatprep.subr.mxu0 0.0
        %1120 = vmatpush1.msra.mxu0 0.0
        %1121 = vmatprep.subr.mxu0 0.0
        %1122 = vmatpush1.msra.mxu0 0.0
        %1123 = vmatprep.subr.mxu0 0.0
        %1124 = vmatpush1.msra.mxu0 0.0
        %1125 = vmatprep.subr.mxu0 0.0
        %1126 = vmatpush1.msra.mxu0 0.0
        %1127 = vmatprep.subr.mxu0 0.0
        %1128 = vmatpush1.msra.mxu0 0.0
        %1129 = vmatprep.subr.mxu0 0.0
        %1130 = vmatpush1.msra.mxu0 0.0
        %1131 = vmatprep.subr.mxu0 0.0
        %1132 = vmatpush1.msra.mxu0 0.0
        %1133 = vmatprep.subr.mxu0 0.0
        %1134 = vmatpush1.msra.mxu0 0.0
        %1135 = vmatprep.subr.mxu0 0.0
        %1136 = vmatpush1.msra.mxu0 0.0
        %1137 = vmatprep.subr.mxu0 0.0
        %1138 = vmatpush1.msra.mxu0 0.0
        %1139 = vmatprep.subr.mxu0 0.0
        %1140 = vmatpush1.msra.mxu0 0.0
        %1141 = vmatprep.subr.mxu0 0.0
        %1142 = vmatpush1.msra.mxu0 0.0
        %1143 = vmatprep.subr.mxu0 0.0
        %1144 = vmatpush1.msra.mxu0 0.0
        %1145 = vmatprep.mubr.f32.mxu0 0.0
        %1146 = vmatmul.mubr.f32.gmra.mrb[0].mxu0 %v1079
        %v1147 = vpop.f32.mrb[0].mxu0
        %v1148 = vadd.f32 0.0, %v1147
        %v1149 = vpop.f32.mrb[0].mxu0
        %1150 = vdwg.mxu0
        %v1151 = vadd.f32 %v910, %v1148
        %1152 = vrot.lane.b32.xlu0 %v430, 104
        %v1153 = vpop.permute.xlu0 %1152
        %1154 = vrot.lane.b32.xlu0 %v427, 72
        %v1155 = vpop.permute.xlu0 %1154
        %v1156 = vsel %vm439, %v1153, 0
        %v1158 = vsel %vm439, %v1155, 0
        %1160 = vmatprep.subr.mxu0 0.0
        %1161 = vmatpush1.xpose.msra.mxu0 %v1158
        %1162 = vmatprep.subr.mxu0 0.0
        %1163 = vmatpush1.xpose.msra.mxu0 0.0
        %1164 = vmatprep.subr.mxu0 0.0
        %1165 = vmatpush1.xpose.msra.mxu0 0.0
        %1166 = vmatprep.subr.mxu0 0.0
        %1167 = vmatpush1.xpose.msra.mxu0 0.0
        %1168 = vmatprep.subr.mxu0 0.0
        %1169 = vmatpush1.xpose.msra.mxu0 0.0
        %1170 = vmatprep.subr.mxu0 0.0
        %1171 = vmatpush1.xpose.msra.mxu0 0.0
        %1172 = vmatprep.subr.mxu0 0.0
        %1173 = vmatpush1.xpose.msra.mxu0 0.0
        %1174 = vmatprep.subr.mxu0 0.0
        %1175 = vmatpush1.xpose.msra.mxu0 0.0
        %1176 = vmatprep.subr.mxu0 0.0
        %1177 = vmatpush1.xpose.msra.mxu0 0.0
        %1178 = vmatprep.subr.mxu0 0.0
        %1179 = vmatpush1.xpose.msra.mxu0 0.0
        %1180 = vmatprep.subr.mxu0 0.0
        %1181 = vmatpush1.xpose.msra.mxu0 0.0
        %1182 = vmatprep.subr.mxu0 0.0
        %1183 = vmatpush1.xpose.msra.mxu0 0.0
        %1184 = vmatprep.subr.mxu0 0.0
        %1185 = vmatpush1.xpose.msra.mxu0 0.0
        %1186 = vmatprep.subr.mxu0 0.0
        %1187 = vmatpush1.xpose.msra.mxu0 0.0
        %1188 = vmatprep.subr.mxu0 0.0
        %1189 = vmatpush1.xpose.msra.mxu0 0.0
        %1190 = vmatprep.subr.mxu0 0.0
        %1191 = vmatpush1.xpose.msra.mxu0 0.0
        %1192 = vmatprep.subr.mxu0 0.0
        %1193 = vmatpush1.xpose.msra.mxu0 0.0
        %1194 = vmatprep.subr.mxu0 0.0
        %1195 = vmatpush1.xpose.msra.mxu0 0.0
        %1196 = vmatprep.subr.mxu0 0.0
        %1197 = vmatpush1.xpose.msra.mxu0 0.0
        %1198 = vmatprep.subr.mxu0 0.0
        %1199 = vmatpush1.xpose.msra.mxu0 0.0
        %1200 = vmatprep.subr.mxu0 0.0
        %1201 = vmatpush1.xpose.msra.mxu0 0.0
        %1202 = vmatprep.subr.mxu0 0.0
        %1203 = vmatpush1.xpose.msra.mxu0 0.0
        %1204 = vmatprep.subr.mxu0 0.0
        %1205 = vmatpush1.xpose.msra.mxu0 0.0
        %1206 = vmatprep.subr.mxu0 0.0
        %1207 = vmatpush1.xpose.msra.mxu0 0.0
        %1208 = vmatprep.subr.mxu0 0.0
        %1209 = vmatpush1.xpose.msra.mxu0 0.0
        %1210 = vmatprep.subr.mxu0 0.0
        %1211 = vmatpush1.xpose.msra.mxu0 0.0
        %1212 = vmatprep.subr.mxu0 0.0
        %1213 = vmatpush1.xpose.msra.mxu0 0.0
        %1214 = vmatprep.subr.mxu0 0.0
        %1215 = vmatpush1.xpose.msra.mxu0 0.0
        %1216 = vmatprep.subr.mxu0 0.0
        %1217 = vmatpush1.xpose.msra.mxu0 0.0
        %1218 = vmatprep.subr.mxu0 0.0
        %1219 = vmatpush1.xpose.msra.mxu0 0.0
        %1220 = vmatprep.subr.mxu0 0.0
        %1221 = vmatpush1.xpose.msra.mxu0 0.0
        %1222 = vmatprep.subr.mxu0 0.0
        %1223 = vmatpush1.xpose.msra.mxu0 0.0
        %1224 = vmatprep.mubr.f32.mxu0 0.0
        %1225 = vmatmul.mubr.f32.gmra.mrb[0].mxu0 %v1156
        %v1226 = vpop.f32.mrb[0].mxu0
        %v1227 = vadd.f32 %v344, %v1226
        %v1228 = vpop.f32.mrb[0].mxu0
        %1229 = vdwg.mxu0
        %v1230 = vsel %vm439, %v1227, -inf
        %1231 = vmax.xlane.f32.xlu0 %v1230
        %v1232 = vpop.xlane.xlu0 %1231
        %v1233 = vsub.f32 %v1227, %v1232
        %v1234 = vmul.f32 %v1233, 1.442695
        %v1235 = vpow.pop %v1234
        %v1236 = vsel %vm439, %v1235, 0.0
        %1237 = vadd.xlane.f32.xlu0 %v1236
        %v1238 = vpop.xlane.xlu0 %1237
        %v1239 = vrcp.pop %v1238
        %v1240 = vmul.f32 %v1235, %v1239
        %1241 = vrot.lane.b32.xlu0 %v427, 40
        %v1242 = vpop.permute.xlu0 %1241
        %v1245 = vsel %vm439, %v1240, 0
        %1247 = vmatprep.subr.mxu0 0.0
        %1248 = vmatpush1.msra.mxu0 %v1242
        %1249 = vmatprep.subr.mxu0 0.0
        %1250 = vmatpush1.msra.mxu0 0.0
        %1251 = vmatprep.subr.mxu0 0.0
        %1252 = vmatpush1.msra.mxu0 0.0
        %1253 = vmatprep.subr.mxu0 0.0
        %1254 = vmatpush1.msra.mxu0 0.0
        %1255 = vmatprep.subr.mxu0 0.0
        %1256 = vmatpush1.msra.mxu0 0.0
        %1257 = vmatprep.subr.mxu0 0.0
        %1258 = vmatpush1.msra.mxu0 0.0
        %1259 = vmatprep.subr.mxu0 0.0
        %1260 = vmatpush1.msra.mxu0 0.0
        %1261 = vmatprep.subr.mxu0 0.0
        %1262 = vmatpush1.msra.mxu0 0.0
        %1263 = vmatprep.subr.mxu0 0.0
        %1264 = vmatpush1.msra.mxu0 0.0
        %1265 = vmatprep.subr.mxu0 0.0
        %1266 = vmatpush1.msra.mxu0 0.0
        %1267 = vmatprep.subr.mxu0 0.0
        %1268 = vmatpush1.msra.mxu0 0.0
        %1269 = vmatprep.subr.mxu0 0.0
        %1270 = vmatpush1.msra.mxu0 0.0
        %1271 = vmatprep.subr.mxu0 0.0
        %1272 = vmatpush1.msra.mxu0 0.0
        %1273 = vmatprep.subr.mxu0 0.0
        %1274 = vmatpush1.msra.mxu0 0.0
        %1275 = vmatprep.subr.mxu0 0.0
        %1276 = vmatpush1.msra.mxu0 0.0
        %1277 = vmatprep.subr.mxu0 0.0
        %1278 = vmatpush1.msra.mxu0 0.0
        %1279 = vmatprep.subr.mxu0 0.0
        %1280 = vmatpush1.msra.mxu0 0.0
        %1281 = vmatprep.subr.mxu0 0.0
        %1282 = vmatpush1.msra.mxu0 0.0
        %1283 = vmatprep.subr.mxu0 0.0
        %1284 = vmatpush1.msra.mxu0 0.0
        %1285 = vmatprep.subr.mxu0 0.0
        %1286 = vmatpush1.msra.mxu0 0.0
        %1287 = vmatprep.subr.mxu0 0.0
        %1288 = vmatpush1.msra.mxu0 0.0
        %1289 = vmatprep.subr.mxu0 0.0
        %1290 = vmatpush1.msra.mxu0 0.0
        %1291 = vmatprep.subr.mxu0 0.0
        %1292 = vmatpush1.msra.mxu0 0.0
        %1293 = vmatprep.subr.mxu0 0.0
        %1294 = vmatpush1.msra.mxu0 0.0
        %1295 = vmatprep.subr.mxu0 0.0
        %1296 = vmatpush1.msra.mxu0 0.0
        %1297 = vmatprep.subr.mxu0 0.0
        %1298 = vmatpush1.msra.mxu0 0.0
        %1299 = vmatprep.subr.mxu0 0.0
        %1300 = vmatpush1.msra.mxu0 0.0
        %1301 = vmatprep.subr.mxu0 0.0
        %1302 = vmatpush1.msra.mxu0 0.0
        %1303 = vmatprep.subr.mxu0 0.0
        %1304 = vmatpush1.msra.mxu0 0.0
        %1305 = vmatprep.subr.mxu0 0.0
        %1306 = vmatpush1.msra.mxu0 0.0
        %1307 = vmatprep.subr.mxu0 0.0
        %1308 = vmatpush1.msra.mxu0 0.0
        %1309 = vmatprep.subr.mxu0 0.0
        %1310 = vmatpush1.msra.mxu0 0.0
        %1311 = vmatprep.mubr.f32.mxu0 0.0
        %1312 = vmatmul.mubr.f32.gmra.mrb[0].mxu0 %v1245
        %v1313 = vpop.f32.mrb[0].mxu0
        %v1314 = vadd.f32 0.0, %v1313
        %v1315 = vpop.f32.mrb[0].mxu0
        %1316 = vdwg.mxu0
        %v1318 = vsel %vm439, %v1314, 0
        %1320 = vmatprep.subr.mxu0 0.0
        %1321 = vmatpush1.msra.mxu0 %v434
        %1322 = vmatprep.subr.mxu0 0.0
        %1323 = vmatpush1.msra.mxu0 0.0
        %1324 = vmatprep.subr.mxu0 0.0
        %1325 = vmatpush1.msra.mxu0 0.0
        %1326 = vmatprep.subr.mxu0 0.0
        %1327 = vmatpush1.msra.mxu0 0.0
        %1328 = vmatprep.subr.mxu0 0.0
        %1329 = vmatpush1.msra.mxu0 0.0
        %1330 = vmatprep.subr.mxu0 0.0
        %1331 = vmatpush1.msra.mxu0 0.0
        %1332 = vmatprep.subr.mxu0 0.0
        %1333 = vmatpush1.msra.mxu0 0.0
        %1334 = vmatprep.subr.mxu0 0.0
        %1335 = vmatpush1.msra.mxu0 0.0
        %1336 = vmatprep.subr.mxu0 0.0
        %1337 = vmatpush1.msra.mxu0 0.0
        %1338 = vmatprep.subr.mxu0 0.0
        %1339 = vmatpush1.msra.mxu0 0.0
        %1340 = vmatprep.subr.mxu0 0.0
        %1341 = vmatpush1.msra.mxu0 0.0
        %1342 = vmatprep.subr.mxu0 0.0
        %1343 = vmatpush1.msra.mxu0 0.0
        %1344 = vmatprep.subr.mxu0 0.0
        %1345 = vmatpush1.msra.mxu0 0.0
        %1346 = vmatprep.subr.mxu0 0.0
        %1347 = vmatpush1.msra.mxu0 0.0
        %1348 = vmatprep.subr.mxu0 0.0
        %1349 = vmatpush1.msra.mxu0 0.0
        %1350 = vmatprep.subr.mxu0 0.0
        %1351 = vmatpush1.msra.mxu0 0.0
        %1352 = vmatprep.subr.mxu0 0.0
        %1353 = vmatpush1.msra.mxu0 0.0
        %1354 = vmatprep.subr.mxu0 0.0
        %1355 = vmatpush1.msra.mxu0 0.0
        %1356 = vmatprep.subr.mxu0 0.0
        %1357 = vmatpush1.msra.mxu0 0.0
        %1358 = vmatprep.subr.mxu0 0.0
        %1359 = vmatpush1.msra.mxu0 0.0
        %1360 = vmatprep.subr.mxu0 0.0
        %1361 = vmatpush1.msra.mxu0 0.0
        %1362 = vmatprep.subr.mxu0 0.0
        %1363 = vmatpush1.msra.mxu0 0.0
        %1364 = vmatprep.subr.mxu0 0.0
        %1365 = vmatpush1.msra.mxu0 0.0
        %1366 = vmatprep.subr.mxu0 0.0
        %1367 = vmatpush1.msra.mxu0 0.0
        %1368 = vmatprep.subr.mxu0 0.0
        %1369 = vmatpush1.msra.mxu0 0.0
        %1370 = vmatprep.subr.mxu0 0.0
        %1371 = vmatpush1.msra.mxu0 0.0
        %1372 = vmatprep.subr.mxu0 0.0
        %1373 = vmatpush1.msra.mxu0 0.0
        %1374 = vmatprep.subr.mxu0 0.0
        %1375 = vmatpush1.msra.mxu0 0.0
        %1376 = vmatprep.subr.mxu0 0.0
        %1377 = vmatpush1.msra.mxu0 0.0
        %1378 = vmatprep.subr.mxu0 0.0
        %1379 = vmatpush1.msra.mxu0 0.0
        %1380 = vmatprep.subr.mxu0 0.0
        %1381 = vmatpush1.msra.mxu0 0.0
        %1382 = vmatprep.subr.mxu0 0.0
        %1383 = vmatpush1.msra.mxu0 0.0
        %1384 = vmatprep.mubr.f32.mxu0 0.0
        %1385 = vmatmul.mubr.f32.gmra.mrb[0].mxu0 %v1318
        %v1386 = vpop.f32.mrb[0].mxu0
        %v1387 = vadd.f32 0.0, %v1386
        %v1388 = vpop.f32.mrb[0].mxu0
        %1389 = vdwg.mxu0
        %v1390 = vadd.f32 %v1151, %v1387
        %v1392 = vlaneseq
        %v1393 = vshrl.u32 %v1392, 7
        %v1394 = vsub.s32 0, %v1393
        %v1395 = vrot.slane %v435, %v1394
        %v1397 = vadd.f32 %v1390, %v1395
        %v1398 = vld [vmem:[%s5] sm:$0xff]
        %v1399 = vld [vmem:[%s5 + $0x8] sm:$0xff]
        %v1400 = vld [vmem:[%s5 + $0x10] sm:$0xff]
        %v1401 = vld [vmem:[%s5 + $0x18] sm:$0xff]
        %1402 = vrot.lane.b32.xlu0 %v1395, 96
        %v1403 = vpop.permute.xlu0 %1402
        %v1406 = vsel %vm356, %v1397, 0
        %1408 = vmatprep.subr.mxu0 0.0
        %1409 = vmatpush1.msra.mxu0 %v1398
        %1410 = vmatprep.subr.mxu0 0.0
        %1411 = vmatpush1.msra.mxu0 %v1399
        %1412 = vmatprep.subr.mxu0 0.0
        %1413 = vmatpush1.msra.mxu0 %v1400
        %1414 = vmatprep.subr.mxu0 0.0
        %1415 = vmatpush1.msra.mxu0 %v1401
        %1416 = vmatprep.subr.mxu0 0.0
        %1417 = vmatpush1.msra.mxu0 0.0
        %1418 = vmatprep.subr.mxu0 0.0
        %1419 = vmatpush1.msra.mxu0 0.0
        %1420 = vmatprep.subr.mxu0 0.0
        %1421 = vmatpush1.msra.mxu0 0.0
        %1422 = vmatprep.subr.mxu0 0.0
        %1423 = vmatpush1.msra.mxu0 0.0
        %1424 = vmatprep.subr.mxu0 0.0
        %1425 = vmatpush1.msra.mxu0 0.0
        %1426 = vmatprep.subr.mxu0 0.0
        %1427 = vmatpush1.msra.mxu0 0.0
        %1428 = vmatprep.subr.mxu0 0.0
        %1429 = vmatpush1.msra.mxu0 0.0
        %1430 = vmatprep.subr.mxu0 0.0
        %1431 = vmatpush1.msra.mxu0 0.0
        %1432 = vmatprep.subr.mxu0 0.0
        %1433 = vmatpush1.msra.mxu0 0.0
        %1434 = vmatprep.subr.mxu0 0.0
        %1435 = vmatpush1.msra.mxu0 0.0
        %1436 = vmatprep.subr.mxu0 0.0
        %1437 = vmatpush1.msra.mxu0 0.0
        %1438 = vmatprep.subr.mxu0 0.0
        %1439 = vmatpush1.msra.mxu0 0.0
        %1440 = vmatprep.subr.mxu0 0.0
        %1441 = vmatpush1.msra.mxu0 0.0
        %1442 = vmatprep.subr.mxu0 0.0
        %1443 = vmatpush1.msra.mxu0 0.0
        %1444 = vmatprep.subr.mxu0 0.0
        %1445 = vmatpush1.msra.mxu0 0.0
        %1446 = vmatprep.subr.mxu0 0.0
        %1447 = vmatpush1.msra.mxu0 0.0
        %1448 = vmatprep.subr.mxu0 0.0
        %1449 = vmatpush1.msra.mxu0 0.0
        %1450 = vmatprep.subr.mxu0 0.0
        %1451 = vmatpush1.msra.mxu0 0.0
        %1452 = vmatprep.subr.mxu0 0.0
        %1453 = vmatpush1.msra.mxu0 0.0
        %1454 = vmatprep.subr.mxu0 0.0
        %1455 = vmatpush1.msra.mxu0 0.0
        %1456 = vmatprep.subr.mxu0 0.0
        %1457 = vmatpush1.msra.mxu0 0.0
        %1458 = vmatprep.subr.mxu0 0.0
        %1459 = vmatpush1.msra.mxu0 0.0
        %1460 = vmatprep.subr.mxu0 0.0
        %1461 = vmatpush1.msra.mxu0 0.0
        %1462 = vmatprep.subr.mxu0 0.0
        %1463 = vmatpush1.msra.mxu0 0.0
        %1464 = vmatprep.subr.mxu0 0.0
        %1465 = vmatpush1.msra.mxu0 0.0
        %1466 = vmatprep.subr.mxu0 0.0
        %1467 = vmatpush1.msra.mxu0 0.0
        %1468 = vmatprep.subr.mxu0 0.0
        %1469 = vmatpush1.msra.mxu0 0.0
        %1470 = vmatprep.subr.mxu0 0.0
        %1471 = vmatpush1.msra.mxu0 0.0
        %1472 = vmatprep.mubr.f32.mxu0 0.0
        %1473 = vmatmul.mubr.f32.gmra.mrb[0].mxu0 %v1406
        %v1474 = vpop.f32.mrb[0].mxu0
        %v1475 = vadd.f32 %v1403, %v1474
        %v1476 = vpop.f32.mrb[0].mxu0
        %1477 = vdwg.mxu0
        %v1478 = vmax.f32 %v1475, 0.0
        %v1479 = vld [vmem:[%s6] sm:$0xf]
        %1480 = vrot.lane.b32.xlu0 %v1395, 92
        %v1481 = vpop.permute.xlu0 %1480
        %vm1483 = vcmask 31744
        %v1485 = vsel %vm1483, %v1478, 0
        %vm1487 = vcmask 1043456
        %v1489 = vsel %vm1487, %v1479, 0
        %1491 = vmatprep.subr.mxu0 0.0
        %1492 = vmatpush1.msra.mxu0 %v1489
        %1493 = vmatprep.subr.mxu0 0.0
        %1494 = vmatpush1.msra.mxu0 0.0
        %1495 = vmatprep.subr.mxu0 0.0
        %1496 = vmatpush1.msra.mxu0 0.0
        %1497 = vmatprep.subr.mxu0 0.0
        %1498 = vmatpush1.msra.mxu0 0.0
        %1499 = vmatprep.subr.mxu0 0.0
        %1500 = vmatpush1.msra.mxu0 0.0
        %1501 = vmatprep.subr.mxu0 0.0
        %1502 = vmatpush1.msra.mxu0 0.0
        %1503 = vmatprep.subr.mxu0 0.0
        %1504 = vmatpush1.msra.mxu0 0.0
        %1505 = vmatprep.subr.mxu0 0.0
        %1506 = vmatpush1.msra.mxu0 0.0
        %1507 = vmatprep.subr.mxu0 0.0
        %1508 = vmatpush1.msra.mxu0 0.0
        %1509 = vmatprep.subr.mxu0 0.0
        %1510 = vmatpush1.msra.mxu0 0.0
        %1511 = vmatprep.subr.mxu0 0.0
        %1512 = vmatpush1.msra.mxu0 0.0
        %1513 = vmatprep.subr.mxu0 0.0
        %1514 = vmatpush1.msra.mxu0 0.0
        %1515 = vmatprep.subr.mxu0 0.0
        %1516 = vmatpush1.msra.mxu0 0.0
        %1517 = vmatprep.subr.mxu0 0.0
        %1518 = vmatpush1.msra.mxu0 0.0
        %1519 = vmatprep.subr.mxu0 0.0
        %1520 = vmatpush1.msra.mxu0 0.0
        %1521 = vmatprep.subr.mxu0 0.0
        %1522 = vmatpush1.msra.mxu0 0.0
        %1523 = vmatprep.subr.mxu0 0.0
        %1524 = vmatpush1.msra.mxu0 0.0
        %1525 = vmatprep.subr.mxu0 0.0
        %1526 = vmatpush1.msra.mxu0 0.0
        %1527 = vmatprep.subr.mxu0 0.0
        %1528 = vmatpush1.msra.mxu0 0.0
        %1529 = vmatprep.subr.mxu0 0.0
        %1530 = vmatpush1.msra.mxu0 0.0
        %1531 = vmatprep.subr.mxu0 0.0
        %1532 = vmatpush1.msra.mxu0 0.0
        %1533 = vmatprep.subr.mxu0 0.0
        %1534 = vmatpush1.msra.mxu0 0.0
        %1535 = vmatprep.subr.mxu0 0.0
        %1536 = vmatpush1.msra.mxu0 0.0
        %1537 = vmatprep.subr.mxu0 0.0
        %1538 = vmatpush1.msra.mxu0 0.0
        %1539 = vmatprep.subr.mxu0 0.0
        %1540 = vmatpush1.msra.mxu0 0.0
        %1541 = vmatprep.subr.mxu0 0.0
        %1542 = vmatpush1.msra.mxu0 0.0
        %1543 = vmatprep.subr.mxu0 0.0
        %1544 = vmatpush1.msra.mxu0 0.0
        %1545 = vmatprep.subr.mxu0 0.0
        %1546 = vmatpush1.msra.mxu0 0.0
        %1547 = vmatprep.subr.mxu0 0.0
        %1548 = vmatpush1.msra.mxu0 0.0
        %1549 = vmatprep.subr.mxu0 0.0
        %1550 = vmatpush1.msra.mxu0 0.0
        %1551 = vmatprep.subr.mxu0 0.0
        %1552 = vmatpush1.msra.mxu0 0.0
        %1553 = vmatprep.subr.mxu0 0.0
        %1554 = vmatpush1.msra.mxu0 0.0
        %1555 = vmatprep.mubr.f32.mxu0 0.0
        %1556 = vmatmul.mubr.f32.gmra.mrb[0].mxu0 %v1485
        %v1557 = vpop.f32.mrb[0].mxu0
        %v1558 = vadd.f32 %v1481, %v1557
        %v1559 = vpop.f32.mrb[0].mxu0
        %1560 = vdwg.mxu0
        %1561 = vst.msk [vmem:[%s335] sm:$0xff] %vm1483, %v1558
        %s1562 = scalar_lea.vmem %s2, 32
        %v1563 = vld [vmem:[%s1562] sm:$0xff]
        %v1564 = vld [vmem:[%s1562 + $0x8] sm:$0xff]
        %v1565 = vld [vmem:[%s1562 + $0x10] sm:$0xff]
        %v1566 = vld [vmem:[%s1562 + $0x18] sm:$0xff]
        %s1567 = scalar_lea.vmem %s3, 1
        %v1568 = vld [vmem:[%s1567] sm:$0x1]
        %v1570 = vlaneseq
        %v1571 = vshrl.u32 %v1570, 7
        %v1572 = vsub.s32 0, %v1571
        %v1573 = vrot.slane %v1568, %v1572
        %1575 = vmatprep.subr.mxu0 0.0
        %1576 = vmatpush1.msra.mxu0 %v1563
        %1577 = vmatprep.subr.mxu0 0.0
        %1578 = vmatpush1.msra.mxu0 %v1564
        %1579 = vmatprep.subr.mxu0 0.0
        %1580 = vmatpush1.msra.mxu0 %v1565
        %1581 = vmatprep.subr.mxu0 0.0
        %1582 = vmatpush1.msra.mxu0 %v1566
        %1583 = vmatprep.subr.mxu0 0.0
        %1584 = vmatpush1.msra.mxu0 0.0
        %1585 = vmatprep.subr.mxu0 0.0
        %1586 = vmatpush1.msra.mxu0 0.0
        %1587 = vmatprep.subr.mxu0 0.0
        %1588 = vmatpush1.msra.mxu0 0.0
        %1589 = vmatprep.subr.mxu0 0.0
        %1590 = vmatpush1.msra.mxu0 0.0
        %1591 = vmatprep.subr.mxu0 0.0
        %1592 = vmatpush1.msra.mxu0 0.0
        %1593 = vmatprep.subr.mxu0 0.0
        %1594 = vmatpush1.msra.mxu0 0.0
        %1595 = vmatprep.subr.mxu0 0.0
        %1596 = vmatpush1.msra.mxu0 0.0
        %1597 = vmatprep.subr.mxu0 0.0
        %1598 = vmatpush1.msra.mxu0 0.0
        %1599 = vmatprep.subr.mxu0 0.0
        %1600 = vmatpush1.msra.mxu0 0.0
        %1601 = vmatprep.subr.mxu0 0.0
        %1602 = vmatpush1.msra.mxu0 0.0
        %1603 = vmatprep.subr.mxu0 0.0
        %1604 = vmatpush1.msra.mxu0 0.0
        %1605 = vmatprep.subr.mxu0 0.0
        %1606 = vmatpush1.msra.mxu0 0.0
        %1607 = vmatprep.subr.mxu0 0.0
        %1608 = vmatpush1.msra.mxu0 0.0
        %1609 = vmatprep.subr.mxu0 0.0
        %1610 = vmatpush1.msra.mxu0 0.0
        %1611 = vmatprep.subr.mxu0 0.0
        %1612 = vmatpush1.msra.mxu0 0.0
        %1613 = vmatprep.subr.mxu0 0.0
        %1614 = vmatpush1.msra.mxu0 0.0
        %1615 = vmatprep.subr.mxu0 0.0
        %1616 = vmatpush1.msra.mxu0 0.0
        %1617 = vmatprep.subr.mxu0 0.0
        %1618 = vmatpush1.msra.mxu0 0.0
        %1619 = vmatprep.subr.mxu0 0.0
        %1620 = vmatpush1.msra.mxu0 0.0
        %1621 = vmatprep.subr.mxu0 0.0
        %1622 = vmatpush1.msra.mxu0 0.0
        %1623 = vmatprep.subr.mxu0 0.0
        %1624 = vmatpush1.msra.mxu0 0.0
        %1625 = vmatprep.subr.mxu0 0.0
        %1626 = vmatpush1.msra.mxu0 0.0
        %1627 = vmatprep.subr.mxu0 0.0
        %1628 = vmatpush1.msra.mxu0 0.0
        %1629 = vmatprep.subr.mxu0 0.0
        %1630 = vmatpush1.msra.mxu0 0.0
        %1631 = vmatprep.subr.mxu0 0.0
        %1632 = vmatpush1.msra.mxu0 0.0
        %1633 = vmatprep.subr.mxu0 0.0
        %1634 = vmatpush1.msra.mxu0 0.0
        %1635 = vmatprep.subr.mxu0 0.0
        %1636 = vmatpush1.msra.mxu0 0.0
        %1637 = vmatprep.subr.mxu0 0.0
        %1638 = vmatpush1.msra.mxu0 0.0
        %1639 = vmatprep.mubr.f32.mxu0 0.0
        %1640 = vmatmul.mubr.f32.gmra.mrb[0].mxu0 %v358
        %v1641 = vpop.f32.mrb[0].mxu0
        %v1642 = vadd.f32 %v1573, %v1641
        %v1643 = vpop.f32.mrb[0].mxu0
        %1644 = vdwg.mxu0
        %v1645 = vmul.f32 %v1642, 0.35355338
        %s1646 = scalar_lea.vmem [#allocation5], 32
        %v1647 = vld [vmem:[%s1646] sm:$0xff]
        %v1648 = vld [vmem:[%s1646 + $0x8] sm:$0xff]
        %v1649 = vld [vmem:[%s1646 + $0x10] sm:$0xff]
        %v1650 = vld [vmem:[%s1646 + $0x18] sm:$0xff]
        %s1651 = scalar_lea.vmem %s7, 1
        %v1652 = vld [vmem:[%s1651] sm:$0x1]
        %1654 = vrot.lane.b32.xlu0 %v1642, 96
        %v1655 = vpop.permute.xlu0 %1654
        %v1657 = vsel %vm439, %v1645, 0
        %v1659 = vsel %vm439, %v1655, 0
        %1661 = vmatprep.subr.mxu0 0.0
        %1662 = vmatpush1.xpose.msra.mxu0 %v1659
        %1663 = vmatprep.subr.mxu0 0.0
        %1664 = vmatpush1.xpose.msra.mxu0 0.0
        %1665 = vmatprep.subr.mxu0 0.0
        %1666 = vmatpush1.xpose.msra.mxu0 0.0
        %1667 = vmatprep.subr.mxu0 0.0
        %1668 = vmatpush1.xpose.msra.mxu0 0.0
        %1669 = vmatprep.subr.mxu0 0.0
        %1670 = vmatpush1.xpose.msra.mxu0 0.0
        %1671 = vmatprep.subr.mxu0 0.0
        %1672 = vmatpush1.xpose.msra.mxu0 0.0
        %1673 = vmatprep.subr.mxu0 0.0
        %1674 = vmatpush1.xpose.msra.mxu0 0.0
        %1675 = vmatprep.subr.mxu0 0.0
        %1676 = vmatpush1.xpose.msra.mxu0 0.0
        %1677 = vmatprep.subr.mxu0 0.0
        %1678 = vmatpush1.xpose.msra.mxu0 0.0
        %1679 = vmatprep.subr.mxu0 0.0
        %1680 = vmatpush1.xpose.msra.mxu0 0.0
        %1681 = vmatprep.subr.mxu0 0.0
        %1682 = vmatpush1.xpose.msra.mxu0 0.0
        %1683 = vmatprep.subr.mxu0 0.0
        %1684 = vmatpush1.xpose.msra.mxu0 0.0
        %1685 = vmatprep.subr.mxu0 0.0
        %1686 = vmatpush1.xpose.msra.mxu0 0.0
        %1687 = vmatprep.subr.mxu0 0.0
        %1688 = vmatpush1.xpose.msra.mxu0 0.0
        %1689 = vmatprep.subr.mxu0 0.0
        %1690 = vmatpush1.xpose.msra.mxu0 0.0
        %1691 = vmatprep.subr.mxu0 0.0
        %1692 = vmatpush1.xpose.msra.mxu0 0.0
        %1693 = vmatprep.subr.mxu0 0.0
        %1694 = vmatpush1.xpose.msra.mxu0 0.0
        %1695 = vmatprep.subr.mxu0 0.0
        %1696 = vmatpush1.xpose.msra.mxu0 0.0
        %1697 = vmatprep.subr.mxu0 0.0
        %1698 = vmatpush1.xpose.msra.mxu0 0.0
        %1699 = vmatprep.subr.mxu0 0.0
        %1700 = vmatpush1.xpose.msra.mxu0 0.0
        %1701 = vmatprep.subr.mxu0 0.0
        %1702 = vmatpush1.xpose.msra.mxu0 0.0
        %1703 = vmatprep.subr.mxu0 0.0
        %1704 = vmatpush1.xpose.msra.mxu0 0.0
        %1705 = vmatprep.subr.mxu0 0.0
        %1706 = vmatpush1.xpose.msra.mxu0 0.0
        %1707 = vmatprep.subr.mxu0 0.0
        %1708 = vmatpush1.xpose.msra.mxu0 0.0
        %1709 = vmatprep.subr.mxu0 0.0
        %1710 = vmatpush1.xpose.msra.mxu0 0.0
        %1711 = vmatprep.subr.mxu0 0.0
        %1712 = vmatpush1.xpose.msra.mxu0 0.0
        %1713 = vmatprep.subr.mxu0 0.0
        %1714 = vmatpush1.xpose.msra.mxu0 0.0
        %1715 = vmatprep.subr.mxu0 0.0
        %1716 = vmatpush1.xpose.msra.mxu0 0.0
        %1717 = vmatprep.subr.mxu0 0.0
        %1718 = vmatpush1.xpose.msra.mxu0 0.0
        %1719 = vmatprep.subr.mxu0 0.0
        %1720 = vmatpush1.xpose.msra.mxu0 0.0
        %1721 = vmatprep.subr.mxu0 0.0
        %1722 = vmatpush1.xpose.msra.mxu0 0.0
        %1723 = vmatprep.subr.mxu0 0.0
        %1724 = vmatpush1.xpose.msra.mxu0 0.0
        %1725 = vmatprep.mubr.f32.mxu0 0.0
        %1726 = vmatmul.mubr.f32.gmra.mrb[0].mxu0 %v1657
        %v1727 = vpop.f32.mrb[0].mxu0
        %v1728 = vadd.f32 %v344, %v1727
        %v1729 = vpop.f32.mrb[0].mxu0
        %1730 = vdwg.mxu0
        %v1731 = vsel %vm439, %v1728, -inf
        %1732 = vmax.xlane.f32.xlu0 %v1731
        %v1733 = vpop.xlane.xlu0 %1732
        %v1734 = vsub.f32 %v1728, %v1733
        %v1735 = vmul.f32 %v1734, 1.442695
        %v1736 = vpow.pop %v1735
        %v1737 = vsel %vm439, %v1736, 0.0
        %1738 = vadd.xlane.f32.xlu0 %v1737
        %v1739 = vpop.xlane.xlu0 %1738
        %v1740 = vrcp.pop %v1739
        %v1741 = vmul.f32 %v1736, %v1740
        %1742 = vrot.lane.b32.xlu0 %v1642, 64
        %v1743 = vpop.permute.xlu0 %1742
        %v1746 = vsel %vm439, %v1741, 0
        %1748 = vmatprep.subr.mxu0 0.0
        %1749 = vmatpush1.msra.mxu0 %v1743
        %1750 = vmatprep.subr.mxu0 0.0
        %1751 = vmatpush1.msra.mxu0 0.0
        %1752 = vmatprep.subr.mxu0 0.0
        %1753 = vmatpush1.msra.mxu0 0.0
        %1754 = vmatprep.subr.mxu0 0.0
        %1755 = vmatpush1.msra.mxu0 0.0
        %1756 = vmatprep.subr.mxu0 0.0
        %1757 = vmatpush1.msra.mxu0 0.0
        %1758 = vmatprep.subr.mxu0 0.0
        %1759 = vmatpush1.msra.mxu0 0.0
        %1760 = vmatprep.subr.mxu0 0.0
        %1761 = vmatpush1.msra.mxu0 0.0
        %1762 = vmatprep.subr.mxu0 0.0
        %1763 = vmatpush1.msra.mxu0 0.0
        %1764 = vmatprep.subr.mxu0 0.0
        %1765 = vmatpush1.msra.mxu0 0.0
        %1766 = vmatprep.subr.mxu0 0.0
        %1767 = vmatpush1.msra.mxu0 0.0
        %1768 = vmatprep.subr.mxu0 0.0
        %1769 = vmatpush1.msra.mxu0 0.0
        %1770 = vmatprep.subr.mxu0 0.0
        %1771 = vmatpush1.msra.mxu0 0.0
        %1772 = vmatprep.subr.mxu0 0.0
        %1773 = vmatpush1.msra.mxu0 0.0
        %1774 = vmatprep.subr.mxu0 0.0
        %1775 = vmatpush1.msra.mxu0 0.0
        %1776 = vmatprep.subr.mxu0 0.0
        %1777 = vmatpush1.msra.mxu0 0.0
        %1778 = vmatprep.subr.mxu0 0.0
        %1779 = vmatpush1.msra.mxu0 0.0
        %1780 = vmatprep.subr.mxu0 0.0
        %1781 = vmatpush1.msra.mxu0 0.0
        %1782 = vmatprep.subr.mxu0 0.0
        %1783 = vmatpush1.msra.mxu0 0.0
        %1784 = vmatprep.subr.mxu0 0.0
        %1785 = vmatpush1.msra.mxu0 0.0
        %1786 = vmatprep.subr.mxu0 0.0
        %1787 = vmatpush1.msra.mxu0 0.0
        %1788 = vmatprep.subr.mxu0 0.0
        %1789 = vmatpush1.msra.mxu0 0.0
        %1790 = vmatprep.subr.mxu0 0.0
        %1791 = vmatpush1.msra.mxu0 0.0
        %1792 = vmatprep.subr.mxu0 0.0
        %1793 = vmatpush1.msra.mxu0 0.0
        %1794 = vmatprep.subr.mxu0 0.0
        %1795 = vmatpush1.msra.mxu0 0.0
        %1796 = vmatprep.subr.mxu0 0.0
        %1797 = vmatpush1.msra.mxu0 0.0
        %1798 = vmatprep.subr.mxu0 0.0
        %1799 = vmatpush1.msra.mxu0 0.0
        %1800 = vmatprep.subr.mxu0 0.0
        %1801 = vmatpush1.msra.mxu0 0.0
        %1802 = vmatprep.subr.mxu0 0.0
        %1803 = vmatpush1.msra.mxu0 0.0
        %1804 = vmatprep.subr.mxu0 0.0
        %1805 = vmatpush1.msra.mxu0 0.0
        %1806 = vmatprep.subr.mxu0 0.0
        %1807 = vmatpush1.msra.mxu0 0.0
        %1808 = vmatprep.subr.mxu0 0.0
        %1809 = vmatpush1.msra.mxu0 0.0
        %1810 = vmatprep.subr.mxu0 0.0
        %1811 = vmatpush1.msra.mxu0 0.0
        %1812 = vmatprep.mubr.f32.mxu0 0.0
        %1813 = vmatmul.mubr.f32.gmra.mrb[0].mxu0 %v1746
        %v1814 = vpop.f32.mrb[0].mxu0
        %v1815 = vadd.f32 0.0, %v1814
        %v1816 = vpop.f32.mrb[0].mxu0
        %1817 = vdwg.mxu0
        %1818 = vrot.lane.b32.xlu0 %v1645, 120
        %v1819 = vpop.permute.xlu0 %1818
        %1820 = vrot.lane.b32.xlu0 %v1642, 88
        %v1821 = vpop.permute.xlu0 %1820
        %v1822 = vsel %vm439, %v1819, 0
        %v1824 = vsel %vm439, %v1821, 0
        %1826 = vmatprep.subr.mxu0 0.0
        %1827 = vmatpush1.xpose.msra.mxu0 %v1824
        %1828 = vmatprep.subr.mxu0 0.0
        %1829 = vmatpush1.xpose.msra.mxu0 0.0
        %1830 = vmatprep.subr.mxu0 0.0
        %1831 = vmatpush1.xpose.msra.mxu0 0.0
        %1832 = vmatprep.subr.mxu0 0.0
        %1833 = vmatpush1.xpose.msra.mxu0 0.0
        %1834 = vmatprep.subr.mxu0 0.0
        %1835 = vmatpush1.xpose.msra.mxu0 0.0
        %1836 = vmatprep.subr.mxu0 0.0
        %1837 = vmatpush1.xpose.msra.mxu0 0.0
        %1838 = vmatprep.subr.mxu0 0.0
        %1839 = vmatpush1.xpose.msra.mxu0 0.0
        %1840 = vmatprep.subr.mxu0 0.0
        %1841 = vmatpush1.xpose.msra.mxu0 0.0
        %1842 = vmatprep.subr.mxu0 0.0
        %1843 = vmatpush1.xpose.msra.mxu0 0.0
        %1844 = vmatprep.subr.mxu0 0.0
        %1845 = vmatpush1.xpose.msra.mxu0 0.0
        %1846 = vmatprep.subr.mxu0 0.0
        %1847 = vmatpush1.xpose.msra.mxu0 0.0
        %1848 = vmatprep.subr.mxu0 0.0
        %1849 = vmatpush1.xpose.msra.mxu0 0.0
        %1850 = vmatprep.subr.mxu0 0.0
        %1851 = vmatpush1.xpose.msra.mxu0 0.0
        %1852 = vmatprep.subr.mxu0 0.0
        %1853 = vmatpush1.xpose.msra.mxu0 0.0
        %1854 = vmatprep.subr.mxu0 0.0
        %1855 = vmatpush1.xpose.msra.mxu0 0.0
        %1856 = vmatprep.subr.mxu0 0.0
        %1857 = vmatpush1.xpose.msra.mxu0 0.0
        %1858 = vmatprep.subr.mxu0 0.0
        %1859 = vmatpush1.xpose.msra.mxu0 0.0
        %1860 = vmatprep.subr.mxu0 0.0
        %1861 = vmatpush1.xpose.msra.mxu0 0.0
        %1862 = vmatprep.subr.mxu0 0.0
        %1863 = vmatpush1.xpose.msra.mxu0 0.0
        %1864 = vmatprep.subr.mxu0 0.0
        %1865 = vmatpush1.xpose.msra.mxu0 0.0
        %1866 = vmatprep.subr.mxu0 0.0
        %1867 = vmatpush1.xpose.msra.mxu0 0.0
        %1868 = vmatprep.subr.mxu0 0.0
        %1869 = vmatpush1.xpose.msra.mxu0 0.0
        %1870 = vmatprep.subr.mxu0 0.0
        %1871 = vmatpush1.xpose.msra.mxu0 0.0
        %1872 = vmatprep.subr.mxu0 0.0
        %1873 = vmatpush1.xpose.msra.mxu0 0.0
        %1874 = vmatprep.subr.mxu0 0.0
        %1875 = vmatpush1.xpose.msra.mxu0 0.0
        %1876 = vmatprep.subr.mxu0 0.0
        %1877 = vmatpush1.xpose.msra.mxu0 0.0
        %1878 = vmatprep.subr.mxu0 0.0
        %1879 = vmatpush1.xpose.msra.mxu0 0.0
        %1880 = vmatprep.subr.mxu0 0.0
        %1881 = vmatpush1.xpose.msra.mxu0 0.0
        %1882 = vmatprep.subr.mxu0 0.0
        %1883 = vmatpush1.xpose.msra.mxu0 0.0
        %1884 = vmatprep.subr.mxu0 0.0
        %1885 = vmatpush1.xpose.msra.mxu0 0.0
        %1886 = vmatprep.subr.mxu0 0.0
        %1887 = vmatpush1.xpose.msra.mxu0 0.0
        %1888 = vmatprep.subr.mxu0 0.0
        %1889 = vmatpush1.xpose.msra.mxu0 0.0
        %1890 = vmatprep.mubr.f32.mxu0 0.0
        %1891 = vmatmul.mubr.f32.gmra.mrb[0].mxu0 %v1822
        %v1892 = vpop.f32.mrb[0].mxu0
        %v1893 = vadd.f32 %v344, %v1892
        %v1894 = vpop.f32.mrb[0].mxu0
        %1895 = vdwg.mxu0
        %v1896 = vsel %vm439, %v1893, -inf
        %1897 = vmax.xlane.f32.xlu0 %v1896
        %v1898 = vpop.xlane.xlu0 %1897
        %v1899 = vsub.f32 %v1893, %v1898
        %v1900 = vmul.f32 %v1899, 1.442695
        %v1901 = vpow.pop %v1900
        %v1902 = vsel %vm439, %v1901, 0.0
        %1903 = vadd.xlane.f32.xlu0 %v1902
        %v1904 = vpop.xlane.xlu0 %1903
        %v1905 = vrcp.pop %v1904
        %v1906 = vmul.f32 %v1901, %v1905
        %1907 = vrot.lane.b32.xlu0 %v1642, 56
        %v1908 = vpop.permute.xlu0 %1907
        %v1911 = vsel %vm439, %v1906, 0
        %1913 = vmatprep.subr.mxu0 0.0
        %1914 = vmatpush1.msra.mxu0 %v1908
        %1915 = vmatprep.subr.mxu0 0.0
        %1916 = vmatpush1.msra.mxu0 0.0
        %1917 = vmatprep.subr.mxu0 0.0
        %1918 = vmatpush1.msra.mxu0 0.0
        %1919 = vmatprep.subr.mxu0 0.0
        %1920 = vmatpush1.msra.mxu0 0.0
        %1921 = vmatprep.subr.mxu0 0.0
        %1922 = vmatpush1.msra.mxu0 0.0
        %1923 = vmatprep.subr.mxu0 0.0
        %1924 = vmatpush1.msra.mxu0 0.0
        %1925 = vmatprep.subr.mxu0 0.0
        %1926 = vmatpush1.msra.mxu0 0.0
        %1927 = vmatprep.subr.mxu0 0.0
        %1928 = vmatpush1.msra.mxu0 0.0
        %1929 = vmatprep.subr.mxu0 0.0
        %1930 = vmatpush1.msra.mxu0 0.0
        %1931 = vmatprep.subr.mxu0 0.0
        %1932 = vmatpush1.msra.mxu0 0.0
        %1933 = vmatprep.subr.mxu0 0.0
        %1934 = vmatpush1.msra.mxu0 0.0
        %1935 = vmatprep.subr.mxu0 0.0
        %1936 = vmatpush1.msra.mxu0 0.0
        %1937 = vmatprep.subr.mxu0 0.0
        %1938 = vmatpush1.msra.mxu0 0.0
        %1939 = vmatprep.subr.mxu0 0.0
        %1940 = vmatpush1.msra.mxu0 0.0
        %1941 = vmatprep.subr.mxu0 0.0
        %1942 = vmatpush1.msra.mxu0 0.0
        %1943 = vmatprep.subr.mxu0 0.0
        %1944 = vmatpush1.msra.mxu0 0.0
        %1945 = vmatprep.subr.mxu0 0.0
        %1946 = vmatpush1.msra.mxu0 0.0
        %1947 = vmatprep.subr.mxu0 0.0
        %1948 = vmatpush1.msra.mxu0 0.0
        %1949 = vmatprep.subr.mxu0 0.0
        %1950 = vmatpush1.msra.mxu0 0.0
        %1951 = vmatprep.subr.mxu0 0.0
        %1952 = vmatpush1.msra.mxu0 0.0
        %1953 = vmatprep.subr.mxu0 0.0
        %1954 = vmatpush1.msra.mxu0 0.0
        %1955 = vmatprep.subr.mxu0 0.0
        %1956 = vmatpush1.msra.mxu0 0.0
        %1957 = vmatprep.subr.mxu0 0.0
        %1958 = vmatpush1.msra.mxu0 0.0
        %1959 = vmatprep.subr.mxu0 0.0
        %1960 = vmatpush1.msra.mxu0 0.0
        %1961 = vmatprep.subr.mxu0 0.0
        %1962 = vmatpush1.msra.mxu0 0.0
        %1963 = vmatprep.subr.mxu0 0.0
        %1964 = vmatpush1.msra.mxu0 0.0
        %1965 = vmatprep.subr.mxu0 0.0
        %1966 = vmatpush1.msra.mxu0 0.0
        %1967 = vmatprep.subr.mxu0 0.0
        %1968 = vmatpush1.msra.mxu0 0.0
        %1969 = vmatprep.subr.mxu0 0.0
        %1970 = vmatpush1.msra.mxu0 0.0
        %1971 = vmatprep.subr.mxu0 0.0
        %1972 = vmatpush1.msra.mxu0 0.0
        %1973 = vmatprep.subr.mxu0 0.0
        %1974 = vmatpush1.msra.mxu0 0.0
        %1975 = vmatprep.subr.mxu0 0.0
        %1976 = vmatpush1.msra.mxu0 0.0
        %1977 = vmatprep.mubr.f32.mxu0 0.0
        %1978 = vmatmul.mubr.f32.gmra.mrb[0].mxu0 %v1911
        %v1979 = vpop.f32.mrb[0].mxu0
        %v1980 = vadd.f32 0.0, %v1979
        %v1981 = vpop.f32.mrb[0].mxu0
        %1982 = vdwg.mxu0
        %v1984 = vsel %vm439, %v1980, 0
        %1986 = vmatprep.subr.mxu0 0.0
        %1987 = vmatpush1.msra.mxu0 %v1648
        %1988 = vmatprep.subr.mxu0 0.0
        %1989 = vmatpush1.msra.mxu0 0.0
        %1990 = vmatprep.subr.mxu0 0.0
        %1991 = vmatpush1.msra.mxu0 0.0
        %1992 = vmatprep.subr.mxu0 0.0
        %1993 = vmatpush1.msra.mxu0 0.0
        %1994 = vmatprep.subr.mxu0 0.0
        %1995 = vmatpush1.msra.mxu0 0.0
        %1996 = vmatprep.subr.mxu0 0.0
        %1997 = vmatpush1.msra.mxu0 0.0
        %1998 = vmatprep.subr.mxu0 0.0
        %1999 = vmatpush1.msra.mxu0 0.0
        %2000 = vmatprep.subr.mxu0 0.0
        %2001 = vmatpush1.msra.mxu0 0.0
        %2002 = vmatprep.subr.mxu0 0.0
        %2003 = vmatpush1.msra.mxu0 0.0
        %2004 = vmatprep.subr.mxu0 0.0
        %2005 = vmatpush1.msra.mxu0 0.0
        %2006 = vmatprep.subr.mxu0 0.0
        %2007 = vmatpush1.msra.mxu0 0.0
        %2008 = vmatprep.subr.mxu0 0.0
        %2009 = vmatpush1.msra.mxu0 0.0
        %2010 = vmatprep.subr.mxu0 0.0
        %2011 = vmatpush1.msra.mxu0 0.0
        %2012 = vmatprep.subr.mxu0 0.0
        %2013 = vmatpush1.msra.mxu0 0.0
        %2014 = vmatprep.subr.mxu0 0.0
        %2015 = vmatpush1.msra.mxu0 0.0
        %2016 = vmatprep.subr.mxu0 0.0
        %2017 = vmatpush1.msra.mxu0 0.0
        %2018 = vmatprep.subr.mxu0 0.0
        %2019 = vmatpush1.msra.mxu0 0.0
        %2020 = vmatprep.subr.mxu0 0.0
        %2021 = vmatpush1.msra.mxu0 0.0
        %2022 = vmatprep.subr.mxu0 0.0
        %2023 = vmatpush1.msra.mxu0 0.0
        %2024 = vmatprep.subr.mxu0 0.0
        %2025 = vmatpush1.msra.mxu0 0.0
        %2026 = vmatprep.subr.mxu0 0.0
        %2027 = vmatpush1.msra.mxu0 0.0
        %2028 = vmatprep.subr.mxu0 0.0
        %2029 = vmatpush1.msra.mxu0 0.0
        %2030 = vmatprep.subr.mxu0 0.0
        %2031 = vmatpush1.msra.mxu0 0.0
        %2032 = vmatprep.subr.mxu0 0.0
        %2033 = vmatpush1.msra.mxu0 0.0
        %2034 = vmatprep.subr.mxu0 0.0
        %2035 = vmatpush1.msra.mxu0 0.0
        %2036 = vmatprep.subr.mxu0 0.0
        %2037 = vmatpush1.msra.mxu0 0.0
        %2038 = vmatprep.subr.mxu0 0.0
        %2039 = vmatpush1.msra.mxu0 0.0
        %2040 = vmatprep.subr.mxu0 0.0
        %2041 = vmatpush1.msra.mxu0 0.0
        %2042 = vmatprep.subr.mxu0 0.0
        %2043 = vmatpush1.msra.mxu0 0.0
        %2044 = vmatprep.subr.mxu0 0.0
        %2045 = vmatpush1.msra.mxu0 0.0
        %2046 = vmatprep.subr.mxu0 0.0
        %2047 = vmatpush1.msra.mxu0 0.0
        %2048 = vmatprep.subr.mxu0 0.0
        %2049 = vmatpush1.msra.mxu0 0.0
        %2050 = vmatprep.mubr.f32.mxu0 0.0
        %2051 = vmatmul.mubr.f32.gmra.mrb[0].mxu0 %v1984
        %v2052 = vpop.f32.mrb[0].mxu0
        %v2053 = vadd.f32 0.0, %v2052
        %v2054 = vpop.f32.mrb[0].mxu0
        %2055 = vdwg.mxu0
        %v2057 = vsel %vm439, %v1815, 0
        %2059 = vmatprep.subr.mxu0 0.0
        %2060 = vmatpush1.msra.mxu0 %v1647
        %2061 = vmatprep.subr.mxu0 0.0
        %2062 = vmatpush1.msra.mxu0 0.0
        %2063 = vmatprep.subr.mxu0 0.0
        %2064 = vmatpush1.msra.mxu0 0.0
        %2065 = vmatprep.subr.mxu0 0.0
        %2066 = vmatpush1.msra.mxu0 0.0
        %2067 = vmatprep.subr.mxu0 0.0
        %2068 = vmatpush1.msra.mxu0 0.0
        %2069 = vmatprep.subr.mxu0 0.0
        %2070 = vmatpush1.msra.mxu0 0.0
        %2071 = vmatprep.subr.mxu0 0.0
        %2072 = vmatpush1.msra.mxu0 0.0
        %2073 = vmatprep.subr.mxu0 0.0
        %2074 = vmatpush1.msra.mxu0 0.0
        %2075 = vmatprep.subr.mxu0 0.0
        %2076 = vmatpush1.msra.mxu0 0.0
        %2077 = vmatprep.subr.mxu0 0.0
        %2078 = vmatpush1.msra.mxu0 0.0
        %2079 = vmatprep.subr.mxu0 0.0
        %2080 = vmatpush1.msra.mxu0 0.0
        %2081 = vmatprep.subr.mxu0 0.0
        %2082 = vmatpush1.msra.mxu0 0.0
        %2083 = vmatprep.subr.mxu0 0.0
        %2084 = vmatpush1.msra.mxu0 0.0
        %2085 = vmatprep.subr.mxu0 0.0
        %2086 = vmatpush1.msra.mxu0 0.0
        %2087 = vmatprep.subr.mxu0 0.0
        %2088 = vmatpush1.msra.mxu0 0.0
        %2089 = vmatprep.subr.mxu0 0.0
        %2090 = vmatpush1.msra.mxu0 0.0
        %2091 = vmatprep.subr.mxu0 0.0
        %2092 = vmatpush1.msra.mxu0 0.0
        %2093 = vmatprep.subr.mxu0 0.0
        %2094 = vmatpush1.msra.mxu0 0.0
        %2095 = vmatprep.subr.mxu0 0.0
        %2096 = vmatpush1.msra.mxu0 0.0
        %2097 = vmatprep.subr.mxu0 0.0
        %2098 = vmatpush1.msra.mxu0 0.0
        %2099 = vmatprep.subr.mxu0 0.0
        %2100 = vmatpush1.msra.mxu0 0.0
        %2101 = vmatprep.subr.mxu0 0.0
        %2102 = vmatpush1.msra.mxu0 0.0
        %2103 = vmatprep.subr.mxu0 0.0
        %2104 = vmatpush1.msra.mxu0 0.0
        %2105 = vmatprep.subr.mxu0 0.0
        %2106 = vmatpush1.msra.mxu0 0.0
        %2107 = vmatprep.subr.mxu0 0.0
        %2108 = vmatpush1.msra.mxu0 0.0
        %2109 = vmatprep.subr.mxu0 0.0
        %2110 = vmatpush1.msra.mxu0 0.0
        %2111 = vmatprep.subr.mxu0 0.0
        %2112 = vmatpush1.msra.mxu0 0.0
        %2113 = vmatprep.subr.mxu0 0.0
        %2114 = vmatpush1.msra.mxu0 0.0
        %2115 = vmatprep.subr.mxu0 0.0
        %2116 = vmatpush1.msra.mxu0 0.0
        %2117 = vmatprep.subr.mxu0 0.0
        %2118 = vmatpush1.msra.mxu0 0.0
        %2119 = vmatprep.subr.mxu0 0.0
        %2120 = vmatpush1.msra.mxu0 0.0
        %2121 = vmatprep.subr.mxu0 0.0
        %2122 = vmatpush1.msra.mxu0 0.0
        %2123 = vmatprep.mubr.f32.mxu0 0.0
        %2124 = vmatmul.mubr.f32.gmra.mrb[0].mxu0 %v2057
        %v2125 = vpop.f32.mrb[0].mxu0
        %v2126 = vadd.f32 %v2053, %v2125
        %v2127 = vpop.f32.mrb[0].mxu0
        %2128 = vdwg.mxu0
        %2129 = vrot.lane.b32.xlu0 %v1645, 112
        %v2130 = vpop.permute.xlu0 %2129
        %2131 = vrot.lane.b32.xlu0 %v1642, 80
        %v2132 = vpop.permute.xlu0 %2131
        %v2133 = vsel %vm439, %v2130, 0
        %v2135 = vsel %vm439, %v2132, 0
        %2137 = vmatprep.subr.mxu0 0.0
        %2138 = vmatpush1.xpose.msra.mxu0 %v2135
        %2139 = vmatprep.subr.mxu0 0.0
        %2140 = vmatpush1.xpose.msra.mxu0 0.0
        %2141 = vmatprep.subr.mxu0 0.0
        %2142 = vmatpush1.xpose.msra.mxu0 0.0
        %2143 = vmatprep.subr.mxu0 0.0
        %2144 = vmatpush1.xpose.msra.mxu0 0.0
        %2145 = vmatprep.subr.mxu0 0.0
        %2146 = vmatpush1.xpose.msra.mxu0 0.0
        %2147 = vmatprep.subr.mxu0 0.0
        %2148 = vmatpush1.xpose.msra.mxu0 0.0
        %2149 = vmatprep.subr.mxu0 0.0
        %2150 = vmatpush1.xpose.msra.mxu0 0.0
        %2151 = vmatprep.subr.mxu0 0.0
        %2152 = vmatpush1.xpose.msra.mxu0 0.0
        %2153 = vmatprep.subr.mxu0 0.0
        %2154 = vmatpush1.xpose.msra.mxu0 0.0
        %2155 = vmatprep.subr.mxu0 0.0
        %2156 = vmatpush1.xpose.msra.mxu0 0.0
        %2157 = vmatprep.subr.mxu0 0.0
        %2158 = vmatpush1.xpose.msra.mxu0 0.0
        %2159 = vmatprep.subr.mxu0 0.0
        %2160 = vmatpush1.xpose.msra.mxu0 0.0
        %2161 = vmatprep.subr.mxu0 0.0
        %2162 = vmatpush1.xpose.msra.mxu0 0.0
        %2163 = vmatprep.subr.mxu0 0.0
        %2164 = vmatpush1.xpose.msra.mxu0 0.0
        %2165 = vmatprep.subr.mxu0 0.0
        %2166 = vmatpush1.xpose.msra.mxu0 0.0
        %2167 = vmatprep.subr.mxu0 0.0
        %2168 = vmatpush1.xpose.msra.mxu0 0.0
        %2169 = vmatprep.subr.mxu0 0.0
        %2170 = vmatpush1.xpose.msra.mxu0 0.0
        %2171 = vmatprep.subr.mxu0 0.0
        %2172 = vmatpush1.xpose.msra.mxu0 0.0
        %2173 = vmatprep.subr.mxu0 0.0
        %2174 = vmatpush1.xpose.msra.mxu0 0.0
        %2175 = vmatprep.subr.mxu0 0.0
        %2176 = vmatpush1.xpose.msra.mxu0 0.0
        %2177 = vmatprep.subr.mxu0 0.0
        %2178 = vmatpush1.xpose.msra.mxu0 0.0
        %2179 = vmatprep.subr.mxu0 0.0
        %2180 = vmatpush1.xpose.msra.mxu0 0.0
        %2181 = vmatprep.subr.mxu0 0.0
        %2182 = vmatpush1.xpose.msra.mxu0 0.0
        %2183 = vmatprep.subr.mxu0 0.0
        %2184 = vmatpush1.xpose.msra.mxu0 0.0
        %2185 = vmatprep.subr.mxu0 0.0
        %2186 = vmatpush1.xpose.msra.mxu0 0.0
        %2187 = vmatprep.subr.mxu0 0.0
        %2188 = vmatpush1.xpose.msra.mxu0 0.0
        %2189 = vmatprep.subr.mxu0 0.0
        %2190 = vmatpush1.xpose.msra.mxu0 0.0
        %2191 = vmatprep.subr.mxu0 0.0
        %2192 = vmatpush1.xpose.msra.mxu0 0.0
        %2193 = vmatprep.subr.mxu0 0.0
        %2194 = vmatpush1.xpose.msra.mxu0 0.0
        %2195 = vmatprep.subr.mxu0 0.0
        %2196 = vmatpush1.xpose.msra.mxu0 0.0
        %2197 = vmatprep.subr.mxu0 0.0
        %2198 = vmatpush1.xpose.msra.mxu0 0.0
        %2199 = vmatprep.subr.mxu0 0.0
        %2200 = vmatpush1.xpose.msra.mxu0 0.0
        %2201 = vmatprep.mubr.f32.mxu0 0.0
        %2202 = vmatmul.mubr.f32.gmra.mrb[0].mxu0 %v2133
        %v2203 = vpop.f32.mrb[0].mxu0
        %v2204 = vadd.f32 %v344, %v2203
        %v2205 = vpop.f32.mrb[0].mxu0
        %2206 = vdwg.mxu0
        %v2207 = vsel %vm439, %v2204, -inf
        %2208 = vmax.xlane.f32.xlu0 %v2207
        %v2209 = vpop.xlane.xlu0 %2208
        %v2210 = vsub.f32 %v2204, %v2209
        %v2211 = vmul.f32 %v2210, 1.442695
        %v2212 = vpow.pop %v2211
        %v2213 = vsel %vm439, %v2212, 0.0
        %2214 = vadd.xlane.f32.xlu0 %v2213
        %v2215 = vpop.xlane.xlu0 %2214
        %v2216 = vrcp.pop %v2215
        %v2217 = vmul.f32 %v2212, %v2216
        %2218 = vrot.lane.b32.xlu0 %v1642, 48
        %v2219 = vpop.permute.xlu0 %2218
        %v2222 = vsel %vm439, %v2217, 0
        %2224 = vmatprep.subr.mxu0 0.0
        %2225 = vmatpush1.msra.mxu0 %v2219
        %2226 = vmatprep.subr.mxu0 0.0
        %2227 = vmatpush1.msra.mxu0 0.0
        %2228 = vmatprep.subr.mxu0 0.0
        %2229 = vmatpush1.msra.mxu0 0.0
        %2230 = vmatprep.subr.mxu0 0.0
        %2231 = vmatpush1.msra.mxu0 0.0
        %2232 = vmatprep.subr.mxu0 0.0
        %2233 = vmatpush1.msra.mxu0 0.0
        %2234 = vmatprep.subr.mxu0 0.0
        %2235 = vmatpush1.msra.mxu0 0.0
        %2236 = vmatprep.subr.mxu0 0.0
        %2237 = vmatpush1.msra.mxu0 0.0
        %2238 = vmatprep.subr.mxu0 0.0
        %2239 = vmatpush1.msra.mxu0 0.0
        %2240 = vmatprep.subr.mxu0 0.0
        %2241 = vmatpush1.msra.mxu0 0.0
        %2242 = vmatprep.subr.mxu0 0.0
        %2243 = vmatpush1.msra.mxu0 0.0
        %2244 = vmatprep.subr.mxu0 0.0
        %2245 = vmatpush1.msra.mxu0 0.0
        %2246 = vmatprep.subr.mxu0 0.0
        %2247 = vmatpush1.msra.mxu0 0.0
        %2248 = vmatprep.subr.mxu0 0.0
        %2249 = vmatpush1.msra.mxu0 0.0
        %2250 = vmatprep.subr.mxu0 0.0
        %2251 = vmatpush1.msra.mxu0 0.0
        %2252 = vmatprep.subr.mxu0 0.0
        %2253 = vmatpush1.msra.mxu0 0.0
        %2254 = vmatprep.subr.mxu0 0.0
        %2255 = vmatpush1.msra.mxu0 0.0
        %2256 = vmatprep.subr.mxu0 0.0
        %2257 = vmatpush1.msra.mxu0 0.0
        %2258 = vmatprep.subr.mxu0 0.0
        %2259 = vmatpush1.msra.mxu0 0.0
        %2260 = vmatprep.subr.mxu0 0.0
        %2261 = vmatpush1.msra.mxu0 0.0
        %2262 = vmatprep.subr.mxu0 0.0
        %2263 = vmatpush1.msra.mxu0 0.0
        %2264 = vmatprep.subr.mxu0 0.0
        %2265 = vmatpush1.msra.mxu0 0.0
        %2266 = vmatprep.subr.mxu0 0.0
        %2267 = vmatpush1.msra.mxu0 0.0
        %2268 = vmatprep.subr.mxu0 0.0
        %2269 = vmatpush1.msra.mxu0 0.0
        %2270 = vmatprep.subr.mxu0 0.0
        %2271 = vmatpush1.msra.mxu0 0.0
        %2272 = vmatprep.subr.mxu0 0.0
        %2273 = vmatpush1.msra.mxu0 0.0
        %2274 = vmatprep.subr.mxu0 0.0
        %2275 = vmatpush1.msra.mxu0 0.0
        %2276 = vmatprep.subr.mxu0 0.0
        %2277 = vmatpush1.msra.mxu0 0.0
        %2278 = vmatprep.subr.mxu0 0.0
        %2279 = vmatpush1.msra.mxu0 0.0
        %2280 = vmatprep.subr.mxu0 0.0
        %2281 = vmatpush1.msra.mxu0 0.0
        %2282 = vmatprep.subr.mxu0 0.0
        %2283 = vmatpush1.msra.mxu0 0.0
        %2284 = vmatprep.subr.mxu0 0.0
        %2285 = vmatpush1.msra.mxu0 0.0
        %2286 = vmatprep.subr.mxu0 0.0
        %2287 = vmatpush1.msra.mxu0 0.0
        %2288 = vmatprep.mubr.f32.mxu0 0.0
        %2289 = vmatmul.mubr.f32.gmra.mrb[0].mxu0 %v2222
        %v2290 = vpop.f32.mrb[0].mxu0
        %v2291 = vadd.f32 0.0, %v2290
        %v2292 = vpop.f32.mrb[0].mxu0
        %2293 = vdwg.mxu0
        %v2295 = vsel %vm439, %v2291, 0
        %2297 = vmatprep.subr.mxu0 0.0
        %2298 = vmatpush1.msra.mxu0 %v1649
        %2299 = vmatprep.subr.mxu0 0.0
        %2300 = vmatpush1.msra.mxu0 0.0
        %2301 = vmatprep.subr.mxu0 0.0
        %2302 = vmatpush1.msra.mxu0 0.0
        %2303 = vmatprep.subr.mxu0 0.0
        %2304 = vmatpush1.msra.mxu0 0.0
        %2305 = vmatprep.subr.mxu0 0.0
        %2306 = vmatpush1.msra.mxu0 0.0
        %2307 = vmatprep.subr.mxu0 0.0
        %2308 = vmatpush1.msra.mxu0 0.0
        %2309 = vmatprep.subr.mxu0 0.0
        %2310 = vmatpush1.msra.mxu0 0.0
        %2311 = vmatprep.subr.mxu0 0.0
        %2312 = vmatpush1.msra.mxu0 0.0
        %2313 = vmatprep.subr.mxu0 0.0
        %2314 = vmatpush1.msra.mxu0 0.0
        %2315 = vmatprep.subr.mxu0 0.0
        %2316 = vmatpush1.msra.mxu0 0.0
        %2317 = vmatprep.subr.mxu0 0.0
        %2318 = vmatpush1.msra.mxu0 0.0
        %2319 = vmatprep.subr.mxu0 0.0
        %2320 = vmatpush1.msra.mxu0 0.0
        %2321 = vmatprep.subr.mxu0 0.0
        %2322 = vmatpush1.msra.mxu0 0.0
        %2323 = vmatprep.subr.mxu0 0.0
        %2324 = vmatpush1.msra.mxu0 0.0
        %2325 = vmatprep.subr.mxu0 0.0
        %2326 = vmatpush1.msra.mxu0 0.0
        %2327 = vmatprep.subr.mxu0 0.0
        %2328 = vmatpush1.msra.mxu0 0.0
        %2329 = vmatprep.subr.mxu0 0.0
        %2330 = vmatpush1.msra.mxu0 0.0
        %2331 = vmatprep.subr.mxu0 0.0
        %2332 = vmatpush1.msra.mxu0 0.0
        %2333 = vmatprep.subr.mxu0 0.0
        %2334 = vmatpush1.msra.mxu0 0.0
        %2335 = vmatprep.subr.mxu0 0.0
        %2336 = vmatpush1.msra.mxu0 0.0
        %2337 = vmatprep.subr.mxu0 0.0
        %2338 = vmatpush1.msra.mxu0 0.0
        %2339 = vmatprep.subr.mxu0 0.0
        %2340 = vmatpush1.msra.mxu0 0.0
        %2341 = vmatprep.subr.mxu0 0.0
        %2342 = vmatpush1.msra.mxu0 0.0
        %2343 = vmatprep.subr.mxu0 0.0
        %2344 = vmatpush1.msra.mxu0 0.0
        %2345 = vmatprep.subr.mxu0 0.0
        %2346 = vmatpush1.msra.mxu0 0.0
        %2347 = vmatprep.subr.mxu0 0.0
        %2348 = vmatpush1.msra.mxu0 0.0
        %2349 = vmatprep.subr.mxu0 0.0
        %2350 = vmatpush1.msra.mxu0 0.0
        %2351 = vmatprep.subr.mxu0 0.0
        %2352 = vmatpush1.msra.mxu0 0.0
        %2353 = vmatprep.subr.mxu0 0.0
        %2354 = vmatpush1.msra.mxu0 0.0
        %2355 = vmatprep.subr.mxu0 0.0
        %2356 = vmatpush1.msra.mxu0 0.0
        %2357 = vmatprep.subr.mxu0 0.0
        %2358 = vmatpush1.msra.mxu0 0.0
        %2359 = vmatprep.subr.mxu0 0.0
        %2360 = vmatpush1.msra.mxu0 0.0
        %2361 = vmatprep.mubr.f32.mxu0 0.0
        %2362 = vmatmul.mubr.f32.gmra.mrb[0].mxu0 %v2295
        %v2363 = vpop.f32.mrb[0].mxu0
        %v2364 = vadd.f32 0.0, %v2363
        %v2365 = vpop.f32.mrb[0].mxu0
        %2366 = vdwg.mxu0
        %v2367 = vadd.f32 %v2126, %v2364
        %2368 = vrot.lane.b32.xlu0 %v1645, 104
        %v2369 = vpop.permute.xlu0 %2368
        %2370 = vrot.lane.b32.xlu0 %v1642, 72
        %v2371 = vpop.permute.xlu0 %2370
        %v2372 = vsel %vm439, %v2369, 0
        %v2374 = vsel %vm439, %v2371, 0
        %2376 = vmatprep.subr.mxu0 0.0
        %2377 = vmatpush1.xpose.msra.mxu0 %v2374
        %2378 = vmatprep.subr.mxu0 0.0
        %2379 = vmatpush1.xpose.msra.mxu0 0.0
        %2380 = vmatprep.subr.mxu0 0.0
        %2381 = vmatpush1.xpose.msra.mxu0 0.0
        %2382 = vmatprep.subr.mxu0 0.0
        %2383 = vmatpush1.xpose.msra.mxu0 0.0
        %2384 = vmatprep.subr.mxu0 0.0
        %2385 = vmatpush1.xpose.msra.mxu0 0.0
        %2386 = vmatprep.subr.mxu0 0.0
        %2387 = vmatpush1.xpose.msra.mxu0 0.0
        %2388 = vmatprep.subr.mxu0 0.0
        %2389 = vmatpush1.xpose.msra.mxu0 0.0
        %2390 = vmatprep.subr.mxu0 0.0
        %2391 = vmatpush1.xpose.msra.mxu0 0.0
        %2392 = vmatprep.subr.mxu0 0.0
        %2393 = vmatpush1.xpose.msra.mxu0 0.0
        %2394 = vmatprep.subr.mxu0 0.0
        %2395 = vmatpush1.xpose.msra.mxu0 0.0
        %2396 = vmatprep.subr.mxu0 0.0
        %2397 = vmatpush1.xpose.msra.mxu0 0.0
        %2398 = vmatprep.subr.mxu0 0.0
        %2399 = vmatpush1.xpose.msra.mxu0 0.0
        %2400 = vmatprep.subr.mxu0 0.0
        %2401 = vmatpush1.xpose.msra.mxu0 0.0
        %2402 = vmatprep.subr.mxu0 0.0
        %2403 = vmatpush1.xpose.msra.mxu0 0.0
        %2404 = vmatprep.subr.mxu0 0.0
        %2405 = vmatpush1.xpose.msra.mxu0 0.0
        %2406 = vmatprep.subr.mxu0 0.0
        %2407 = vmatpush1.xpose.msra.mxu0 0.0
        %2408 = vmatprep.subr.mxu0 0.0
        %2409 = vmatpush1.xpose.msra.mxu0 0.0
        %2410 = vmatprep.subr.mxu0 0.0
        %2411 = vmatpush1.xpose.msra.mxu0 0.0
        %2412 = vmatprep.subr.mxu0 0.0
        %2413 = vmatpush1.xpose.msra.mxu0 0.0
        %2414 = vmatprep.subr.mxu0 0.0
        %2415 = vmatpush1.xpose.msra.mxu0 0.0
        %2416 = vmatprep.subr.mxu0 0.0
        %2417 = vmatpush1.xpose.msra.mxu0 0.0
        %2418 = vmatprep.subr.mxu0 0.0
        %2419 = vmatpush1.xpose.msra.mxu0 0.0
        %2420 = vmatprep.subr.mxu0 0.0
        %2421 = vmatpush1.xpose.msra.mxu0 0.0
        %2422 = vmatprep.subr.mxu0 0.0
        %2423 = vmatpush1.xpose.msra.mxu0 0.0
        %2424 = vmatprep.subr.mxu0 0.0
        %2425 = vmatpush1.xpose.msra.mxu0 0.0
        %2426 = vmatprep.subr.mxu0 0.0
        %2427 = vmatpush1.xpose.msra.mxu0 0.0
        %2428 = vmatprep.subr.mxu0 0.0
        %2429 = vmatpush1.xpose.msra.mxu0 0.0
        %2430 = vmatprep.subr.mxu0 0.0
        %2431 = vmatpush1.xpose.msra.mxu0 0.0
        %2432 = vmatprep.subr.mxu0 0.0
        %2433 = vmatpush1.xpose.msra.mxu0 0.0
        %2434 = vmatprep.subr.mxu0 0.0
        %2435 = vmatpush1.xpose.msra.mxu0 0.0
        %2436 = vmatprep.subr.mxu0 0.0
        %2437 = vmatpush1.xpose.msra.mxu0 0.0
        %2438 = vmatprep.subr.mxu0 0.0
        %2439 = vmatpush1.xpose.msra.mxu0 0.0
        %2440 = vmatprep.mubr.f32.mxu0 0.0
        %2441 = vmatmul.mubr.f32.gmra.mrb[0].mxu0 %v2372
        %v2442 = vpop.f32.mrb[0].mxu0
        %v2443 = vadd.f32 %v344, %v2442
        %v2444 = vpop.f32.mrb[0].mxu0
        %2445 = vdwg.mxu0
        %v2446 = vsel %vm439, %v2443, -inf
        %2447 = vmax.xlane.f32.xlu0 %v2446
        %v2448 = vpop.xlane.xlu0 %2447
        %v2449 = vsub.f32 %v2443, %v2448
        %v2450 = vmul.f32 %v2449, 1.442695
        %v2451 = vpow.pop %v2450
        %v2452 = vsel %vm439, %v2451, 0.0
        %2453 = vadd.xlane.f32.xlu0 %v2452
        %v2454 = vpop.xlane.xlu0 %2453
        %v2455 = vrcp.pop %v2454
        %v2456 = vmul.f32 %v2451, %v2455
        %2457 = vrot.lane.b32.xlu0 %v1642, 40
        %v2458 = vpop.permute.xlu0 %2457
        %v2461 = vsel %vm439, %v2456, 0
        %2463 = vmatprep.subr.mxu0 0.0
        %2464 = vmatpush1.msra.mxu0 %v2458
        %2465 = vmatprep.subr.mxu0 0.0
        %2466 = vmatpush1.msra.mxu0 0.0
        %2467 = vmatprep.subr.mxu0 0.0
        %2468 = vmatpush1.msra.mxu0 0.0
        %2469 = vmatprep.subr.mxu0 0.0
        %2470 = vmatpush1.msra.mxu0 0.0
        %2471 = vmatprep.subr.mxu0 0.0
        %2472 = vmatpush1.msra.mxu0 0.0
        %2473 = vmatprep.subr.mxu0 0.0
        %2474 = vmatpush1.msra.mxu0 0.0
        %2475 = vmatprep.subr.mxu0 0.0
        %2476 = vmatpush1.msra.mxu0 0.0
        %2477 = vmatprep.subr.mxu0 0.0
        %2478 = vmatpush1.msra.mxu0 0.0
        %2479 = vmatprep.subr.mxu0 0.0
        %2480 = vmatpush1.msra.mxu0 0.0
        %2481 = vmatprep.subr.mxu0 0.0
        %2482 = vmatpush1.msra.mxu0 0.0
        %2483 = vmatprep.subr.mxu0 0.0
        %2484 = vmatpush1.msra.mxu0 0.0
        %2485 = vmatprep.subr.mxu0 0.0
        %2486 = vmatpush1.msra.mxu0 0.0
        %2487 = vmatprep.subr.mxu0 0.0
        %2488 = vmatpush1.msra.mxu0 0.0
        %2489 = vmatprep.subr.mxu0 0.0
        %2490 = vmatpush1.msra.mxu0 0.0
        %2491 = vmatprep.subr.mxu0 0.0
        %2492 = vmatpush1.msra.mxu0 0.0
        %2493 = vmatprep.subr.mxu0 0.0
        %2494 = vmatpush1.msra.mxu0 0.0
        %2495 = vmatprep.subr.mxu0 0.0
        %2496 = vmatpush1.msra.mxu0 0.0
        %2497 = vmatprep.subr.mxu0 0.0
        %2498 = vmatpush1.msra.mxu0 0.0
        %2499 = vmatprep.subr.mxu0 0.0
        %2500 = vmatpush1.msra.mxu0 0.0
        %2501 = vmatprep.subr.mxu0 0.0
        %2502 = vmatpush1.msra.mxu0 0.0
        %2503 = vmatprep.subr.mxu0 0.0
        %2504 = vmatpush1.msra.mxu0 0.0
        %2505 = vmatprep.subr.mxu0 0.0
        %2506 = vmatpush1.msra.mxu0 0.0
        %2507 = vmatprep.subr.mxu0 0.0
        %2508 = vmatpush1.msra.mxu0 0.0
        %2509 = vmatprep.subr.mxu0 0.0
        %2510 = vmatpush1.msra.mxu0 0.0
        %2511 = vmatprep.subr.mxu0 0.0
        %2512 = vmatpush1.msra.mxu0 0.0
        %2513 = vmatprep.subr.mxu0 0.0
        %2514 = vmatpush1.msra.mxu0 0.0
        %2515 = vmatprep.subr.mxu0 0.0
        %2516 = vmatpush1.msra.mxu0 0.0
        %2517 = vmatprep.subr.mxu0 0.0
        %2518 = vmatpush1.msra.mxu0 0.0
        %2519 = vmatprep.subr.mxu0 0.0
        %2520 = vmatpush1.msra.mxu0 0.0
        %2521 = vmatprep.subr.mxu0 0.0
        %2522 = vmatpush1.msra.mxu0 0.0
        %2523 = vmatprep.subr.mxu0 0.0
        %2524 = vmatpush1.msra.mxu0 0.0
        %2525 = vmatprep.subr.mxu0 0.0
        %2526 = vmatpush1.msra.mxu0 0.0
        %2527 = vmatprep.mubr.f32.mxu0 0.0
        %2528 = vmatmul.mubr.f32.gmra.mrb[0].mxu0 %v2461
        %v2529 = vpop.f32.mrb[0].mxu0
        %v2530 = vadd.f32 0.0, %v2529
        %v2531 = vpop.f32.mrb[0].mxu0
        %2532 = vdwg.mxu0
        %v2534 = vsel %vm439, %v2530, 0
        %2536 = vmatprep.subr.mxu0 0.0
        %2537 = vmatpush1.msra.mxu0 %v1650
        %2538 = vmatprep.subr.mxu0 0.0
        %2539 = vmatpush1.msra.mxu0 0.0
        %2540 = vmatprep.subr.mxu0 0.0
        %2541 = vmatpush1.msra.mxu0 0.0
        %2542 = vmatprep.subr.mxu0 0.0
        %2543 = vmatpush1.msra.mxu0 0.0
        %2544 = vmatprep.subr.mxu0 0.0
        %2545 = vmatpush1.msra.mxu0 0.0
        %2546 = vmatprep.subr.mxu0 0.0
        %2547 = vmatpush1.msra.mxu0 0.0
        %2548 = vmatprep.subr.mxu0 0.0
        %2549 = vmatpush1.msra.mxu0 0.0
        %2550 = vmatprep.subr.mxu0 0.0
        %2551 = vmatpush1.msra.mxu0 0.0
        %2552 = vmatprep.subr.mxu0 0.0
        %2553 = vmatpush1.msra.mxu0 0.0
        %2554 = vmatprep.subr.mxu0 0.0
        %2555 = vmatpush1.msra.mxu0 0.0
        %2556 = vmatprep.subr.mxu0 0.0
        %2557 = vmatpush1.msra.mxu0 0.0
        %2558 = vmatprep.subr.mxu0 0.0
        %2559 = vmatpush1.msra.mxu0 0.0
        %2560 = vmatprep.subr.mxu0 0.0
        %2561 = vmatpush1.msra.mxu0 0.0
        %2562 = vmatprep.subr.mxu0 0.0
        %2563 = vmatpush1.msra.mxu0 0.0
        %2564 = vmatprep.subr.mxu0 0.0
        %2565 = vmatpush1.msra.mxu0 0.0
        %2566 = vmatprep.subr.mxu0 0.0
        %2567 = vmatpush1.msra.mxu0 0.0
        %2568 = vmatprep.subr.mxu0 0.0
        %2569 = vmatpush1.msra.mxu0 0.0
        %2570 = vmatprep.subr.mxu0 0.0
        %2571 = vmatpush1.msra.mxu0 0.0
        %2572 = vmatprep.subr.mxu0 0.0
        %2573 = vmatpush1.msra.mxu0 0.0
        %2574 = vmatprep.subr.mxu0 0.0
        %2575 = vmatpush1.msra.mxu0 0.0
        %2576 = vmatprep.subr.mxu0 0.0
        %2577 = vmatpush1.msra.mxu0 0.0
        %2578 = vmatprep.subr.mxu0 0.0
        %2579 = vmatpush1.msra.mxu0 0.0
        %2580 = vmatprep.subr.mxu0 0.0
        %2581 = vmatpush1.msra.mxu0 0.0
        %2582 = vmatprep.subr.mxu0 0.0
        %2583 = vmatpush1.msra.mxu0 0.0
        %2584 = vmatprep.subr.mxu0 0.0
        %2585 = vmatpush1.msra.mxu0 0.0
        %2586 = vmatprep.subr.mxu0 0.0
        %2587 = vmatpush1.msra.mxu0 0.0
        %2588 = vmatprep.subr.mxu0 0.0
        %2589 = vmatpush1.msra.mxu0 0.0
        %2590 = vmatprep.subr.mxu0 0.0
        %2591 = vmatpush1.msra.mxu0 0.0
        %2592 = vmatprep.subr.mxu0 0.0
        %2593 = vmatpush1.msra.mxu0 0.0
        %2594 = vmatprep.subr.mxu0 0.0
        %2595 = vmatpush1.msra.mxu0 0.0
        %2596 = vmatprep.subr.mxu0 0.0
        %2597 = vmatpush1.msra.mxu0 0.0
        %2598 = vmatprep.subr.mxu0 0.0
        %2599 = vmatpush1.msra.mxu0 0.0
        %2600 = vmatprep.mubr.f32.mxu0 0.0
        %2601 = vmatmul.mubr.f32.gmra.mrb[0].mxu0 %v2534
        %v2602 = vpop.f32.mrb[0].mxu0
        %v2603 = vadd.f32 0.0, %v2602
        %v2604 = vpop.f32.mrb[0].mxu0
        %2605 = vdwg.mxu0
        %v2606 = vadd.f32 %v2367, %v2603
        %v2608 = vlaneseq
        %v2609 = vshrl.u32 %v2608, 7
        %v2610 = vsub.s32 0, %v2609
        %v2611 = vrot.slane %v1652, %v2610
        %v2613 = vadd.f32 %v2606, %v2611
        %s2614 = scalar_lea.vmem %s5, 32
        %v2615 = vld [vmem:[%s2614] sm:$0xff]
        %v2616 = vld [vmem:[%s2614 + $0x8] sm:$0xff]
        %v2617 = vld [vmem:[%s2614 + $0x10] sm:$0xff]
        %v2618 = vld [vmem:[%s2614 + $0x18] sm:$0xff]
        %2619 = vrot.lane.b32.xlu0 %v2611, 96
        %v2620 = vpop.permute.xlu0 %2619
        %v2623 = vsel %vm356, %v2613, 0
        %2625 = vmatprep.subr.mxu0 0.0
        %2626 = vmatpush1.msra.mxu0 %v2615
        %2627 = vmatprep.subr.mxu0 0.0
        %2628 = vmatpush1.msra.mxu0 %v2616
        %2629 = vmatprep.subr.mxu0 0.0
        %2630 = vmatpush1.msra.mxu0 %v2617
        %2631 = vmatprep.subr.mxu0 0.0
        %2632 = vmatpush1.msra.mxu0 %v2618
        %2633 = vmatprep.subr.mxu0 0.0
        %2634 = vmatpush1.msra.mxu0 0.0
        %2635 = vmatprep.subr.mxu0 0.0
        %2636 = vmatpush1.msra.mxu0 0.0
        %2637 = vmatprep.subr.mxu0 0.0
        %2638 = vmatpush1.msra.mxu0 0.0
        %2639 = vmatprep.subr.mxu0 0.0
        %2640 = vmatpush1.msra.mxu0 0.0
        %2641 = vmatprep.subr.mxu0 0.0
        %2642 = vmatpush1.msra.mxu0 0.0
        %2643 = vmatprep.subr.mxu0 0.0
        %2644 = vmatpush1.msra.mxu0 0.0
        %2645 = vmatprep.subr.mxu0 0.0
        %2646 = vmatpush1.msra.mxu0 0.0
        %2647 = vmatprep.subr.mxu0 0.0
        %2648 = vmatpush1.msra.mxu0 0.0
        %2649 = vmatprep.subr.mxu0 0.0
        %2650 = vmatpush1.msra.mxu0 0.0
        %2651 = vmatprep.subr.mxu0 0.0
        %2652 = vmatpush1.msra.mxu0 0.0
        %2653 = vmatprep.subr.mxu0 0.0
        %2654 = vmatpush1.msra.mxu0 0.0
        %2655 = vmatprep.subr.mxu0 0.0
        %2656 = vmatpush1.msra.mxu0 0.0
        %2657 = vmatprep.subr.mxu0 0.0
        %2658 = vmatpush1.msra.mxu0 0.0
        %2659 = vmatprep.subr.mxu0 0.0
        %2660 = vmatpush1.msra.mxu0 0.0
        %2661 = vmatprep.subr.mxu0 0.0
        %2662 = vmatpush1.msra.mxu0 0.0
        %2663 = vmatprep.subr.mxu0 0.0
        %2664 = vmatpush1.msra.mxu0 0.0
        %2665 = vmatprep.subr.mxu0 0.0
        %2666 = vmatpush1.msra.mxu0 0.0
        %2667 = vmatprep.subr.mxu0 0.0
        %2668 = vmatpush1.msra.mxu0 0.0
        %2669 = vmatprep.subr.mxu0 0.0
        %2670 = vmatpush1.msra.mxu0 0.0
        %2671 = vmatprep.subr.mxu0 0.0
        %2672 = vmatpush1.msra.mxu0 0.0
        %2673 = vmatprep.subr.mxu0 0.0
        %2674 = vmatpush1.msra.mxu0 0.0
        %2675 = vmatprep.subr.mxu0 0.0
        %2676 = vmatpush1.msra.mxu0 0.0
        %2677 = vmatprep.subr.mxu0 0.0
        %2678 = vmatpush1.msra.mxu0 0.0
        %2679 = vmatprep.subr.mxu0 0.0
        %2680 = vmatpush1.msra.mxu0 0.0
        %2681 = vmatprep.subr.mxu0 0.0
        %2682 = vmatpush1.msra.mxu0 0.0
        %2683 = vmatprep.subr.mxu0 0.0
        %2684 = vmatpush1.msra.mxu0 0.0
        %2685 = vmatprep.subr.mxu0 0.0
        %2686 = vmatpush1.msra.mxu0 0.0
        %2687 = vmatprep.subr.mxu0 0.0
        %2688 = vmatpush1.msra.mxu0 0.0
        %2689 = vmatprep.mubr.f32.mxu0 0.0
        %2690 = vmatmul.mubr.f32.gmra.mrb[0].mxu0 %v2623
        %v2691 = vpop.f32.mrb[0].mxu0
        %v2692 = vadd.f32 %v2620, %v2691
        %v2693 = vpop.f32.mrb[0].mxu0
        %2694 = vdwg.mxu0
        %v2695 = vmax.f32 %v2692, 0.0
        %s2696 = scalar_lea.vmem %s6, 4
        %v2697 = vld [vmem:[%s2696] sm:$0xf]
        %2698 = vrot.lane.b32.xlu0 %v2611, 92
        %v2699 = vpop.permute.xlu0 %2698
        %v2702 = vsel %vm1483, %v2695, 0
        %v2705 = vsel %vm1487, %v2697, 0
        %2707 = vmatprep.subr.mxu0 0.0
        %2708 = vmatpush1.msra.mxu0 %v2705
        %2709 = vmatprep.subr.mxu0 0.0
        %2710 = vmatpush1.msra.mxu0 0.0
        %2711 = vmatprep.subr.mxu0 0.0
        %2712 = vmatpush1.msra.mxu0 0.0
        %2713 = vmatprep.subr.mxu0 0.0
        %2714 = vmatpush1.msra.mxu0 0.0
        %2715 = vmatprep.subr.mxu0 0.0
        %2716 = vmatpush1.msra.mxu0 0.0
        %2717 = vmatprep.subr.mxu0 0.0
        %2718 = vmatpush1.msra.mxu0 0.0
        %2719 = vmatprep.subr.mxu0 0.0
        %2720 = vmatpush1.msra.mxu0 0.0
        %2721 = vmatprep.subr.mxu0 0.0
        %2722 = vmatpush1.msra.mxu0 0.0
        %2723 = vmatprep.subr.mxu0 0.0
        %2724 = vmatpush1.msra.mxu0 0.0
        %2725 = vmatprep.subr.mxu0 0.0
        %2726 = vmatpush1.msra.mxu0 0.0
        %2727 = vmatprep.subr.mxu0 0.0
        %2728 = vmatpush1.msra.mxu0 0.0
        %2729 = vmatprep.subr.mxu0 0.0
        %2730 = vmatpush1.msra.mxu0 0.0
        %2731 = vmatprep.subr.mxu0 0.0
        %2732 = vmatpush1.msra.mxu0 0.0
        %2733 = vmatprep.subr.mxu0 0.0
        %2734 = vmatpush1.msra.mxu0 0.0
        %2735 = vmatprep.subr.mxu0 0.0
        %2736 = vmatpush1.msra.mxu0 0.0
        %2737 = vmatprep.subr.mxu0 0.0
        %2738 = vmatpush1.msra.mxu0 0.0
        %2739 = vmatprep.subr.mxu0 0.0
        %2740 = vmatpush1.msra.mxu0 0.0
        %2741 = vmatprep.subr.mxu0 0.0
        %2742 = vmatpush1.msra.mxu0 0.0
        %2743 = vmatprep.subr.mxu0 0.0
        %2744 = vmatpush1.msra.mxu0 0.0
        %2745 = vmatprep.subr.mxu0 0.0
        %2746 = vmatpush1.msra.mxu0 0.0
        %2747 = vmatprep.subr.mxu0 0.0
        %2748 = vmatpush1.msra.mxu0 0.0
        %2749 = vmatprep.subr.mxu0 0.0
        %2750 = vmatpush1.msra.mxu0 0.0
        %2751 = vmatprep.subr.mxu0 0.0
        %2752 = vmatpush1.msra.mxu0 0.0
        %2753 = vmatprep.subr.mxu0 0.0
        %2754 = vmatpush1.msra.mxu0 0.0
        %2755 = vmatprep.subr.mxu0 0.0
        %2756 = vmatpush1.msra.mxu0 0.0
        %2757 = vmatprep.subr.mxu0 0.0
        %2758 = vmatpush1.msra.mxu0 0.0
        %2759 = vmatprep.subr.mxu0 0.0
        %2760 = vmatpush1.msra.mxu0 0.0
        %2761 = vmatprep.subr.mxu0 0.0
        %2762 = vmatpush1.msra.mxu0 0.0
        %2763 = vmatprep.subr.mxu0 0.0
        %2764 = vmatpush1.msra.mxu0 0.0
        %2765 = vmatprep.subr.mxu0 0.0
        %2766 = vmatpush1.msra.mxu0 0.0
        %2767 = vmatprep.subr.mxu0 0.0
        %2768 = vmatpush1.msra.mxu0 0.0
        %2769 = vmatprep.subr.mxu0 0.0
        %2770 = vmatpush1.msra.mxu0 0.0
        %2771 = vmatprep.mubr.f32.mxu0 0.0
        %2772 = vmatmul.mubr.f32.gmra.mrb[0].mxu0 %v2702
        %v2773 = vpop.f32.mrb[0].mxu0
        %v2774 = vadd.f32 %v2699, %v2773
        %v2775 = vpop.f32.mrb[0].mxu0
        %2776 = vdwg.mxu0
        %v2777 = vmul.f32 %v2774, 1.442695
        %v2778 = vpow.pop %v2777
        %v2779 = vmax.f32 %v2778, 1e-05
        %v2780 = vmin.f32 %v2779, 100.0
        %2782 = vrot.lane.b32.xlu0 %v2780, 4
        %v2783 = vpop.permute.xlu0 %2782
        %vm2785 = vcmask 64544
        %2786 = vst.msk [vmem:[%s335] sm:$0xff] %vm2785, %v2783
        %s2787 = sand.u32 %s207, 1
        %s2788 = scalar_lea.sflag [#allocation4], %s2787
        %s2789 = sand.u32 %s207, 1
        %s2790 = smul.addr %s2789, 8
        %s2791 = scalar_lea.vmem [#allocation7], %s2790
        // Predicated region
        $region61: #{tpu_custom_call.1} parent=51 // pred_check
          %p2792 = pneg %p217
        $region62: #{tpu_custom_call.1} parent=51 // pred_check_branch
          %2794 = sbr.rel (%p2792) target = $region64
        $region63: #{tpu_custom_call.1} parent=51 // pred_region
          %s2796 = ssub.s32 128, 128
          %2797 = vsyncadd %s2788, %s2796
          %s2798 = smul.addr %s26, 128
          %s2799 = scalar_lea.hbm %s8, %s2798
          %s2801 = sshll.u32 %s2791, 4
          %s2802 = int_to_ptr.vmem [resolvable:$true] %s2801
          %2804 = dma.vmem_to_hbm [thread:$0]  %s2802, 128, %s2799, %s2788
        $region64: #{tpu_custom_call.1} parent=51 // pred_fallthru
          _
      $region52: #{tpu_custom_call.1} parent=5 // pred_fallthru
        _
      %p2805 = scmp.le.s32.totalorder 2, %s21
      // Predicated region
      $region65: #{tpu_custom_call.1} parent=5 // pred_check
        %p2806 = pneg %p2805
      $region66: #{tpu_custom_call.1} parent=5 // pred_check_branch
        %2808 = sbr.rel (%p2806) target = $region68
      $region67: #{tpu_custom_call.1} parent=5 // pred_region
        %s2809 = ssub.s32 %s21, 2
        // Predicated region
        $region69: #{tpu_custom_call.1} parent=67 // pred_check
          %p2810 = pneg %p223
        $region70: #{tpu_custom_call.1} parent=67 // pred_check_branch
          %2812 = sbr.rel (%p2810) target = $region72
        $region71: #{tpu_custom_call.1} parent=67 // pred_region
          %s2813 = sand.u32 %s208, 1
          %s2814 = scalar_lea.sflag [#allocation4], %s2813
          %s2815 = sand.u32 %s208, 1
          %s2816 = smul.addr %s2815, 8
          %s2817 = scalar_lea.vmem [#allocation7], %s2816
          %2818 = dma.done %s2814, 128
        $region72: #{tpu_custom_call.1} parent=67 // pred_fallthru
          _
      $region68: #{tpu_custom_call.1} parent=5 // pred_fallthru
        _
    $region6: #{tpu_custom_call.1} parent=1 // loop_footer
      %s25 = sadd.s32 1, %s21
    $region7: #{tpu_custom_call.1} parent=1 // loop_footer_branch
      %20 = sbr.rel target = $region3
    $region8: #{tpu_custom_call.1} parent=1 // loop_exit
      _
    %2819 = vsyncpa [#allocation3], 1
    %s2820 = scalar_lea.sflag [#allocation3], 1
    %2821 = vsyncpa %s2820, 1
    %2822 = vsyncpa [#allocation6], 1
    %2823 = vsyncpa [#allocation4], 1
    %s2824 = scalar_lea.sflag [#allocation4], 1
    %2825 = vsyncpa %s2824, 1

</llo_original>
